<compile_context>
chip_gen: v6e
topology: v6e:2x2x1
jax: 0.10.0
libtpu: 0.0.40
codegen_flags: <defaults>
</compile_context>

<pallas_src>
import numpy as np
import jax
import jax.numpy as jnp
from jax.experimental import pallas as pl
from jax.experimental.pallas import tpu as pltpu


def _make_s2b_kernel(bh, bw, oh, ow, c_tile, acc_dtype):
    """Kernel closure over the static block geometry."""

    def kernel(sht_ref, sw_ref, x_ref, o_ref):
        # sht_ref: (bh*oh, H)   exact 0/1 row selection (H zero-pad fused: all-zero rows)
        # sw_ref : (W, bw*ow)   exact 0/1 col selection (W zero-pad fused: all-zero cols)
        # x_ref  : (1, CT, H, W)          unpadded input tile for (batch n, chan tile ci)
        # o_ref  : (bh*bw, 1, CT, oh, ow) output tiles for every (bi, bj)
        sht = sht_ref[...]
        sw = sw_ref[...]
        for c in range(c_tile):
            xc = x_ref[0, c]                                    # (H, W)
            # W block permutation (+ W zero padding); exact: one nonzero per column.
            ac = jax.lax.dot_general(
                xc, sw, (((1,), (0,)), ((), ())),
                precision=jax.lax.Precision.HIGHEST,
                preferred_element_type=acc_dtype)               # (H, bw*ow)
            # H block permutation (+ H zero padding); exact: one nonzero per row.
            zc = jax.lax.dot_general(
                sht, ac, (((1,), (0,)), ((), ())),
                precision=jax.lax.Precision.HIGHEST,
                preferred_element_type=acc_dtype)               # (bh*oh, bw*ow)
            zc = zc.astype(o_ref.dtype)
            for bi in range(bh):
                for bj in range(bw):
                    o_ref[bi * bw + bj, 0, c] = (
                        zc[bi * oh:(bi + 1) * oh, bj * ow:(bj + 1) * ow])

    return kernel


def space_to_batch_nd(x, block_shape, pad, *, c_tile=None, max_c_unroll=32):
    """x: (N, C, H, W). Reproduces net_SpaceToBatchND.forward for 4-D NCHW inputs."""
    if not jnp.issubdtype(x.dtype, jnp.floating):
        raise NotImplementedError("only floating dtypes are supported")  # TODO(synk)
    N, C, H, W = map(int, x.shape)
    bh, bw = int(block_shape[0]), int(block_shape[1])

    # out_spatial_dim exactly as in the reference module
    oh = (H + pad[0] + pad[1]) // bh
    ow = (W + pad[2] + pad[3]) // bw
    # torch.nn.functional.pad semantics: pad[0:2] -> last dim (W), pad[2:4] -> H
    Hp = H + pad[2] + pad[3]
    Wp = W + pad[0] + pad[1]
    assert oh * bh == Hp and ow * bw == Wp, \
        "pad configuration inconsistent with block_shape"
    Hb, Wb = bh * oh, bw * ow          # padded spatial extents

    # bf16 accumulation is exact here (one nonzero per row/col); f32 otherwise.
    acc_dtype = jnp.bfloat16 if x.dtype == jnp.bfloat16 else jnp.float32

    # Exact 0/1 selection matrices with the zero padding fused in:
    #   zc[bi*oh + p, bj*ow + q] = x[p*bh + bi - pad[2], q*bw + bj - pad[0]]   (else 0)
    k = np.arange(Hb)
    src_h = (k % oh) * bh + (k // oh) - pad[2]
    sht = jnp.asarray((src_h[:, None] == np.arange(H)[None, :]).astype(np.float32),
                      dtype=x.dtype)                                   # (Hb, H)
    l = np.arange(Wb)
    src_w = (l % ow) * bw + (l // ow) - pad[0]
    sw = jnp.asarray((np.arange(W)[:, None] == src_w[None, :]).astype(np.float32),
                     dtype=x.dtype)                                    # (W, Wb)

    # VMEM budgeting: query per-core capacity (64 MiB on v7x, 128 MiB on v5e/v6e)
    # so the channel tile is as large as safely fits with double buffering.
    isz = np.dtype(x.dtype).itemsize
    accsz = np.dtype(acc_dtype).itemsize
    try:
        vmem_cap = int(pltpu.get_tpu_info().vmem_capacity_bytes)
    except Exception:
        vmem_cap = 64 * 1024 * 1024        # conservative: v7x per-TensorCore VMEM
    vmem_limit = min(vmem_cap * 3 // 4, 100 * 1024 * 1024)
    budget = vmem_cap * 2 // 5

    if c_tile is None:
        per_c = 2 * (H * W + bh * bw * oh * ow) * isz              # double-buffered I/O
        fixed = 2 * (Hb * H + W * Wb) * isz + (H * Wb + Hb * Wb) * accsz
        c_tile = max(1, min(C, max_c_unroll, (budget - fixed) // max(per_c, 1)))
    cn = int(pl.cdiv(C, int(c_tile)))
    # v7x has 2 TensorCores per chip: keep at least 2 parallel grid steps.
    if N * cn < 2 and C >= 2:
        c_tile = int(pl.cdiv(C, 2))
        cn = int(pl.cdiv(C, c_tile))
    c_tile = int(c_tile)

    kernel = _make_s2b_kernel(bh, bw, oh, ow, c_tile, acc_dtype)
    flops = 2 * N * C * Wb * (H * W + Hb * H)
    bytes_accessed = (N * C * (H * W + bh * bw * oh * ow) + Hb * H + W * Wb) * isz

    out5 = pl.pallas_call(
        kernel,
        out_shape=jax.ShapeDtypeStruct((bh * bw, N, C, oh, ow), x.dtype),
        grid_spec=pltpu.PrefetchScalarGridSpec(
            num_scalar_prefetch=0,
            grid=(N, cn),                    # batch / channel-tile, both independent
            in_specs=[
                pl.BlockSpec((Hb, H), lambda n, ci: (0, 0)),     # grid-invariant
                pl.BlockSpec((W, Wb), lambda n, ci: (0, 0)),     # grid-invariant
                pl.BlockSpec((1, c_tile, H, W), lambda n, ci: (n, ci, 0, 0)),
            ],
            out_specs=pl.BlockSpec(
                (bh * bw, 1, c_tile, oh, ow),
                lambda n, ci: (0, n, ci, 0, 0),
            ),
        ),
        compiler_params=pltpu.CompilerParams(
            dimension_semantics=("parallel", "parallel"),
            vmem_limit_bytes=int(vmem_limit)),
        cost_estimate=pl.CostEstimate(
            flops=int(flops),
            transcendentals=0,
            bytes_accessed=int(bytes_accessed)),
    )(sht, sw, x)

    # Free contiguous merge: (bh*bw, N, C, oh, ow) -> (bh*bw*N, C, oh, ow)
    return out5.reshape(bh * bw * N, C, oh, ow)


def _reference_numpy(x, block_shape, pad):
    """Pure-numpy transcription of the PyTorch forward (for verification)."""
    x = np.asarray(x)
    input_shape = list(x.shape)
    m = len(block_shape)
    n = x.ndim - m
    batch = input_shape[0]
    out_sp = [(input_shape[i + n] + pad[2 * i] + pad[2 * i + 1]) // block_shape[i]
              for i in range(m)]
    unfolded = [batch] + input_shape[1:n] + [d for i in range(m)
                                             for d in (out_sp[i], block_shape[i])]
    fold = [batch * int(np.prod(block_shape))] + input_shape[1:n] + out_sp
    permute = list(range(n + 1, n + 2 * m, 2)) + list(range(n)) + list(range(n, n + 2 * m, 2))
    # torch F.pad: pad tuples apply to the LAST dims first
    pad_np = [(0, 0)] * x.ndim
    for i in range(len(pad) // 2):
        pad_np[x.ndim - 1 - i] = (pad[2 * i], pad[2 * i + 1])
    xp = np.pad(x, pad_np)
    return xp.reshape(unfolded).transpose(permute).reshape(fold)


if __name__ == "__main__":
    key = jax.random.PRNGKey(0)
    x = jax.random.normal(key, (2, 4, 16, 16), dtype=jnp.float32)

    for block_shape, pad in (((2, 2), (1, 1, 1, 1)),
                             ((3, 2), (1, 1, 1, 1))):
        out = jax.block_until_ready(space_to_batch_nd(x, block_shape, pad))
        ref = _reference_numpy(np.asarray(x), block_shape, pad)
        assert tuple(out.shape) == tuple(ref.shape), (out.shape, ref.shape)
        np.testing.assert_allclose(np.asarray(out), ref, rtol=1e-6, atol=1e-6)

    print("KERNEL_OK")
</pallas_src>

<mosaic_0001>
module attributes {stable_mosaic.version = 11 : i64} {
  func.func @kernel(%arg0: i32, %arg1: i32, %arg2: memref<18x16xf32, #tpu.memory_space<vmem>>, %arg3: memref<16x18xf32, #tpu.memory_space<vmem>>, %arg4: memref<1x4x16x16xf32, #tpu.memory_space<vmem>>, %arg5: memref<4x1x4x9x9xf32, #tpu.memory_space<vmem>>) attributes {dimension_semantics = [#tpu.dimension_semantics<parallel>, #tpu.dimension_semantics<parallel>], iteration_bounds = array<i64: 2, 1>, scalar_prefetch = 0 : i64, scratch_operands = 0 : i64, tpu.core_type = #tpu.core_type<tc>, window_params = [{pipeline_mode = #tpu.pipeline_mode<synchronous>, transform_indices = @transform_0, window_bounds = array<i64: 18, 16>}, {pipeline_mode = #tpu.pipeline_mode<synchronous>, transform_indices = @transform_1, window_bounds = array<i64: 16, 18>}, {transform_indices = @transform_2, window_bounds = array<i64: 1, 4, 16, 16>}, {transform_indices = @transform_3, window_bounds = array<i64: 4, 1, 4, 9, 9>}]} {
    %c0 = arith.constant 0 : index
    %c0_0 = arith.constant 0 : index
    %0 = vector.load %arg2[%c0, %c0_0] : memref<18x16xf32, #tpu.memory_space<vmem>>, vector<18x16xf32>
    %c0_1 = arith.constant 0 : index
    %c0_2 = arith.constant 0 : index
    %1 = vector.load %arg3[%c0_1, %c0_2] : memref<16x18xf32, #tpu.memory_space<vmem>>, vector<16x18xf32>
    %c0_3 = arith.constant 0 : index
    %c0_4 = arith.constant 0 : index
    %c0_5 = arith.constant 0 : index
    %c0_6 = arith.constant 0 : index
    %2 = vector.load %arg4[%c0_3, %c0_4, %c0_5, %c0_6] : memref<1x4x16x16xf32, #tpu.memory_space<vmem>>, vector<1x1x16x16xf32>
    %3 = vector.shape_cast %2 : vector<1x1x16x16xf32> to vector<16x16xf32>
    %cst = arith.constant dense<0.000000e+00> : vector<16x18xf32>
    %4 = tpu.matmul %3, %1, %cst {dimension_numbers = #tpu.dot_dimension_numbers<[1], [0], [0], [1], [0, 0, 1, 1], [], []>, precision = #tpu.contract_precision<fp32>} : vector<16x16xf32>, vector<16x18xf32>, vector<16x18xf32> -> vector<16x18xf32>
    %cst_7 = arith.constant dense<0.000000e+00> : vector<18x18xf32>
    %5 = tpu.matmul %0, %4, %cst_7 {dimension_numbers = #tpu.dot_dimension_numbers<[1], [0], [0], [1], [0, 0, 1, 1], [], []>, precision = #tpu.contract_precision<fp32>} : vector<18x16xf32>, vector<16x18xf32>, vector<18x18xf32> -> vector<18x18xf32>
    %6 = vector.extract_strided_slice %5 {offsets = [0, 0], sizes = [9, 9], strides = [1, 1]} : vector<18x18xf32> to vector<9x9xf32>
    %c0_8 = arith.constant 0 : index
    %c0_9 = arith.constant 0 : index
    %c0_10 = arith.constant 0 : index
    %c0_11 = arith.constant 0 : index
    %c0_12 = arith.constant 0 : index
    %7 = vector.load %arg5[%c0_8, %c0_9, %c0_10, %c0_11, %c0_12] : memref<4x1x4x9x9xf32, #tpu.memory_space<vmem>>, vector<1x1x1x9x9xf32>
    %8 = vector.shape_cast %7 : vector<1x1x1x9x9xf32> to vector<9x9xf32>
    %9 = vector.shape_cast %6 : vector<9x9xf32> to vector<1x1x1x9x9xf32>
    tpu.vector_store %arg5[%c0_8, %c0_9, %c0_10, %c0_11, %c0_12], %9 {strides = array<i32>} : memref<4x1x4x9x9xf32, #tpu.memory_space<vmem>>, vector<1x1x1x9x9xf32>,
    %10 = vector.extract_strided_slice %5 {offsets = [0, 9], sizes = [9, 9], strides = [1, 1]} : vector<18x18xf32> to vector<9x9xf32>
    %c1 = arith.constant 1 : index
    %c0_13 = arith.constant 0 : index
    %c0_14 = arith.constant 0 : index
    %c0_15 = arith.constant 0 : index
    %c0_16 = arith.constant 0 : index
    %11 = vector.load %arg5[%c1, %c0_13, %c0_14, %c0_15, %c0_16] : memref<4x1x4x9x9xf32, #tpu.memory_space<vmem>>, vector<1x1x1x9x9xf32>
    %12 = vector.shape_cast %11 : vector<1x1x1x9x9xf32> to vector<9x9xf32>
    %13 = vector.shape_cast %10 : vector<9x9xf32> to vector<1x1x1x9x9xf32>
    tpu.vector_store %arg5[%c1, %c0_13, %c0_14, %c0_15, %c0_16], %13 {strides = array<i32>} : memref<4x1x4x9x9xf32, #tpu.memory_space<vmem>>, vector<1x1x1x9x9xf32>,
    %14 = vector.extract_strided_slice %5 {offsets = [9, 0], sizes = [9, 9], strides = [1, 1]} : vector<18x18xf32> to vector<9x9xf32>
    %c2 = arith.constant 2 : index
    %c0_17 = arith.constant 0 : index
    %c0_18 = arith.constant 0 : index
    %c0_19 = arith.constant 0 : index
    %c0_20 = arith.constant 0 : index
    %15 = vector.load %arg5[%c2, %c0_17, %c0_18, %c0_19, %c0_20] : memref<4x1x4x9x9xf32, #tpu.memory_space<vmem>>, vector<1x1x1x9x9xf32>
    %16 = vector.shape_cast %15 : vector<1x1x1x9x9xf32> to vector<9x9xf32>
    %17 = vector.shape_cast %14 : vector<9x9xf32> to vector<1x1x1x9x9xf32>
    tpu.vector_store %arg5[%c2, %c0_17, %c0_18, %c0_19, %c0_20], %17 {strides = array<i32>} : memref<4x1x4x9x9xf32, #tpu.memory_space<vmem>>, vector<1x1x1x9x9xf32>,
    %18 = vector.extract_strided_slice %5 {offsets = [9, 9], sizes = [9, 9], strides = [1, 1]} : vector<18x18xf32> to vector<9x9xf32>
    %c3 = arith.constant 3 : index
    %c0_21 = arith.constant 0 : index
    %c0_22 = arith.constant 0 : index
    %c0_23 = arith.constant 0 : index
    %c0_24 = arith.constant 0 : index
    %19 = vector.load %arg5[%c3, %c0_21, %c0_22, %c0_23, %c0_24] : memref<4x1x4x9x9xf32, #tpu.memory_space<vmem>>, vector<1x1x1x9x9xf32>
    %20 = vector.shape_cast %19 : vector<1x1x1x9x9xf32> to vector<9x9xf32>
    %21 = vector.shape_cast %18 : vector<9x9xf32> to vector<1x1x1x9x9xf32>
    tpu.vector_store %arg5[%c3, %c0_21, %c0_22, %c0_23, %c0_24], %21 {strides = array<i32>} : memref<4x1x4x9x9xf32, #tpu.memory_space<vmem>>, vector<1x1x1x9x9xf32>,
    %c0_25 = arith.constant 0 : index
    %c1_26 = arith.constant 1 : index
    %c0_27 = arith.constant 0 : index
    %c0_28 = arith.constant 0 : index
    %22 = vector.load %arg4[%c0_25, %c1_26, %c0_27, %c0_28] : memref<1x4x16x16xf32, #tpu.memory_space<vmem>>, vector<1x1x16x16xf32>
    %23 = vector.shape_cast %22 : vector<1x1x16x16xf32> to vector<16x16xf32>
    %cst_29 = arith.constant dense<0.000000e+00> : vector<16x18xf32>
    %24 = tpu.matmul %23, %1, %cst_29 {dimension_numbers = #tpu.dot_dimension_numbers<[1], [0], [0], [1], [0, 0, 1, 1], [], []>, precision = #tpu.contract_precision<fp32>} : vector<16x16xf32>, vector<16x18xf32>, vector<16x18xf32> -> vector<16x18xf32>
    %cst_30 = arith.constant dense<0.000000e+00> : vector<18x18xf32>
    %25 = tpu.matmul %0, %24, %cst_30 {dimension_numbers = #tpu.dot_dimension_numbers<[1], [0], [0], [1], [0, 0, 1, 1], [], []>, precision = #tpu.contract_precision<fp32>} : vector<18x16xf32>, vector<16x18xf32>, vector<18x18xf32> -> vector<18x18xf32>
    %26 = vector.extract_strided_slice %25 {offsets = [0, 0], sizes = [9, 9], strides = [1, 1]} : vector<18x18xf32> to vector<9x9xf32>
    %c0_31 = arith.constant 0 : index
    %c0_32 = arith.constant 0 : index
    %c1_33 = arith.constant 1 : index
    %c0_34 = arith.constant 0 : index
    %c0_35 = arith.constant 0 : index
    %27 = vector.load %arg5[%c0_31, %c0_32, %c1_33, %c0_34, %c0_35] : memref<4x1x4x9x9xf32, #tpu.memory_space<vmem>>, vector<1x1x1x9x9xf32>
    %28 = vector.shape_cast %27 : vector<1x1x1x9x9xf32> to vector<9x9xf32>
    %29 = vector.shape_cast %26 : vector<9x9xf32> to vector<1x1x1x9x9xf32>
    tpu.vector_store %arg5[%c0_31, %c0_32, %c1_33, %c0_34, %c0_35], %29 {strides = array<i32>} : memref<4x1x4x9x9xf32, #tpu.memory_space<vmem>>, vector<1x1x1x9x9xf32>,
    %30 = vector.extract_strided_slice %25 {offsets = [0, 9], sizes = [9, 9], strides = [1, 1]} : vector<18x18xf32> to vector<9x9xf32>
    %c1_36 = arith.constant 1 : index
    %c0_37 = arith.constant 0 : index
    %c1_38 = arith.constant 1 : index
    %c0_39 = arith.constant 0 : index
    %c0_40 = arith.constant 0 : index
    %31 = vector.load %arg5[%c1_36, %c0_37, %c1_38, %c0_39, %c0_40] : memref<4x1x4x9x9xf32, #tpu.memory_space<vmem>>, vector<1x1x1x9x9xf32>
    %32 = vector.shape_cast %31 : vector<1x1x1x9x9xf32> to vector<9x9xf32>
    %33 = vector.shape_cast %30 : vector<9x9xf32> to vector<1x1x1x9x9xf32>
    tpu.vector_store %arg5[%c1_36, %c0_37, %c1_38, %c0_39, %c0_40], %33 {strides = array<i32>} : memref<4x1x4x9x9xf32, #tpu.memory_space<vmem>>, vector<1x1x1x9x9xf32>,
    %34 = vector.extract_strided_slice %25 {offsets = [9, 0], sizes = [9, 9], strides = [1, 1]} : vector<18x18xf32> to vector<9x9xf32>
    %c2_41 = arith.constant 2 : index
    %c0_42 = arith.constant 0 : index
    %c1_43 = arith.constant 1 : index
    %c0_44 = arith.constant 0 : index
    %c0_45 = arith.constant 0 : index
    %35 = vector.load %arg5[%c2_41, %c0_42, %c1_43, %c0_44, %c0_45] : memref<4x1x4x9x9xf32, #tpu.memory_space<vmem>>, vector<1x1x1x9x9xf32>
    %36 = vector.shape_cast %35 : vector<1x1x1x9x9xf32> to vector<9x9xf32>
    %37 = vector.shape_cast %34 : vector<9x9xf32> to vector<1x1x1x9x9xf32>
    tpu.vector_store %arg5[%c2_41, %c0_42, %c1_43, %c0_44, %c0_45], %37 {strides = array<i32>} : memref<4x1x4x9x9xf32, #tpu.memory_space<vmem>>, vector<1x1x1x9x9xf32>,
    %38 = vector.extract_strided_slice %25 {offsets = [9, 9], sizes = [9, 9], strides = [1, 1]} : vector<18x18xf32> to vector<9x9xf32>
    %c3_46 = arith.constant 3 : index
    %c0_47 = arith.constant 0 : index
    %c1_48 = arith.constant 1 : index
    %c0_49 = arith.constant 0 : index
    %c0_50 = arith.constant 0 : index
    %39 = vector.load %arg5[%c3_46, %c0_47, %c1_48, %c0_49, %c0_50] : memref<4x1x4x9x9xf32, #tpu.memory_space<vmem>>, vector<1x1x1x9x9xf32>
    %40 = vector.shape_cast %39 : vector<1x1x1x9x9xf32> to vector<9x9xf32>
    %41 = vector.shape_cast %38 : vector<9x9xf32> to vector<1x1x1x9x9xf32>
    tpu.vector_store %arg5[%c3_46, %c0_47, %c1_48, %c0_49, %c0_50], %41 {strides = array<i32>} : memref<4x1x4x9x9xf32, #tpu.memory_space<vmem>>, vector<1x1x1x9x9xf32>,
    %c0_51 = arith.constant 0 : index
    %c2_52 = arith.constant 2 : index
    %c0_53 = arith.constant 0 : index
    %c0_54 = arith.constant 0 : index
    %42 = vector.load %arg4[%c0_51, %c2_52, %c0_53, %c0_54] : memref<1x4x16x16xf32, #tpu.memory_space<vmem>>, vector<1x1x16x16xf32>
    %43 = vector.shape_cast %42 : vector<1x1x16x16xf32> to vector<16x16xf32>
    %cst_55 = arith.constant dense<0.000000e+00> : vector<16x18xf32>
    %44 = tpu.matmul %43, %1, %cst_55 {dimension_numbers = #tpu.dot_dimension_numbers<[1], [0], [0], [1], [0, 0, 1, 1], [], []>, precision = #tpu.contract_precision<fp32>} : vector<16x16xf32>, vector<16x18xf32>, vector<16x18xf32> -> vector<16x18xf32>
    %cst_56 = arith.constant dense<0.000000e+00> : vector<18x18xf32>
    %45 = tpu.matmul %0, %44, %cst_56 {dimension_numbers = #tpu.dot_dimension_numbers<[1], [0], [0], [1], [0, 0, 1, 1], [], []>, precision = #tpu.contract_precision<fp32>} : vector<18x16xf32>, vector<16x18xf32>, vector<18x18xf32> -> vector<18x18xf32>
    %46 = vector.extract_strided_slice %45 {offsets = [0, 0], sizes = [9, 9], strides = [1, 1]} : vector<18x18xf32> to vector<9x9xf32>
    %c0_57 = arith.constant 0 : index
    %c0_58 = arith.constant 0 : index
    %c2_59 = arith.constant 2 : index
    %c0_60 = arith.constant 0 : index
    %c0_61 = arith.constant 0 : index
    %47 = vector.load %arg5[%c0_57, %c0_58, %c2_59, %c0_60, %c0_61] : memref<4x1x4x9x9xf32, #tpu.memory_space<vmem>>, vector<1x1x1x9x9xf32>
    %48 = vector.shape_cast %47 : vector<1x1x1x9x9xf32> to vector<9x9xf32>
    %49 = vector.shape_cast %46 : vector<9x9xf32> to vector<1x1x1x9x9xf32>
    tpu.vector_store %arg5[%c0_57, %c0_58, %c2_59, %c0_60, %c0_61], %49 {strides = array<i32>} : memref<4x1x4x9x9xf32, #tpu.memory_space<vmem>>, vector<1x1x1x9x9xf32>,
    %50 = vector.extract_strided_slice %45 {offsets = [0, 9], sizes = [9, 9], strides = [1, 1]} : vector<18x18xf32> to vector<9x9xf32>
    %c1_62 = arith.constant 1 : index
    %c0_63 = arith.constant 0 : index
    %c2_64 = arith.constant 2 : index
    %c0_65 = arith.constant 0 : index
    %c0_66 = arith.constant 0 : index
    %51 = vector.load %arg5[%c1_62, %c0_63, %c2_64, %c0_65, %c0_66] : memref<4x1x4x9x9xf32, #tpu.memory_space<vmem>>, vector<1x1x1x9x9xf32>
    %52 = vector.shape_cast %51 : vector<1x1x1x9x9xf32> to vector<9x9xf32>
    %53 = vector.shape_cast %50 : vector<9x9xf32> to vector<1x1x1x9x9xf32>
    tpu.vector_store %arg5[%c1_62, %c0_63, %c2_64, %c0_65, %c0_66], %53 {strides = array<i32>} : memref<4x1x4x9x9xf32, #tpu.memory_space<vmem>>, vector<1x1x1x9x9xf32>,
    %54 = vector.extract_strided_slice %45 {offsets = [9, 0], sizes = [9, 9], strides = [1, 1]} : vector<18x18xf32> to vector<9x9xf32>
    %c2_67 = arith.constant 2 : index
    %c0_68 = arith.constant 0 : index
    %c2_69 = arith.constant 2 : index
    %c0_70 = arith.constant 0 : index
    %c0_71 = arith.constant 0 : index
    %55 = vector.load %arg5[%c2_67, %c0_68, %c2_69, %c0_70, %c0_71] : memref<4x1x4x9x9xf32, #tpu.memory_space<vmem>>, vector<1x1x1x9x9xf32>
    %56 = vector.shape_cast %55 : vector<1x1x1x9x9xf32> to vector<9x9xf32>
    %57 = vector.shape_cast %54 : vector<9x9xf32> to vector<1x1x1x9x9xf32>
    tpu.vector_store %arg5[%c2_67, %c0_68, %c2_69, %c0_70, %c0_71], %57 {strides = array<i32>} : memref<4x1x4x9x9xf32, #tpu.memory_space<vmem>>, vector<1x1x1x9x9xf32>,
    %58 = vector.extract_strided_slice %45 {offsets = [9, 9], sizes = [9, 9], strides = [1, 1]} : vector<18x18xf32> to vector<9x9xf32>
    %c3_72 = arith.constant 3 : index
    %c0_73 = arith.constant 0 : index
    %c2_74 = arith.constant 2 : index
    %c0_75 = arith.constant 0 : index
    %c0_76 = arith.constant 0 : index
    %59 = vector.load %arg5[%c3_72, %c0_73, %c2_74, %c0_75, %c0_76] : memref<4x1x4x9x9xf32, #tpu.memory_space<vmem>>, vector<1x1x1x9x9xf32>
    %60 = vector.shape_cast %59 : vector<1x1x1x9x9xf32> to vector<9x9xf32>
    %61 = vector.shape_cast %58 : vector<9x9xf32> to vector<1x1x1x9x9xf32>
    tpu.vector_store %arg5[%c3_72, %c0_73, %c2_74, %c0_75, %c0_76], %61 {strides = array<i32>} : memref<4x1x4x9x9xf32, #tpu.memory_space<vmem>>, vector<1x1x1x9x9xf32>,
    %c0_77 = arith.constant 0 : index
    %c3_78 = arith.constant 3 : index
    %c0_79 = arith.constant 0 : index
    %c0_80 = arith.constant 0 : index
    %62 = vector.load %arg4[%c0_77, %c3_78, %c0_79, %c0_80] : memref<1x4x16x16xf32, #tpu.memory_space<vmem>>, vector<1x1x16x16xf32>
    %63 = vector.shape_cast %62 : vector<1x1x16x16xf32> to vector<16x16xf32>
    %cst_81 = arith.constant dense<0.000000e+00> : vector<16x18xf32>
    %64 = tpu.matmul %63, %1, %cst_81 {dimension_numbers = #tpu.dot_dimension_numbers<[1], [0], [0], [1], [0, 0, 1, 1], [], []>, precision = #tpu.contract_precision<fp32>} : vector<16x16xf32>, vector<16x18xf32>, vector<16x18xf32> -> vector<16x18xf32>
    %cst_82 = arith.constant dense<0.000000e+00> : vector<18x18xf32>
    %65 = tpu.matmul %0, %64, %cst_82 {dimension_numbers = #tpu.dot_dimension_numbers<[1], [0], [0], [1], [0, 0, 1, 1], [], []>, precision = #tpu.contract_precision<fp32>} : vector<18x16xf32>, vector<16x18xf32>, vector<18x18xf32> -> vector<18x18xf32>
    %66 = vector.extract_strided_slice %65 {offsets = [0, 0], sizes = [9, 9], strides = [1, 1]} : vector<18x18xf32> to vector<9x9xf32>
    %c0_83 = arith.constant 0 : index
    %c0_84 = arith.constant 0 : index
    %c3_85 = arith.constant 3 : index
    %c0_86 = arith.constant 0 : index
    %c0_87 = arith.constant 0 : index
    %67 = vector.load %arg5[%c0_83, %c0_84, %c3_85, %c0_86, %c0_87] : memref<4x1x4x9x9xf32, #tpu.memory_space<vmem>>, vector<1x1x1x9x9xf32>
    %68 = vector.shape_cast %67 : vector<1x1x1x9x9xf32> to vector<9x9xf32>
    %69 = vector.shape_cast %66 : vector<9x9xf32> to vector<1x1x1x9x9xf32>
    tpu.vector_store %arg5[%c0_83, %c0_84, %c3_85, %c0_86, %c0_87], %69 {strides = array<i32>} : memref<4x1x4x9x9xf32, #tpu.memory_space<vmem>>, vector<1x1x1x9x9xf32>,
    %70 = vector.extract_strided_slice %65 {offsets = [0, 9], sizes = [9, 9], strides = [1, 1]} : vector<18x18xf32> to vector<9x9xf32>
    %c1_88 = arith.constant 1 : index
    %c0_89 = arith.constant 0 : index
    %c3_90 = arith.constant 3 : index
    %c0_91 = arith.constant 0 : index
    %c0_92 = arith.constant 0 : index
    %71 = vector.load %arg5[%c1_88, %c0_89, %c3_90, %c0_91, %c0_92] : memref<4x1x4x9x9xf32, #tpu.memory_space<vmem>>, vector<1x1x1x9x9xf32>
    %72 = vector.shape_cast %71 : vector<1x1x1x9x9xf32> to vector<9x9xf32>
    %73 = vector.shape_cast %70 : vector<9x9xf32> to vector<1x1x1x9x9xf32>
    tpu.vector_store %arg5[%c1_88, %c0_89, %c3_90, %c0_91, %c0_92], %73 {strides = array<i32>} : memref<4x1x4x9x9xf32, #tpu.memory_space<vmem>>, vector<1x1x1x9x9xf32>,
    %74 = vector.extract_strided_slice %65 {offsets = [9, 0], sizes = [9, 9], strides = [1, 1]} : vector<18x18xf32> to vector<9x9xf32>
    %c2_93 = arith.constant 2 : index
    %c0_94 = arith.constant 0 : index
    %c3_95 = arith.constant 3 : index
    %c0_96 = arith.constant 0 : index
    %c0_97 = arith.constant 0 : index
    %75 = vector.load %arg5[%c2_93, %c0_94, %c3_95, %c0_96, %c0_97] : memref<4x1x4x9x9xf32, #tpu.memory_space<vmem>>, vector<1x1x1x9x9xf32>
    %76 = vector.shape_cast %75 : vector<1x1x1x9x9xf32> to vector<9x9xf32>
    %77 = vector.shape_cast %74 : vector<9x9xf32> to vector<1x1x1x9x9xf32>
    tpu.vector_store %arg5[%c2_93, %c0_94, %c3_95, %c0_96, %c0_97], %77 {strides = array<i32>} : memref<4x1x4x9x9xf32, #tpu.memory_space<vmem>>, vector<1x1x1x9x9xf32>,
    %78 = vector.extract_strided_slice %65 {offsets = [9, 9], sizes = [9, 9], strides = [1, 1]} : vector<18x18xf32> to vector<9x9xf32>
    %c3_98 = arith.constant 3 : index
    %c0_99 = arith.constant 0 : index
    %c3_100 = arith.constant 3 : index
    %c0_101 = arith.constant 0 : index
    %c0_102 = arith.constant 0 : index
    %79 = vector.load %arg5[%c3_98, %c0_99, %c3_100, %c0_101, %c0_102] : memref<4x1x4x9x9xf32, #tpu.memory_space<vmem>>, vector<1x1x1x9x9xf32>
    %80 = vector.shape_cast %79 : vector<1x1x1x9x9xf32> to vector<9x9xf32>
    %81 = vector.shape_cast %78 : vector<9x9xf32> to vector<1x1x1x9x9xf32>
    tpu.vector_store %arg5[%c3_98, %c0_99, %c3_100, %c0_101, %c0_102], %81 {strides = array<i32>} : memref<4x1x4x9x9xf32, #tpu.memory_space<vmem>>, vector<1x1x1x9x9xf32>,
    return
  }
  func.func @transform_0(%arg0: i32, %arg1: i32) -> (i32, i32) {
    %c0_i32 = arith.constant 0 : i32
    %c0_i32_0 = arith.constant 0 : i32
    %c0_i32_1 = arith.constant 0 : i32
    return %c0_i32, %c0_i32_0 : i32, i32
  }
  func.func @transform_1(%arg0: i32, %arg1: i32) -> (i32, i32) {
    %c0_i32 = arith.constant 0 : i32
    %c0_i32_0 = arith.constant 0 : i32
    %c0_i32_1 = arith.constant 0 : i32
    return %c0_i32, %c0_i32_0 : i32, i32
  }
  func.func @transform_2(%arg0: i32, %arg1: i32) -> (i32, i32, i32, i32) {
    %c0_i32 = arith.constant 0 : i32
    %c0_i32_0 = arith.constant 0 : i32
    %c0_i32_1 = arith.constant 0 : i32
    return %arg0, %arg1, %c0_i32, %c0_i32_0 : i32, i32, i32, i32
  }
  func.func @transform_3(%arg0: i32, %arg1: i32) -> (i32, i32, i32, i32, i32) {
    %c0_i32 = arith.constant 0 : i32
    %c0_i32_0 = arith.constant 0 : i32
    %c0_i32_1 = arith.constant 0 : i32
    %c0_i32_2 = arith.constant 0 : i32
    return %c0_i32, %arg0, %arg1, %c0_i32_0, %c0_i32_1 : i32, i32, i32, i32, i32
  }
}

</mosaic_0001>

<llo_original>
// kernel: tpu_custom_call.1
$region0: #{tpu_custom_call.1}
  #allocation0 [shape = 'u32[]', space=smem, size = 0x4, offset = 0x4, fixed_abs, tag = 'smem constant byte address 0x4 - core index']
  #allocation1 [shape = 'u32[144,128]{1,0:T(1,128)}', space=vmem, size = 0x12000, scoped, tag = 'internal scratch']
  %s0 = inlined_call_operand.vmem [shape: f32[18,16], index: 0, kind: input, shape index: {}]
  %s1 = inlined_call_operand.vmem [shape: f32[16,18], index: 1, kind: input, shape index: {}]
  %s2 = inlined_call_operand.hbm [shape: f32[2,4,16,16], index: 2, kind: input, shape index: {}]
  %s3 = inlined_call_operand.vmem [shape: f32[4,2,4,9,9], index: 3, kind: output, shape index: {}]
  %s4 = sld [smem:[#allocation0]]
  $region83: #{tpu_custom_call.1} parent=0
    _
  %s6 = ssub.s32 1, %s4
  %s7 = scalar_select 0, %s6, %s4
  $region1: #{tpu_custom_call.1} parent=0
    #allocation2 [shape = 'u8[65536]{0}', space=vmem, size = 0x10000, scoped, tag = 'input window, operand 2']
    #allocation3 [shape = 's32[2]{0}', space=sflag, size = 0x8, scoped, tag = 'scoped memory for tpu_custom_call.1']
    #allocation4 [shape = 'u8[262144]{0}', space=vmem, size = 0x40000, scoped, tag = 'output window, operand 0']
    %8 = vsyncpa [#allocation3], 0
    %s9 = scalar_lea.sflag [#allocation3], 1
    %10 = vsyncpa %s9, 0
    loop: start=0, step=1, limit=4
    $region2: #{tpu_custom_call.1} parent=1 // loop_pre_header
      _
    $region3: #{tpu_custom_call.1} parent=1 // loop_header
      %s12 = sphi 0, %s16
      %p13 = scmp.ge.s32.totalorder %s12, 4
      %s19 = sphi 0, %s31
      %s20 = sphi 0, %s27
      %s21 = sphi 0, %s19
      %s22 = sphi 0, %s20
      %s23 = sphi 0, %s21
      %s24 = sphi 0, %s22
      %s32 = sphi 0, %s32
      %s34 = sphi 0, %s32
      %s35 = sphi 0, %s34
      %s49 = sphi 0, %s35
      %s53 = sphi 0, %s53
      %s55 = sphi 0, %s53
      %s56 = sphi 0, %s55
      %s70 = sphi 0, %s56
      %s78 = sphi 0, %s80
      %s81 = sphi 0, %s78
      %s82 = sphi 0, %s81
      %s98 = sphi 0, %s82
      %s106 = sphi 0, %s108
      %s109 = sphi 0, %s106
      %s110 = sphi 0, %s109
      %s126 = sphi 0, %s110
    $region4: #{tpu_custom_call.1} parent=1 // loop_header_branch
      %15 = sbr.rel (%p13) target = $region8
    $region5: #{tpu_custom_call.1} parent=1 // loop_body
      %s17 = ssub.s32 %s12, 1
      %s18 = ssub.s32 %s12, 2
      %s25 = sadd.s32 1, %s20
      %p26 = scmp.ge.s32.totalorder %s25, 1
      %s27 = scalar_select %p26, 0, %s25
      %s28 = sadd.s32 1, %s19
      %s29 = scalar_select %p26, %s28, %s19
      %p30 = scmp.ge.s32.totalorder %s29, 2
      %s31 = scalar_select %p30, 0, %s29
      %s33 = sadd.s32 %s32, 1
      %p36 = scmp.eq.s32.totalorder %s12, 1
      %p37 = scmp.ne.s32.totalorder %s32, %s34
      %p38 = scmp.eq.s32.totalorder %s12, 0
      %p39 = por %p37, %p38
      %p40 = scmp.ne.s32.totalorder %s32, %s34
      %p41 = scmp.eq.s32.totalorder %s17, 1
      %p42 = por %p40, %p41
      %p43 = scmp.ne.s32.totalorder %s34, %s35
      %p44 = scmp.eq.s32.totalorder %s17, 0
      %p45 = por %p43, %p44
      %p46 = scmp.ne.s32.totalorder %s34, %s35
      %p47 = scmp.eq.s32.totalorder %s18, 1
      %p48 = por %p46, %p47
      %p50 = scmp.ne.s32.totalorder %s35, %s49
      %p51 = scmp.eq.s32.totalorder %s18, 0
      %p52 = por %p50, %p51
      %s54 = sadd.s32 %s53, 1
      %p57 = scmp.eq.s32.totalorder %s12, 1
      %p58 = scmp.ne.s32.totalorder %s53, %s55
      %p59 = scmp.eq.s32.totalorder %s12, 0
      %p60 = por %p58, %p59
      %p61 = scmp.ne.s32.totalorder %s53, %s55
      %p62 = scmp.eq.s32.totalorder %s17, 1
      %p63 = por %p61, %p62
      %p64 = scmp.ne.s32.totalorder %s55, %s56
      %p65 = scmp.eq.s32.totalorder %s17, 0
      %p66 = por %p64, %p65
      %p67 = scmp.ne.s32.totalorder %s55, %s56
      %p68 = scmp.eq.s32.totalorder %s18, 1
      %p69 = por %p67, %p68
      %p71 = scmp.ne.s32.totalorder %s56, %s70
      %p72 = scmp.eq.s32.totalorder %s18, 0
      %p73 = por %p71, %p72
      %s74 = ssub.s32 %s19, %s31
      %s75 = ssub.s32 %s20, %s27
      %s76 = sor.u32 %s74, %s75
      %p77 = scmp.eq.s32.totalorder %s76, 0
      %s79 = sadd.s32 %s78, 1
      %s80 = scalar_select %p77, %s78, %s79
      %p83 = pneg %p77
      %p84 = scmp.eq.s32.totalorder %s12, 1
      %p85 = por %p83, %p84
      %p86 = scmp.ne.s32.totalorder %s78, %s81
      %p87 = scmp.eq.s32.totalorder %s12, 0
      %p88 = por %p86, %p87
      %p89 = scmp.ne.s32.totalorder %s78, %s81
      %p90 = scmp.eq.s32.totalorder %s17, 1
      %p91 = por %p89, %p90
      %p92 = scmp.ne.s32.totalorder %s81, %s82
      %p93 = scmp.eq.s32.totalorder %s17, 0
      %p94 = por %p92, %p93
      %p95 = scmp.ne.s32.totalorder %s81, %s82
      %p96 = scmp.eq.s32.totalorder %s18, 1
      %p97 = por %p95, %p96
      %p99 = scmp.ne.s32.totalorder %s82, %s98
      %p100 = scmp.eq.s32.totalorder %s18, 0
      %p101 = por %p99, %p100
      %s102 = ssub.s32 %s19, %s31
      %s103 = ssub.s32 %s20, %s27
      %s104 = sor.u32 %s102, %s103
      %p105 = scmp.eq.s32.totalorder %s104, 0
      %s107 = sadd.s32 %s106, 1
      %s108 = scalar_select %p105, %s106, %s107
      %p111 = pneg %p105
      %p112 = scmp.eq.s32.totalorder %s12, 1
      %p113 = por %p111, %p112
      %p114 = scmp.ne.s32.totalorder %s106, %s109
      %p115 = scmp.eq.s32.totalorder %s12, 0
      %p116 = por %p114, %p115
      %p117 = scmp.ne.s32.totalorder %s106, %s109
      %p118 = scmp.eq.s32.totalorder %s17, 1
      %p119 = por %p117, %p118
      %p120 = scmp.ne.s32.totalorder %s109, %s110
      %p121 = scmp.eq.s32.totalorder %s17, 0
      %p122 = por %p120, %p121
      %p123 = scmp.ne.s32.totalorder %s109, %s110
      %p124 = scmp.eq.s32.totalorder %s18, 1
      %p125 = por %p123, %p124
      %p127 = scmp.ne.s32.totalorder %s110, %s126
      %p128 = scmp.eq.s32.totalorder %s18, 0
      %p129 = por %p127, %p128
      %p130 = scmp.le.s32.totalorder 1, %s12
      %p131 = scmp.lt.s32.totalorder %s12, 3
      %p132 = pnand %p130, %p131
      %p133 = pneg %p132
      // Predicated region
      $region9: #{tpu_custom_call.1} parent=5 // pred_check
        _
      $region10: #{tpu_custom_call.1} parent=5 // pred_check_branch
        %135 = sbr.rel (%p132) target = $region12
      $region11: #{tpu_custom_call.1} parent=5 // pred_region
        %s136 = ssub.s32 %s12, 1
        // Predicated region
        $region13: #{tpu_custom_call.1} parent=11 // pred_check
          %p137 = pneg %p45
        $region14: #{tpu_custom_call.1} parent=11 // pred_check_branch
          %139 = sbr.rel (%p137) target = $region16
        $region15: #{tpu_custom_call.1} parent=11 // pred_region
          _
        $region16: #{tpu_custom_call.1} parent=11 // pred_fallthru
          _
        // Predicated region
        $region17: #{tpu_custom_call.1} parent=11 // pred_check
          %p140 = pneg %p66
        $region18: #{tpu_custom_call.1} parent=11 // pred_check_branch
          %142 = sbr.rel (%p140) target = $region20
        $region19: #{tpu_custom_call.1} parent=11 // pred_region
          _
        $region20: #{tpu_custom_call.1} parent=11 // pred_fallthru
          _
      $region12: #{tpu_custom_call.1} parent=5 // pred_fallthru
        _
      %p143 = scmp.lt.s32.totalorder %s12, 2
      // Predicated region
      $region21: #{tpu_custom_call.1} parent=5 // pred_check
        %p144 = pneg %p143
      $region22: #{tpu_custom_call.1} parent=5 // pred_check_branch
        %146 = sbr.rel (%p144) target = $region24
      $region23: #{tpu_custom_call.1} parent=5 // pred_region
        // Predicated region
        $region25: #{tpu_custom_call.1} parent=23 // pred_check
          %p147 = pneg %p88
        $region26: #{tpu_custom_call.1} parent=23 // pred_check_branch
          %149 = sbr.rel (%p147) target = $region28
        $region27: #{tpu_custom_call.1} parent=23 // pred_region
          %s150 = sand.u32 %s78, 1
          %s151 = scalar_lea.sflag [#allocation3], %s150
          %s152 = sand.u32 %s78, 1
          %s153 = smul.addr %s152, 64
          %s154 = scalar_lea.vmem [#allocation2], %s153
          %s155 = smul.u32 4, %s20
          %s157 = ssub.s32 1024, 1024
          %158 = vsyncadd %s151, %s157
          %s159 = smul.addr %s155, 2
          %s160 = smul.addr %s19, 8
          %s161 = sadd.s32 %s159, %s160
          %s162 = smul.addr %s161, 128
          %s163 = scalar_lea.hbm %s2, %s162
          %s164 = sshll.u32 %s154, 4
          %s165 = int_to_ptr.vmem [resolvable:$true] %s164
          %170 = dma.hbm_to_vmem [thread:$0]  %s163, 1024, %s165, %s151, 128, 128, 8
        $region28: #{tpu_custom_call.1} parent=23 // pred_fallthru
          _
      $region24: #{tpu_custom_call.1} parent=5 // pred_fallthru
        _
      %p171 = scmp.le.s32.totalorder 1, %s12
      %p172 = scmp.lt.s32.totalorder %s12, 3
      %p173 = pnand %p171, %p172
      %p174 = pneg %p173
      // Predicated region
      $region29: #{tpu_custom_call.1} parent=5 // pred_check
        _
      $region30: #{tpu_custom_call.1} parent=5 // pred_check_branch
        %176 = sbr.rel (%p173) target = $region32
      $region31: #{tpu_custom_call.1} parent=5 // pred_region
        %s177 = ssub.s32 %s12, 1
        %s178 = sand.u32 %s81, 1
        %s179 = scalar_lea.sflag [#allocation3], %s178
        %s180 = sand.u32 %s81, 1
        %s181 = smul.addr %s180, 64
        %s182 = scalar_lea.vmem [#allocation2], %s181
        // Predicated region
        $region33: #{tpu_custom_call.1} parent=31 // pred_check
          %p183 = pneg %p94
        $region34: #{tpu_custom_call.1} parent=31 // pred_check_branch
          %185 = sbr.rel (%p183) target = $region36
        $region35: #{tpu_custom_call.1} parent=31 // pred_region
          %186 = dma.done %s179, 1024
        $region36: #{tpu_custom_call.1} parent=31 // pred_fallthru
          _
        %p187 = pneg %p45
        %p188 = pneg %p42
        %p189 = pneg %p66
        %p190 = pneg %p63
        %s191 = sand.u32 %s81, 1
        %s192 = scalar_lea.sflag [#allocation3], %s191
        %s193 = sand.u32 %s81, 1
        %s194 = smul.addr %s193, 64
        %s195 = scalar_lea.vmem [#allocation2], %s194
        %p196 = pneg %p94
        %p197 = pneg %p91
        %p198 = pneg %p122
        %p199 = pneg %p119
        %s200 = sand.u32 %s109, 1
        %s201 = sand.u32 %s109, 1
        %s202 = smul.addr %s201, 256
        %s203 = scalar_lea.vmem [#allocation4], %s202
        %s204 = smul.u32 4, %s22
        %s205 = smul.u32 4, %s22
        %v206 = vld [vmem:[%s0] sm:$0xff]
        %v207 = vld [vmem:[%s0 + $0x8] sm:$0xff]
        %v208 = vld [vmem:[%s0 + $0x10] sm:$0x3]
        %v209 = vld [vmem:[%s1] sm:$0xff]
        %v210 = vld [vmem:[%s1 + $0x8] sm:$0xff]
        %v211 = vld [vmem:[%s182] sm:$0xff]
        %v212 = vld [vmem:[%s182 + $0x8] sm:$0xff]
        %vm213 = vcmask 130048
        %v215 = vsel %vm213, %v211, 0
        %v218 = vsel %vm213, %v212, 0
        %220 = vmatprep.subr.mxu0 0.0
        %221 = vmatpush1.msra.mxu0 0.0
        %222 = vmatprep.subr.mxu0 0.0
        %223 = vmatpush1.msra.mxu0 0.0
        %224 = vmatprep.subr.mxu0 0.0
        %225 = vmatpush1.msra.mxu0 0.0
        %226 = vmatprep.subr.mxu0 0.0
        %227 = vmatpush1.msra.mxu0 0.0
        %228 = vmatprep.subr.mxu0 0.0
        %229 = vmatpush1.msra.mxu0 0.0
        %230 = vmatprep.subr.mxu0 0.0
        %231 = vmatpush1.msra.mxu0 0.0
        %232 = vmatprep.subr.mxu0 0.0
        %233 = vmatpush1.msra.mxu0 0.0
        %234 = vmatprep.subr.mxu0 0.0
        %235 = vmatpush1.msra.mxu0 0.0
        %236 = vmatprep.subr.mxu0 0.0
        %237 = vmatpush1.msra.mxu0 0.0
        %238 = vmatprep.subr.mxu0 0.0
        %239 = vmatpush1.msra.mxu0 0.0
        %240 = vmatprep.subr.mxu0 0.0
        %241 = vmatpush1.msra.mxu0 0.0
        %242 = vmatprep.subr.mxu0 0.0
        %243 = vmatpush1.msra.mxu0 0.0
        %244 = vmatprep.subr.mxu0 0.0
        %245 = vmatpush1.msra.mxu0 0.0
        %246 = vmatprep.subr.mxu0 0.0
        %247 = vmatpush1.msra.mxu0 0.0
        %248 = vmatprep.subr.mxu0 0.0
        %v249 = vand.u32 %v210, 4294901760
        %250 = vmatpush1.msra.mxu0 %v249
        %251 = vmatprep.subr.mxu0 0.0
        %v252 = vand.u32 %v209, 4294901760
        %253 = vmatpush1.msra.mxu0 %v252
        %254 = vmatprep.subr.mxu0 0.0
        %255 = vmatpush2.msra.mxu0 0.0
        %256 = vmatprep.subr.mxu0 0.0
        %257 = vmatpush2.msra.mxu0 0.0
        %258 = vmatprep.subr.mxu0 0.0
        %259 = vmatpush2.msra.mxu0 0.0
        %260 = vmatprep.subr.mxu0 0.0
        %261 = vmatpush2.msra.mxu0 0.0
        %262 = vmatprep.subr.mxu0 0.0
        %263 = vmatpush2.msra.mxu0 0.0
        %264 = vmatprep.subr.mxu0 0.0
        %265 = vmatpush2.msra.mxu0 0.0
        %266 = vmatprep.subr.mxu0 0.0
        %267 = vmatpush2.msra.mxu0 0.0
        %268 = vmatprep.subr.mxu0 0.0
        %269 = vmatpush2.msra.mxu0 0.0
        %270 = vmatprep.subr.mxu0 0.0
        %271 = vmatpush2.msra.mxu0 0.0
        %272 = vmatprep.subr.mxu0 0.0
        %273 = vmatpush2.msra.mxu0 0.0
        %274 = vmatprep.subr.mxu0 0.0
        %275 = vmatpush2.msra.mxu0 0.0
        %276 = vmatprep.subr.mxu0 0.0
        %277 = vmatpush2.msra.mxu0 0.0
        %278 = vmatprep.subr.mxu0 0.0
        %279 = vmatpush2.msra.mxu0 0.0
        %280 = vmatprep.subr.mxu0 0.0
        %281 = vmatpush2.msra.mxu0 0.0
        %282 = vmatprep.subr.mxu0 0.0
        %283 = vmatpush2.msra.mxu0 0.0
        %284 = vmatprep.subr.mxu0 0.0
        %285 = vmatpush2.msra.mxu0 0.0
        %286 = vmatprep.mubr.f32.mxu0 0.0
        %v287 = vand.u32 %v215, 4294901760
        %v288 = vsub.f32 %v215, %v287
        %v289 = vand.u32 %v288, 4294901760
        %v290 = vsub.f32 %v288, %v289
        %v291 = vand.u32 %v290, 4294901760
        %292 = vmatmul.mubr.f32.gmra.mxu0 %v291
        %v293 = vpop.f32.mrf.mxu0
        %v294 = vadd.f32 0.0, %v293
        %v295 = vpop.f32.mrf.mxu0
        %296 = vmatprep.mubr.f32.mxu0 0.0
        %v297 = vand.u32 %v218, 4294901760
        %v298 = vsub.f32 %v218, %v297
        %v299 = vand.u32 %v298, 4294901760
        %v300 = vsub.f32 %v298, %v299
        %v301 = vand.u32 %v300, 4294901760
        %302 = vmatmul.mubr.f32.gmra.mxu0 %v301
        %v303 = vpop.f32.mrf.mxu0
        %v304 = vadd.f32 0.0, %v303
        %v305 = vpop.f32.mrf.mxu0
        %306 = vdwg.mxu0
        %307 = vmatprep.subr.mxu0 0.0
        %308 = vmatpush1.msra.mxu0 0.0
        %309 = vmatprep.subr.mxu0 0.0
        %310 = vmatpush1.msra.mxu0 0.0
        %311 = vmatprep.subr.mxu0 0.0
        %312 = vmatpush1.msra.mxu0 0.0
        %313 = vmatprep.subr.mxu0 0.0
        %314 = vmatpush1.msra.mxu0 0.0
        %315 = vmatprep.subr.mxu0 0.0
        %316 = vmatpush1.msra.mxu0 0.0
        %317 = vmatprep.subr.mxu0 0.0
        %318 = vmatpush1.msra.mxu0 0.0
        %319 = vmatprep.subr.mxu0 0.0
        %320 = vmatpush1.msra.mxu0 0.0
        %321 = vmatprep.subr.mxu0 0.0
        %322 = vmatpush1.msra.mxu0 0.0
        %323 = vmatprep.subr.mxu0 0.0
        %324 = vmatpush1.msra.mxu0 0.0
        %325 = vmatprep.subr.mxu0 0.0
        %326 = vmatpush1.msra.mxu0 0.0
        %327 = vmatprep.subr.mxu0 0.0
        %328 = vmatpush1.msra.mxu0 0.0
        %329 = vmatprep.subr.mxu0 0.0
        %330 = vmatpush1.msra.mxu0 0.0
        %331 = vmatprep.subr.mxu0 0.0
        %332 = vmatpush1.msra.mxu0 0.0
        %333 = vmatprep.subr.mxu0 0.0
        %334 = vmatpush1.msra.mxu0 0.0
        %335 = vmatprep.subr.mxu0 0.0
        %v336 = vand.u32 %v210, 4294901760
        %v337 = vsub.f32 %v210, %v336
        %v338 = vand.u32 %v337, 4294901760
        %v339 = vsub.f32 %v337, %v338
        %v340 = vand.u32 %v339, 4294901760
        %341 = vmatpush1.msra.mxu0 %v340
        %342 = vmatprep.subr.mxu0 0.0
        %v343 = vand.u32 %v209, 4294901760
        %v344 = vsub.f32 %v209, %v343
        %v345 = vand.u32 %v344, 4294901760
        %v346 = vsub.f32 %v344, %v345
        %v347 = vand.u32 %v346, 4294901760
        %348 = vmatpush1.msra.mxu0 %v347
        %349 = vmatprep.subr.mxu0 0.0
        %350 = vmatpush2.msra.mxu0 0.0
        %351 = vmatprep.subr.mxu0 0.0
        %352 = vmatpush2.msra.mxu0 0.0
        %353 = vmatprep.subr.mxu0 0.0
        %354 = vmatpush2.msra.mxu0 0.0
        %355 = vmatprep.subr.mxu0 0.0
        %356 = vmatpush2.msra.mxu0 0.0
        %357 = vmatprep.subr.mxu0 0.0
        %358 = vmatpush2.msra.mxu0 0.0
        %359 = vmatprep.subr.mxu0 0.0
        %360 = vmatpush2.msra.mxu0 0.0
        %361 = vmatprep.subr.mxu0 0.0
        %362 = vmatpush2.msra.mxu0 0.0
        %363 = vmatprep.subr.mxu0 0.0
        %364 = vmatpush2.msra.mxu0 0.0
        %365 = vmatprep.subr.mxu0 0.0
        %366 = vmatpush2.msra.mxu0 0.0
        %367 = vmatprep.subr.mxu0 0.0
        %368 = vmatpush2.msra.mxu0 0.0
        %369 = vmatprep.subr.mxu0 0.0
        %370 = vmatpush2.msra.mxu0 0.0
        %371 = vmatprep.subr.mxu0 0.0
        %372 = vmatpush2.msra.mxu0 0.0
        %373 = vmatprep.subr.mxu0 0.0
        %374 = vmatpush2.msra.mxu0 0.0
        %375 = vmatprep.subr.mxu0 0.0
        %376 = vmatpush2.msra.mxu0 0.0
        %377 = vmatprep.subr.mxu0 0.0
        %378 = vmatpush2.msra.mxu0 0.0
        %379 = vmatprep.subr.mxu0 0.0
        %380 = vmatpush2.msra.mxu0 0.0
        %381 = vmatprep.mubr.f32.mxu0 0.0
        %v382 = vand.u32 %v215, 4294901760
        %383 = vmatmul.mubr.f32.gmra.mxu0 %v382
        %v384 = vpop.f32.mrf.mxu0
        %v385 = vadd.f32 %v294, %v384
        %v386 = vpop.f32.mrf.mxu0
        %387 = vmatprep.mubr.f32.mxu0 0.0
        %v388 = vand.u32 %v218, 4294901760
        %389 = vmatmul.mubr.f32.gmra.mxu0 %v388
        %v390 = vpop.f32.mrf.mxu0
        %v391 = vadd.f32 %v304, %v390
        %v392 = vpop.f32.mrf.mxu0
        %393 = vdwg.mxu0
        %394 = vmatprep.subr.mxu0 0.0
        %395 = vmatpush1.msra.mxu0 0.0
        %396 = vmatprep.subr.mxu0 0.0
        %397 = vmatpush1.msra.mxu0 0.0
        %398 = vmatprep.subr.mxu0 0.0
        %399 = vmatpush1.msra.mxu0 0.0
        %400 = vmatprep.subr.mxu0 0.0
        %401 = vmatpush1.msra.mxu0 0.0
        %402 = vmatprep.subr.mxu0 0.0
        %403 = vmatpush1.msra.mxu0 0.0
        %404 = vmatprep.subr.mxu0 0.0
        %405 = vmatpush1.msra.mxu0 0.0
        %406 = vmatprep.subr.mxu0 0.0
        %407 = vmatpush1.msra.mxu0 0.0
        %408 = vmatprep.subr.mxu0 0.0
        %409 = vmatpush1.msra.mxu0 0.0
        %410 = vmatprep.subr.mxu0 0.0
        %411 = vmatpush1.msra.mxu0 0.0
        %412 = vmatprep.subr.mxu0 0.0
        %413 = vmatpush1.msra.mxu0 0.0
        %414 = vmatprep.subr.mxu0 0.0
        %415 = vmatpush1.msra.mxu0 0.0
        %416 = vmatprep.subr.mxu0 0.0
        %417 = vmatpush1.msra.mxu0 0.0
        %418 = vmatprep.subr.mxu0 0.0
        %419 = vmatpush1.msra.mxu0 0.0
        %420 = vmatprep.subr.mxu0 0.0
        %421 = vmatpush1.msra.mxu0 0.0
        %422 = vmatprep.subr.mxu0 0.0
        %v423 = vand.u32 %v210, 4294901760
        %v424 = vsub.f32 %v210, %v423
        %425 = vmatpush1.msra.mxu0 %v424
        %426 = vmatprep.subr.mxu0 0.0
        %v427 = vand.u32 %v209, 4294901760
        %v428 = vsub.f32 %v209, %v427
        %429 = vmatpush1.msra.mxu0 %v428
        %430 = vmatprep.subr.mxu0 0.0
        %431 = vmatpush2.msra.mxu0 0.0
        %432 = vmatprep.subr.mxu0 0.0
        %433 = vmatpush2.msra.mxu0 0.0
        %434 = vmatprep.subr.mxu0 0.0
        %435 = vmatpush2.msra.mxu0 0.0
        %436 = vmatprep.subr.mxu0 0.0
        %437 = vmatpush2.msra.mxu0 0.0
        %438 = vmatprep.subr.mxu0 0.0
        %439 = vmatpush2.msra.mxu0 0.0
        %440 = vmatprep.subr.mxu0 0.0
        %441 = vmatpush2.msra.mxu0 0.0
        %442 = vmatprep.subr.mxu0 0.0
        %443 = vmatpush2.msra.mxu0 0.0
        %444 = vmatprep.subr.mxu0 0.0
        %445 = vmatpush2.msra.mxu0 0.0
        %446 = vmatprep.subr.mxu0 0.0
        %447 = vmatpush2.msra.mxu0 0.0
        %448 = vmatprep.subr.mxu0 0.0
        %449 = vmatpush2.msra.mxu0 0.0
        %450 = vmatprep.subr.mxu0 0.0
        %451 = vmatpush2.msra.mxu0 0.0
        %452 = vmatprep.subr.mxu0 0.0
        %453 = vmatpush2.msra.mxu0 0.0
        %454 = vmatprep.subr.mxu0 0.0
        %455 = vmatpush2.msra.mxu0 0.0
        %456 = vmatprep.subr.mxu0 0.0
        %457 = vmatpush2.msra.mxu0 0.0
        %458 = vmatprep.subr.mxu0 0.0
        %459 = vmatpush2.msra.mxu0 0.0
        %460 = vmatprep.subr.mxu0 0.0
        %461 = vmatpush2.msra.mxu0 0.0
        %462 = vmatprep.mubr.f32.mxu0 0.0
        %v463 = vand.u32 %v215, 4294901760
        %v464 = vsub.f32 %v215, %v463
        %465 = vmatmul.mubr.f32.gmra.mxu0 %v464
        %v466 = vpop.f32.mrf.mxu0
        %v467 = vadd.f32 %v385, %v466
        %v468 = vpop.f32.mrf.mxu0
        %469 = vmatprep.mubr.f32.mxu0 0.0
        %v470 = vand.u32 %v218, 4294901760
        %v471 = vsub.f32 %v218, %v470
        %472 = vmatmul.mubr.f32.gmra.mxu0 %v471
        %v473 = vpop.f32.mrf.mxu0
        %v474 = vadd.f32 %v391, %v473
        %v475 = vpop.f32.mrf.mxu0
        %476 = vdwg.mxu0
        %477 = vmatprep.subr.mxu0 0.0
        %478 = vmatpush1.msra.mxu0 0.0
        %479 = vmatprep.subr.mxu0 0.0
        %480 = vmatpush1.msra.mxu0 0.0
        %481 = vmatprep.subr.mxu0 0.0
        %482 = vmatpush1.msra.mxu0 0.0
        %483 = vmatprep.subr.mxu0 0.0
        %484 = vmatpush1.msra.mxu0 0.0
        %485 = vmatprep.subr.mxu0 0.0
        %486 = vmatpush1.msra.mxu0 0.0
        %487 = vmatprep.subr.mxu0 0.0
        %488 = vmatpush1.msra.mxu0 0.0
        %489 = vmatprep.subr.mxu0 0.0
        %490 = vmatpush1.msra.mxu0 0.0
        %491 = vmatprep.subr.mxu0 0.0
        %492 = vmatpush1.msra.mxu0 0.0
        %493 = vmatprep.subr.mxu0 0.0
        %494 = vmatpush1.msra.mxu0 0.0
        %495 = vmatprep.subr.mxu0 0.0
        %496 = vmatpush1.msra.mxu0 0.0
        %497 = vmatprep.subr.mxu0 0.0
        %498 = vmatpush1.msra.mxu0 0.0
        %499 = vmatprep.subr.mxu0 0.0
        %500 = vmatpush1.msra.mxu0 0.0
        %501 = vmatprep.subr.mxu0 0.0
        %502 = vmatpush1.msra.mxu0 0.0
        %503 = vmatprep.subr.mxu0 0.0
        %504 = vmatpush1.msra.mxu0 0.0
        %505 = vmatprep.subr.mxu0 0.0
        %v506 = vand.u32 %v210, 4294901760
        %507 = vmatpush1.msra.mxu0 %v506
        %508 = vmatprep.subr.mxu0 0.0
        %v509 = vand.u32 %v209, 4294901760
        %510 = vmatpush1.msra.mxu0 %v509
        %511 = vmatprep.subr.mxu0 0.0
        %512 = vmatpush2.msra.mxu0 0.0
        %513 = vmatprep.subr.mxu0 0.0
        %514 = vmatpush2.msra.mxu0 0.0
        %515 = vmatprep.subr.mxu0 0.0
        %516 = vmatpush2.msra.mxu0 0.0
        %517 = vmatprep.subr.mxu0 0.0
        %518 = vmatpush2.msra.mxu0 0.0
        %519 = vmatprep.subr.mxu0 0.0
        %520 = vmatpush2.msra.mxu0 0.0
        %521 = vmatprep.subr.mxu0 0.0
        %522 = vmatpush2.msra.mxu0 0.0
        %523 = vmatprep.subr.mxu0 0.0
        %524 = vmatpush2.msra.mxu0 0.0
        %525 = vmatprep.subr.mxu0 0.0
        %526 = vmatpush2.msra.mxu0 0.0
        %527 = vmatprep.subr.mxu0 0.0
        %528 = vmatpush2.msra.mxu0 0.0
        %529 = vmatprep.subr.mxu0 0.0
        %530 = vmatpush2.msra.mxu0 0.0
        %531 = vmatprep.subr.mxu0 0.0
        %532 = vmatpush2.msra.mxu0 0.0
        %533 = vmatprep.subr.mxu0 0.0
        %534 = vmatpush2.msra.mxu0 0.0
        %535 = vmatprep.subr.mxu0 0.0
        %536 = vmatpush2.msra.mxu0 0.0
        %537 = vmatprep.subr.mxu0 0.0
        %538 = vmatpush2.msra.mxu0 0.0
        %539 = vmatprep.subr.mxu0 0.0
        %540 = vmatpush2.msra.mxu0 0.0
        %541 = vmatprep.subr.mxu0 0.0
        %542 = vmatpush2.msra.mxu0 0.0
        %543 = vmatprep.mubr.f32.mxu0 0.0
        %v544 = vand.u32 %v215, 4294901760
        %v545 = vsub.f32 %v215, %v544
        %v546 = vand.u32 %v545, 4294901760
        %547 = vmatmul.mubr.f32.gmra.mxu0 %v546
        %v548 = vpop.f32.mrf.mxu0
        %v549 = vadd.f32 %v467, %v548
        %v550 = vpop.f32.mrf.mxu0
        %551 = vmatprep.mubr.f32.mxu0 0.0
        %v552 = vand.u32 %v218, 4294901760
        %v553 = vsub.f32 %v218, %v552
        %v554 = vand.u32 %v553, 4294901760
        %555 = vmatmul.mubr.f32.gmra.mxu0 %v554
        %v556 = vpop.f32.mrf.mxu0
        %v557 = vadd.f32 %v474, %v556
        %v558 = vpop.f32.mrf.mxu0
        %559 = vdwg.mxu0
        %560 = vmatprep.subr.mxu0 0.0
        %561 = vmatpush1.msra.mxu0 0.0
        %562 = vmatprep.subr.mxu0 0.0
        %563 = vmatpush1.msra.mxu0 0.0
        %564 = vmatprep.subr.mxu0 0.0
        %565 = vmatpush1.msra.mxu0 0.0
        %566 = vmatprep.subr.mxu0 0.0
        %567 = vmatpush1.msra.mxu0 0.0
        %568 = vmatprep.subr.mxu0 0.0
        %569 = vmatpush1.msra.mxu0 0.0
        %570 = vmatprep.subr.mxu0 0.0
        %571 = vmatpush1.msra.mxu0 0.0
        %572 = vmatprep.subr.mxu0 0.0
        %573 = vmatpush1.msra.mxu0 0.0
        %574 = vmatprep.subr.mxu0 0.0
        %575 = vmatpush1.msra.mxu0 0.0
        %576 = vmatprep.subr.mxu0 0.0
        %577 = vmatpush1.msra.mxu0 0.0
        %578 = vmatprep.subr.mxu0 0.0
        %579 = vmatpush1.msra.mxu0 0.0
        %580 = vmatprep.subr.mxu0 0.0
        %581 = vmatpush1.msra.mxu0 0.0
        %582 = vmatprep.subr.mxu0 0.0
        %583 = vmatpush1.msra.mxu0 0.0
        %584 = vmatprep.subr.mxu0 0.0
        %585 = vmatpush1.msra.mxu0 0.0
        %586 = vmatprep.subr.mxu0 0.0
        %587 = vmatpush1.msra.mxu0 0.0
        %588 = vmatprep.subr.mxu0 0.0
        %v589 = vand.u32 %v210, 4294901760
        %v590 = vsub.f32 %v210, %v589
        %v591 = vand.u32 %v590, 4294901760
        %592 = vmatpush1.msra.mxu0 %v591
        %593 = vmatprep.subr.mxu0 0.0
        %v594 = vand.u32 %v209, 4294901760
        %v595 = vsub.f32 %v209, %v594
        %v596 = vand.u32 %v595, 4294901760
        %597 = vmatpush1.msra.mxu0 %v596
        %598 = vmatprep.subr.mxu0 0.0
        %599 = vmatpush2.msra.mxu0 0.0
        %600 = vmatprep.subr.mxu0 0.0
        %601 = vmatpush2.msra.mxu0 0.0
        %602 = vmatprep.subr.mxu0 0.0
        %603 = vmatpush2.msra.mxu0 0.0
        %604 = vmatprep.subr.mxu0 0.0
        %605 = vmatpush2.msra.mxu0 0.0
        %606 = vmatprep.subr.mxu0 0.0
        %607 = vmatpush2.msra.mxu0 0.0
        %608 = vmatprep.subr.mxu0 0.0
        %609 = vmatpush2.msra.mxu0 0.0
        %610 = vmatprep.subr.mxu0 0.0
        %611 = vmatpush2.msra.mxu0 0.0
        %612 = vmatprep.subr.mxu0 0.0
        %613 = vmatpush2.msra.mxu0 0.0
        %614 = vmatprep.subr.mxu0 0.0
        %615 = vmatpush2.msra.mxu0 0.0
        %616 = vmatprep.subr.mxu0 0.0
        %617 = vmatpush2.msra.mxu0 0.0
        %618 = vmatprep.subr.mxu0 0.0
        %619 = vmatpush2.msra.mxu0 0.0
        %620 = vmatprep.subr.mxu0 0.0
        %621 = vmatpush2.msra.mxu0 0.0
        %622 = vmatprep.subr.mxu0 0.0
        %623 = vmatpush2.msra.mxu0 0.0
        %624 = vmatprep.subr.mxu0 0.0
        %625 = vmatpush2.msra.mxu0 0.0
        %626 = vmatprep.subr.mxu0 0.0
        %627 = vmatpush2.msra.mxu0 0.0
        %628 = vmatprep.subr.mxu0 0.0
        %629 = vmatpush2.msra.mxu0 0.0
        %630 = vmatprep.mubr.f32.mxu0 0.0
        %v631 = vand.u32 %v215, 4294901760
        %632 = vmatmul.mubr.f32.gmra.mxu0 %v631
        %v633 = vpop.f32.mrf.mxu0
        %v634 = vadd.f32 %v549, %v633
        %v635 = vpop.f32.mrf.mxu0
        %636 = vmatprep.mubr.f32.mxu0 0.0
        %v637 = vand.u32 %v218, 4294901760
        %638 = vmatmul.mubr.f32.gmra.mxu0 %v637
        %v639 = vpop.f32.mrf.mxu0
        %v640 = vadd.f32 %v557, %v639
        %v641 = vpop.f32.mrf.mxu0
        %642 = vdwg.mxu0
        %643 = vmatprep.subr.mxu0 0.0
        %644 = vmatpush1.msra.mxu0 0.0
        %645 = vmatprep.subr.mxu0 0.0
        %646 = vmatpush1.msra.mxu0 0.0
        %647 = vmatprep.subr.mxu0 0.0
        %648 = vmatpush1.msra.mxu0 0.0
        %649 = vmatprep.subr.mxu0 0.0
        %650 = vmatpush1.msra.mxu0 0.0
        %651 = vmatprep.subr.mxu0 0.0
        %652 = vmatpush1.msra.mxu0 0.0
        %653 = vmatprep.subr.mxu0 0.0
        %654 = vmatpush1.msra.mxu0 0.0
        %655 = vmatprep.subr.mxu0 0.0
        %656 = vmatpush1.msra.mxu0 0.0
        %657 = vmatprep.subr.mxu0 0.0
        %658 = vmatpush1.msra.mxu0 0.0
        %659 = vmatprep.subr.mxu0 0.0
        %660 = vmatpush1.msra.mxu0 0.0
        %661 = vmatprep.subr.mxu0 0.0
        %662 = vmatpush1.msra.mxu0 0.0
        %663 = vmatprep.subr.mxu0 0.0
        %664 = vmatpush1.msra.mxu0 0.0
        %665 = vmatprep.subr.mxu0 0.0
        %666 = vmatpush1.msra.mxu0 0.0
        %667 = vmatprep.subr.mxu0 0.0
        %668 = vmatpush1.msra.mxu0 0.0
        %669 = vmatprep.subr.mxu0 0.0
        %670 = vmatpush1.msra.mxu0 0.0
        %671 = vmatprep.subr.mxu0 0.0
        %v672 = vand.u32 %v210, 4294901760
        %673 = vmatpush1.msra.mxu0 %v672
        %674 = vmatprep.subr.mxu0 0.0
        %v675 = vand.u32 %v209, 4294901760
        %676 = vmatpush1.msra.mxu0 %v675
        %677 = vmatprep.subr.mxu0 0.0
        %678 = vmatpush2.msra.mxu0 0.0
        %679 = vmatprep.subr.mxu0 0.0
        %680 = vmatpush2.msra.mxu0 0.0
        %681 = vmatprep.subr.mxu0 0.0
        %682 = vmatpush2.msra.mxu0 0.0
        %683 = vmatprep.subr.mxu0 0.0
        %684 = vmatpush2.msra.mxu0 0.0
        %685 = vmatprep.subr.mxu0 0.0
        %686 = vmatpush2.msra.mxu0 0.0
        %687 = vmatprep.subr.mxu0 0.0
        %688 = vmatpush2.msra.mxu0 0.0
        %689 = vmatprep.subr.mxu0 0.0
        %690 = vmatpush2.msra.mxu0 0.0
        %691 = vmatprep.subr.mxu0 0.0
        %692 = vmatpush2.msra.mxu0 0.0
        %693 = vmatprep.subr.mxu0 0.0
        %694 = vmatpush2.msra.mxu0 0.0
        %695 = vmatprep.subr.mxu0 0.0
        %696 = vmatpush2.msra.mxu0 0.0
        %697 = vmatprep.subr.mxu0 0.0
        %698 = vmatpush2.msra.mxu0 0.0
        %699 = vmatprep.subr.mxu0 0.0
        %700 = vmatpush2.msra.mxu0 0.0
        %701 = vmatprep.subr.mxu0 0.0
        %702 = vmatpush2.msra.mxu0 0.0
        %703 = vmatprep.subr.mxu0 0.0
        %704 = vmatpush2.msra.mxu0 0.0
        %705 = vmatprep.subr.mxu0 0.0
        %706 = vmatpush2.msra.mxu0 0.0
        %707 = vmatprep.subr.mxu0 0.0
        %708 = vmatpush2.msra.mxu0 0.0
        %709 = vmatprep.mubr.f32.mxu0 0.0
        %v710 = vand.u32 %v215, 4294901760
        %711 = vmatmul.mubr.f32.gmra.mxu0 %v710
        %v712 = vpop.f32.mrf.mxu0
        %v713 = vadd.f32 %v634, %v712
        %v714 = vpop.f32.mrf.mxu0
        %715 = vmatprep.mubr.f32.mxu0 0.0
        %v716 = vand.u32 %v218, 4294901760
        %717 = vmatmul.mubr.f32.gmra.mxu0 %v716
        %v718 = vpop.f32.mrf.mxu0
        %v719 = vadd.f32 %v640, %v718
        %v720 = vpop.f32.mrf.mxu0
        %721 = vdwg.mxu0
        %v723 = vsel %vm213, %v206, 0
        %v726 = vsel %vm213, %v207, 0
        %v729 = vsel %vm213, %v208, 0
        %731 = vmatprep.subr.mxu0 0.0
        %732 = vmatpush1.msra.mxu0 0.0
        %733 = vmatprep.subr.mxu0 0.0
        %734 = vmatpush1.msra.mxu0 0.0
        %735 = vmatprep.subr.mxu0 0.0
        %736 = vmatpush1.msra.mxu0 0.0
        %737 = vmatprep.subr.mxu0 0.0
        %738 = vmatpush1.msra.mxu0 0.0
        %739 = vmatprep.subr.mxu0 0.0
        %740 = vmatpush1.msra.mxu0 0.0
        %741 = vmatprep.subr.mxu0 0.0
        %742 = vmatpush1.msra.mxu0 0.0
        %743 = vmatprep.subr.mxu0 0.0
        %744 = vmatpush1.msra.mxu0 0.0
        %745 = vmatprep.subr.mxu0 0.0
        %746 = vmatpush1.msra.mxu0 0.0
        %747 = vmatprep.subr.mxu0 0.0
        %748 = vmatpush1.msra.mxu0 0.0
        %749 = vmatprep.subr.mxu0 0.0
        %750 = vmatpush1.msra.mxu0 0.0
        %751 = vmatprep.subr.mxu0 0.0
        %752 = vmatpush1.msra.mxu0 0.0
        %753 = vmatprep.subr.mxu0 0.0
        %754 = vmatpush1.msra.mxu0 0.0
        %755 = vmatprep.subr.mxu0 0.0
        %756 = vmatpush1.msra.mxu0 0.0
        %757 = vmatprep.subr.mxu0 0.0
        %758 = vmatpush1.msra.mxu0 0.0
        %759 = vmatprep.subr.mxu0 0.0
        %v760 = vand.u32 %v719, 4294901760
        %761 = vmatpush1.msra.mxu0 %v760
        %762 = vmatprep.subr.mxu0 0.0
        %v763 = vand.u32 %v713, 4294901760
        %764 = vmatpush1.msra.mxu0 %v763
        %765 = vmatprep.subr.mxu0 0.0
        %766 = vmatpush2.msra.mxu0 0.0
        %767 = vmatprep.subr.mxu0 0.0
        %768 = vmatpush2.msra.mxu0 0.0
        %769 = vmatprep.subr.mxu0 0.0
        %770 = vmatpush2.msra.mxu0 0.0
        %771 = vmatprep.subr.mxu0 0.0
        %772 = vmatpush2.msra.mxu0 0.0
        %773 = vmatprep.subr.mxu0 0.0
        %774 = vmatpush2.msra.mxu0 0.0
        %775 = vmatprep.subr.mxu0 0.0
        %776 = vmatpush2.msra.mxu0 0.0
        %777 = vmatprep.subr.mxu0 0.0
        %778 = vmatpush2.msra.mxu0 0.0
        %779 = vmatprep.subr.mxu0 0.0
        %780 = vmatpush2.msra.mxu0 0.0
        %781 = vmatprep.subr.mxu0 0.0
        %782 = vmatpush2.msra.mxu0 0.0
        %783 = vmatprep.subr.mxu0 0.0
        %784 = vmatpush2.msra.mxu0 0.0
        %785 = vmatprep.subr.mxu0 0.0
        %786 = vmatpush2.msra.mxu0 0.0
        %787 = vmatprep.subr.mxu0 0.0
        %788 = vmatpush2.msra.mxu0 0.0
        %789 = vmatprep.subr.mxu0 0.0
        %790 = vmatpush2.msra.mxu0 0.0
        %791 = vmatprep.subr.mxu0 0.0
        %792 = vmatpush2.msra.mxu0 0.0
        %793 = vmatprep.subr.mxu0 0.0
        %794 = vmatpush2.msra.mxu0 0.0
        %795 = vmatprep.subr.mxu0 0.0
        %796 = vmatpush2.msra.mxu0 0.0
        %797 = vmatprep.mubr.f32.mxu0 0.0
        %v798 = vand.u32 %v723, 4294901760
        %v799 = vsub.f32 %v723, %v798
        %v800 = vand.u32 %v799, 4294901760
        %v801 = vsub.f32 %v799, %v800
        %v802 = vand.u32 %v801, 4294901760
        %803 = vmatmul.mubr.f32.gmra.mxu0 %v802
        %v804 = vpop.f32.mrf.mxu0
        %v805 = vadd.f32 0.0, %v804
        %v806 = vpop.f32.mrf.mxu0
        %807 = vmatprep.mubr.f32.mxu0 0.0
        %v808 = vand.u32 %v726, 4294901760
        %v809 = vsub.f32 %v726, %v808
        %v810 = vand.u32 %v809, 4294901760
        %v811 = vsub.f32 %v809, %v810
        %v812 = vand.u32 %v811, 4294901760
        %813 = vmatmul.mubr.f32.gmra.mxu0 %v812
        %v814 = vpop.f32.mrf.mxu0
        %v815 = vadd.f32 0.0, %v814
        %v816 = vpop.f32.mrf.mxu0
        %817 = vmatprep.mubr.f32.mxu0 0.0
        %v818 = vand.u32 %v729, 4294901760
        %v819 = vsub.f32 %v729, %v818
        %v820 = vand.u32 %v819, 4294901760
        %v821 = vsub.f32 %v819, %v820
        %v822 = vand.u32 %v821, 4294901760
        %823 = vmatmul.mubr.f32.gmra.mxu0 %v822
        %v824 = vpop.f32.mrf.mxu0
        %v825 = vadd.f32 0.0, %v824
        %v826 = vpop.f32.mrf.mxu0
        %827 = vdwg.mxu0
        %828 = vmatprep.subr.mxu0 0.0
        %829 = vmatpush1.msra.mxu0 0.0
        %830 = vmatprep.subr.mxu0 0.0
        %831 = vmatpush1.msra.mxu0 0.0
        %832 = vmatprep.subr.mxu0 0.0
        %833 = vmatpush1.msra.mxu0 0.0
        %834 = vmatprep.subr.mxu0 0.0
        %835 = vmatpush1.msra.mxu0 0.0
        %836 = vmatprep.subr.mxu0 0.0
        %837 = vmatpush1.msra.mxu0 0.0
        %838 = vmatprep.subr.mxu0 0.0
        %839 = vmatpush1.msra.mxu0 0.0
        %840 = vmatprep.subr.mxu0 0.0
        %841 = vmatpush1.msra.mxu0 0.0
        %842 = vmatprep.subr.mxu0 0.0
        %843 = vmatpush1.msra.mxu0 0.0
        %844 = vmatprep.subr.mxu0 0.0
        %845 = vmatpush1.msra.mxu0 0.0
        %846 = vmatprep.subr.mxu0 0.0
        %847 = vmatpush1.msra.mxu0 0.0
        %848 = vmatprep.subr.mxu0 0.0
        %849 = vmatpush1.msra.mxu0 0.0
        %850 = vmatprep.subr.mxu0 0.0
        %851 = vmatpush1.msra.mxu0 0.0
        %852 = vmatprep.subr.mxu0 0.0
        %853 = vmatpush1.msra.mxu0 0.0
        %854 = vmatprep.subr.mxu0 0.0
        %855 = vmatpush1.msra.mxu0 0.0
        %856 = vmatprep.subr.mxu0 0.0
        %v857 = vand.u32 %v719, 4294901760
        %v858 = vsub.f32 %v719, %v857
        %v859 = vand.u32 %v858, 4294901760
        %v860 = vsub.f32 %v858, %v859
        %v861 = vand.u32 %v860, 4294901760
        %862 = vmatpush1.msra.mxu0 %v861
        %863 = vmatprep.subr.mxu0 0.0
        %v864 = vand.u32 %v713, 4294901760
        %v865 = vsub.f32 %v713, %v864
        %v866 = vand.u32 %v865, 4294901760
        %v867 = vsub.f32 %v865, %v866
        %v868 = vand.u32 %v867, 4294901760
        %869 = vmatpush1.msra.mxu0 %v868
        %870 = vmatprep.subr.mxu0 0.0
        %871 = vmatpush2.msra.mxu0 0.0
        %872 = vmatprep.subr.mxu0 0.0
        %873 = vmatpush2.msra.mxu0 0.0
        %874 = vmatprep.subr.mxu0 0.0
        %875 = vmatpush2.msra.mxu0 0.0
        %876 = vmatprep.subr.mxu0 0.0
        %877 = vmatpush2.msra.mxu0 0.0
        %878 = vmatprep.subr.mxu0 0.0
        %879 = vmatpush2.msra.mxu0 0.0
        %880 = vmatprep.subr.mxu0 0.0
        %881 = vmatpush2.msra.mxu0 0.0
        %882 = vmatprep.subr.mxu0 0.0
        %883 = vmatpush2.msra.mxu0 0.0
        %884 = vmatprep.subr.mxu0 0.0
        %885 = vmatpush2.msra.mxu0 0.0
        %886 = vmatprep.subr.mxu0 0.0
        %887 = vmatpush2.msra.mxu0 0.0
        %888 = vmatprep.subr.mxu0 0.0
        %889 = vmatpush2.msra.mxu0 0.0
        %890 = vmatprep.subr.mxu0 0.0
        %891 = vmatpush2.msra.mxu0 0.0
        %892 = vmatprep.subr.mxu0 0.0
        %893 = vmatpush2.msra.mxu0 0.0
        %894 = vmatprep.subr.mxu0 0.0
        %895 = vmatpush2.msra.mxu0 0.0
        %896 = vmatprep.subr.mxu0 0.0
        %897 = vmatpush2.msra.mxu0 0.0
        %898 = vmatprep.subr.mxu0 0.0
        %899 = vmatpush2.msra.mxu0 0.0
        %900 = vmatprep.subr.mxu0 0.0
        %901 = vmatpush2.msra.mxu0 0.0
        %902 = vmatprep.mubr.f32.mxu0 0.0
        %v903 = vand.u32 %v723, 4294901760
        %904 = vmatmul.mubr.f32.gmra.mxu0 %v903
        %v905 = vpop.f32.mrf.mxu0
        %v906 = vadd.f32 %v805, %v905
        %v907 = vpop.f32.mrf.mxu0
        %908 = vmatprep.mubr.f32.mxu0 0.0
        %v909 = vand.u32 %v726, 4294901760
        %910 = vmatmul.mubr.f32.gmra.mxu0 %v909
        %v911 = vpop.f32.mrf.mxu0
        %v912 = vadd.f32 %v815, %v911
        %v913 = vpop.f32.mrf.mxu0
        %914 = vmatprep.mubr.f32.mxu0 0.0
        %v915 = vand.u32 %v729, 4294901760
        %916 = vmatmul.mubr.f32.gmra.mxu0 %v915
        %v917 = vpop.f32.mrf.mxu0
        %v918 = vadd.f32 %v825, %v917
        %v919 = vpop.f32.mrf.mxu0
        %920 = vdwg.mxu0
        %921 = vmatprep.subr.mxu0 0.0
        %922 = vmatpush1.msra.mxu0 0.0
        %923 = vmatprep.subr.mxu0 0.0
        %924 = vmatpush1.msra.mxu0 0.0
        %925 = vmatprep.subr.mxu0 0.0
        %926 = vmatpush1.msra.mxu0 0.0
        %927 = vmatprep.subr.mxu0 0.0
        %928 = vmatpush1.msra.mxu0 0.0
        %929 = vmatprep.subr.mxu0 0.0
        %930 = vmatpush1.msra.mxu0 0.0
        %931 = vmatprep.subr.mxu0 0.0
        %932 = vmatpush1.msra.mxu0 0.0
        %933 = vmatprep.subr.mxu0 0.0
        %934 = vmatpush1.msra.mxu0 0.0
        %935 = vmatprep.subr.mxu0 0.0
        %936 = vmatpush1.msra.mxu0 0.0
        %937 = vmatprep.subr.mxu0 0.0
        %938 = vmatpush1.msra.mxu0 0.0
        %939 = vmatprep.subr.mxu0 0.0
        %940 = vmatpush1.msra.mxu0 0.0
        %941 = vmatprep.subr.mxu0 0.0
        %942 = vmatpush1.msra.mxu0 0.0
        %943 = vmatprep.subr.mxu0 0.0
        %944 = vmatpush1.msra.mxu0 0.0
        %945 = vmatprep.subr.mxu0 0.0
        %946 = vmatpush1.msra.mxu0 0.0
        %947 = vmatprep.subr.mxu0 0.0
        %948 = vmatpush1.msra.mxu0 0.0
        %949 = vmatprep.subr.mxu0 0.0
        %v950 = vand.u32 %v719, 4294901760
        %v951 = vsub.f32 %v719, %v950
        %952 = vmatpush1.msra.mxu0 %v951
        %953 = vmatprep.subr.mxu0 0.0
        %v954 = vand.u32 %v713, 4294901760
        %v955 = vsub.f32 %v713, %v954
        %956 = vmatpush1.msra.mxu0 %v955
        %957 = vmatprep.subr.mxu0 0.0
        %958 = vmatpush2.msra.mxu0 0.0
        %959 = vmatprep.subr.mxu0 0.0
        %960 = vmatpush2.msra.mxu0 0.0
        %961 = vmatprep.subr.mxu0 0.0
        %962 = vmatpush2.msra.mxu0 0.0
        %963 = vmatprep.subr.mxu0 0.0
        %964 = vmatpush2.msra.mxu0 0.0
        %965 = vmatprep.subr.mxu0 0.0
        %966 = vmatpush2.msra.mxu0 0.0
        %967 = vmatprep.subr.mxu0 0.0
        %968 = vmatpush2.msra.mxu0 0.0
        %969 = vmatprep.subr.mxu0 0.0
        %970 = vmatpush2.msra.mxu0 0.0
        %971 = vmatprep.subr.mxu0 0.0
        %972 = vmatpush2.msra.mxu0 0.0
        %973 = vmatprep.subr.mxu0 0.0
        %974 = vmatpush2.msra.mxu0 0.0
        %975 = vmatprep.subr.mxu0 0.0
        %976 = vmatpush2.msra.mxu0 0.0
        %977 = vmatprep.subr.mxu0 0.0
        %978 = vmatpush2.msra.mxu0 0.0
        %979 = vmatprep.subr.mxu0 0.0
        %980 = vmatpush2.msra.mxu0 0.0
        %981 = vmatprep.subr.mxu0 0.0
        %982 = vmatpush2.msra.mxu0 0.0
        %983 = vmatprep.subr.mxu0 0.0
        %984 = vmatpush2.msra.mxu0 0.0
        %985 = vmatprep.subr.mxu0 0.0
        %986 = vmatpush2.msra.mxu0 0.0
        %987 = vmatprep.subr.mxu0 0.0
        %988 = vmatpush2.msra.mxu0 0.0
        %989 = vmatprep.mubr.f32.mxu0 0.0
        %v990 = vand.u32 %v723, 4294901760
        %v991 = vsub.f32 %v723, %v990
        %992 = vmatmul.mubr.f32.gmra.mxu0 %v991
        %v993 = vpop.f32.mrf.mxu0
        %v994 = vadd.f32 %v906, %v993
        %v995 = vpop.f32.mrf.mxu0
        %996 = vmatprep.mubr.f32.mxu0 0.0
        %v997 = vand.u32 %v726, 4294901760
        %v998 = vsub.f32 %v726, %v997
        %999 = vmatmul.mubr.f32.gmra.mxu0 %v998
        %v1000 = vpop.f32.mrf.mxu0
        %v1001 = vadd.f32 %v912, %v1000
        %v1002 = vpop.f32.mrf.mxu0
        %1003 = vmatprep.mubr.f32.mxu0 0.0
        %v1004 = vand.u32 %v729, 4294901760
        %v1005 = vsub.f32 %v729, %v1004
        %1006 = vmatmul.mubr.f32.gmra.mxu0 %v1005
        %v1007 = vpop.f32.mrf.mxu0
        %v1008 = vadd.f32 %v918, %v1007
        %v1009 = vpop.f32.mrf.mxu0
        %1010 = vdwg.mxu0
        %1011 = vmatprep.subr.mxu0 0.0
        %1012 = vmatpush1.msra.mxu0 0.0
        %1013 = vmatprep.subr.mxu0 0.0
        %1014 = vmatpush1.msra.mxu0 0.0
        %1015 = vmatprep.subr.mxu0 0.0
        %1016 = vmatpush1.msra.mxu0 0.0
        %1017 = vmatprep.subr.mxu0 0.0
        %1018 = vmatpush1.msra.mxu0 0.0
        %1019 = vmatprep.subr.mxu0 0.0
        %1020 = vmatpush1.msra.mxu0 0.0
        %1021 = vmatprep.subr.mxu0 0.0
        %1022 = vmatpush1.msra.mxu0 0.0
        %1023 = vmatprep.subr.mxu0 0.0
        %1024 = vmatpush1.msra.mxu0 0.0
        %1025 = vmatprep.subr.mxu0 0.0
        %1026 = vmatpush1.msra.mxu0 0.0
        %1027 = vmatprep.subr.mxu0 0.0
        %1028 = vmatpush1.msra.mxu0 0.0
        %1029 = vmatprep.subr.mxu0 0.0
        %1030 = vmatpush1.msra.mxu0 0.0
        %1031 = vmatprep.subr.mxu0 0.0
        %1032 = vmatpush1.msra.mxu0 0.0
        %1033 = vmatprep.subr.mxu0 0.0
        %1034 = vmatpush1.msra.mxu0 0.0
        %1035 = vmatprep.subr.mxu0 0.0
        %1036 = vmatpush1.msra.mxu0 0.0
        %1037 = vmatprep.subr.mxu0 0.0
        %1038 = vmatpush1.msra.mxu0 0.0
        %1039 = vmatprep.subr.mxu0 0.0
        %v1040 = vand.u32 %v719, 4294901760
        %1041 = vmatpush1.msra.mxu0 %v1040
        %1042 = vmatprep.subr.mxu0 0.0
        %v1043 = vand.u32 %v713, 4294901760
        %1044 = vmatpush1.msra.mxu0 %v1043
        %1045 = vmatprep.subr.mxu0 0.0
        %1046 = vmatpush2.msra.mxu0 0.0
        %1047 = vmatprep.subr.mxu0 0.0
        %1048 = vmatpush2.msra.mxu0 0.0
        %1049 = vmatprep.subr.mxu0 0.0
        %1050 = vmatpush2.msra.mxu0 0.0
        %1051 = vmatprep.subr.mxu0 0.0
        %1052 = vmatpush2.msra.mxu0 0.0
        %1053 = vmatprep.subr.mxu0 0.0
        %1054 = vmatpush2.msra.mxu0 0.0
        %1055 = vmatprep.subr.mxu0 0.0
        %1056 = vmatpush2.msra.mxu0 0.0
        %1057 = vmatprep.subr.mxu0 0.0
        %1058 = vmatpush2.msra.mxu0 0.0
        %1059 = vmatprep.subr.mxu0 0.0
        %1060 = vmatpush2.msra.mxu0 0.0
        %1061 = vmatprep.subr.mxu0 0.0
        %1062 = vmatpush2.msra.mxu0 0.0
        %1063 = vmatprep.subr.mxu0 0.0
        %1064 = vmatpush2.msra.mxu0 0.0
        %1065 = vmatprep.subr.mxu0 0.0
        %1066 = vmatpush2.msra.mxu0 0.0
        %1067 = vmatprep.subr.mxu0 0.0
        %1068 = vmatpush2.msra.mxu0 0.0
        %1069 = vmatprep.subr.mxu0 0.0
        %1070 = vmatpush2.msra.mxu0 0.0
        %1071 = vmatprep.subr.mxu0 0.0
        %1072 = vmatpush2.msra.mxu0 0.0
        %1073 = vmatprep.subr.mxu0 0.0
        %1074 = vmatpush2.msra.mxu0 0.0
        %1075 = vmatprep.subr.mxu0 0.0
        %1076 = vmatpush2.msra.mxu0 0.0
        %1077 = vmatprep.mubr.f32.mxu0 0.0
        %v1078 = vand.u32 %v723, 4294901760
        %v1079 = vsub.f32 %v723, %v1078
        %v1080 = vand.u32 %v1079, 4294901760
        %1081 = vmatmul.mubr.f32.gmra.mxu0 %v1080
        %v1082 = vpop.f32.mrf.mxu0
        %v1083 = vadd.f32 %v994, %v1082
        %v1084 = vpop.f32.mrf.mxu0
        %1085 = vmatprep.mubr.f32.mxu0 0.0
        %v1086 = vand.u32 %v726, 4294901760
        %v1087 = vsub.f32 %v726, %v1086
        %v1088 = vand.u32 %v1087, 4294901760
        %1089 = vmatmul.mubr.f32.gmra.mxu0 %v1088
        %v1090 = vpop.f32.mrf.mxu0
        %v1091 = vadd.f32 %v1001, %v1090
        %v1092 = vpop.f32.mrf.mxu0
        %1093 = vmatprep.mubr.f32.mxu0 0.0
        %v1094 = vand.u32 %v729, 4294901760
        %v1095 = vsub.f32 %v729, %v1094
        %v1096 = vand.u32 %v1095, 4294901760
        %1097 = vmatmul.mubr.f32.gmra.mxu0 %v1096
        %v1098 = vpop.f32.mrf.mxu0
        %v1099 = vadd.f32 %v1008, %v1098
        %v1100 = vpop.f32.mrf.mxu0
        %1101 = vdwg.mxu0
        %1102 = vmatprep.subr.mxu0 0.0
        %1103 = vmatpush1.msra.mxu0 0.0
        %1104 = vmatprep.subr.mxu0 0.0
        %1105 = vmatpush1.msra.mxu0 0.0
        %1106 = vmatprep.subr.mxu0 0.0
        %1107 = vmatpush1.msra.mxu0 0.0
        %1108 = vmatprep.subr.mxu0 0.0
        %1109 = vmatpush1.msra.mxu0 0.0
        %1110 = vmatprep.subr.mxu0 0.0
        %1111 = vmatpush1.msra.mxu0 0.0
        %1112 = vmatprep.subr.mxu0 0.0
        %1113 = vmatpush1.msra.mxu0 0.0
        %1114 = vmatprep.subr.mxu0 0.0
        %1115 = vmatpush1.msra.mxu0 0.0
        %1116 = vmatprep.subr.mxu0 0.0
        %1117 = vmatpush1.msra.mxu0 0.0
        %1118 = vmatprep.subr.mxu0 0.0
        %1119 = vmatpush1.msra.mxu0 0.0
        %1120 = vmatprep.subr.mxu0 0.0
        %1121 = vmatpush1.msra.mxu0 0.0
        %1122 = vmatprep.subr.mxu0 0.0
        %1123 = vmatpush1.msra.mxu0 0.0
        %1124 = vmatprep.subr.mxu0 0.0
        %1125 = vmatpush1.msra.mxu0 0.0
        %1126 = vmatprep.subr.mxu0 0.0
        %1127 = vmatpush1.msra.mxu0 0.0
        %1128 = vmatprep.subr.mxu0 0.0
        %1129 = vmatpush1.msra.mxu0 0.0
        %1130 = vmatprep.subr.mxu0 0.0
        %v1131 = vand.u32 %v719, 4294901760
        %v1132 = vsub.f32 %v719, %v1131
        %v1133 = vand.u32 %v1132, 4294901760
        %1134 = vmatpush1.msra.mxu0 %v1133
        %1135 = vmatprep.subr.mxu0 0.0
        %v1136 = vand.u32 %v713, 4294901760
        %v1137 = vsub.f32 %v713, %v1136
        %v1138 = vand.u32 %v1137, 4294901760
        %1139 = vmatpush1.msra.mxu0 %v1138
        %1140 = vmatprep.subr.mxu0 0.0
        %1141 = vmatpush2.msra.mxu0 0.0
        %1142 = vmatprep.subr.mxu0 0.0
        %1143 = vmatpush2.msra.mxu0 0.0
        %1144 = vmatprep.subr.mxu0 0.0
        %1145 = vmatpush2.msra.mxu0 0.0
        %1146 = vmatprep.subr.mxu0 0.0
        %1147 = vmatpush2.msra.mxu0 0.0
        %1148 = vmatprep.subr.mxu0 0.0
        %1149 = vmatpush2.msra.mxu0 0.0
        %1150 = vmatprep.subr.mxu0 0.0
        %1151 = vmatpush2.msra.mxu0 0.0
        %1152 = vmatprep.subr.mxu0 0.0
        %1153 = vmatpush2.msra.mxu0 0.0
        %1154 = vmatprep.subr.mxu0 0.0
        %1155 = vmatpush2.msra.mxu0 0.0
        %1156 = vmatprep.subr.mxu0 0.0
        %1157 = vmatpush2.msra.mxu0 0.0
        %1158 = vmatprep.subr.mxu0 0.0
        %1159 = vmatpush2.msra.mxu0 0.0
        %1160 = vmatprep.subr.mxu0 0.0
        %1161 = vmatpush2.msra.mxu0 0.0
        %1162 = vmatprep.subr.mxu0 0.0
        %1163 = vmatpush2.msra.mxu0 0.0
        %1164 = vmatprep.subr.mxu0 0.0
        %1165 = vmatpush2.msra.mxu0 0.0
        %1166 = vmatprep.subr.mxu0 0.0
        %1167 = vmatpush2.msra.mxu0 0.0
        %1168 = vmatprep.subr.mxu0 0.0
        %1169 = vmatpush2.msra.mxu0 0.0
        %1170 = vmatprep.subr.mxu0 0.0
        %1171 = vmatpush2.msra.mxu0 0.0
        %1172 = vmatprep.mubr.f32.mxu0 0.0
        %v1173 = vand.u32 %v723, 4294901760
        %1174 = vmatmul.mubr.f32.gmra.mxu0 %v1173
        %v1175 = vpop.f32.mrf.mxu0
        %v1176 = vadd.f32 %v1083, %v1175
        %v1177 = vpop.f32.mrf.mxu0
        %1178 = vmatprep.mubr.f32.mxu0 0.0
        %v1179 = vand.u32 %v726, 4294901760
        %1180 = vmatmul.mubr.f32.gmra.mxu0 %v1179
        %v1181 = vpop.f32.mrf.mxu0
        %v1182 = vadd.f32 %v1091, %v1181
        %v1183 = vpop.f32.mrf.mxu0
        %1184 = vmatprep.mubr.f32.mxu0 0.0
        %v1185 = vand.u32 %v729, 4294901760
        %1186 = vmatmul.mubr.f32.gmra.mxu0 %v1185
        %v1187 = vpop.f32.mrf.mxu0
        %v1188 = vadd.f32 %v1099, %v1187
        %v1189 = vpop.f32.mrf.mxu0
        %1190 = vdwg.mxu0
        %1191 = vmatprep.subr.mxu0 0.0
        %1192 = vmatpush1.msra.mxu0 0.0
        %1193 = vmatprep.subr.mxu0 0.0
        %1194 = vmatpush1.msra.mxu0 0.0
        %1195 = vmatprep.subr.mxu0 0.0
        %1196 = vmatpush1.msra.mxu0 0.0
        %1197 = vmatprep.subr.mxu0 0.0
        %1198 = vmatpush1.msra.mxu0 0.0
        %1199 = vmatprep.subr.mxu0 0.0
        %1200 = vmatpush1.msra.mxu0 0.0
        %1201 = vmatprep.subr.mxu0 0.0
        %1202 = vmatpush1.msra.mxu0 0.0
        %1203 = vmatprep.subr.mxu0 0.0
        %1204 = vmatpush1.msra.mxu0 0.0
        %1205 = vmatprep.subr.mxu0 0.0
        %1206 = vmatpush1.msra.mxu0 0.0
        %1207 = vmatprep.subr.mxu0 0.0
        %1208 = vmatpush1.msra.mxu0 0.0
        %1209 = vmatprep.subr.mxu0 0.0
        %1210 = vmatpush1.msra.mxu0 0.0
        %1211 = vmatprep.subr.mxu0 0.0
        %1212 = vmatpush1.msra.mxu0 0.0
        %1213 = vmatprep.subr.mxu0 0.0
        %1214 = vmatpush1.msra.mxu0 0.0
        %1215 = vmatprep.subr.mxu0 0.0
        %1216 = vmatpush1.msra.mxu0 0.0
        %1217 = vmatprep.subr.mxu0 0.0
        %1218 = vmatpush1.msra.mxu0 0.0
        %1219 = vmatprep.subr.mxu0 0.0
        %v1220 = vand.u32 %v719, 4294901760
        %1221 = vmatpush1.msra.mxu0 %v1220
        %1222 = vmatprep.subr.mxu0 0.0
        %v1223 = vand.u32 %v713, 4294901760
        %1224 = vmatpush1.msra.mxu0 %v1223
        %1225 = vmatprep.subr.mxu0 0.0
        %1226 = vmatpush2.msra.mxu0 0.0
        %1227 = vmatprep.subr.mxu0 0.0
        %1228 = vmatpush2.msra.mxu0 0.0
        %1229 = vmatprep.subr.mxu0 0.0
        %1230 = vmatpush2.msra.mxu0 0.0
        %1231 = vmatprep.subr.mxu0 0.0
        %1232 = vmatpush2.msra.mxu0 0.0
        %1233 = vmatprep.subr.mxu0 0.0
        %1234 = vmatpush2.msra.mxu0 0.0
        %1235 = vmatprep.subr.mxu0 0.0
        %1236 = vmatpush2.msra.mxu0 0.0
        %1237 = vmatprep.subr.mxu0 0.0
        %1238 = vmatpush2.msra.mxu0 0.0
        %1239 = vmatprep.subr.mxu0 0.0
        %1240 = vmatpush2.msra.mxu0 0.0
        %1241 = vmatprep.subr.mxu0 0.0
        %1242 = vmatpush2.msra.mxu0 0.0
        %1243 = vmatprep.subr.mxu0 0.0
        %1244 = vmatpush2.msra.mxu0 0.0
        %1245 = vmatprep.subr.mxu0 0.0
        %1246 = vmatpush2.msra.mxu0 0.0
        %1247 = vmatprep.subr.mxu0 0.0
        %1248 = vmatpush2.msra.mxu0 0.0
        %1249 = vmatprep.subr.mxu0 0.0
        %1250 = vmatpush2.msra.mxu0 0.0
        %1251 = vmatprep.subr.mxu0 0.0
        %1252 = vmatpush2.msra.mxu0 0.0
        %1253 = vmatprep.subr.mxu0 0.0
        %1254 = vmatpush2.msra.mxu0 0.0
        %1255 = vmatprep.subr.mxu0 0.0
        %1256 = vmatpush2.msra.mxu0 0.0
        %1257 = vmatprep.mubr.f32.mxu0 0.0
        %v1258 = vand.u32 %v723, 4294901760
        %1259 = vmatmul.mubr.f32.gmra.mxu0 %v1258
        %v1260 = vpop.f32.mrf.mxu0
        %v1261 = vadd.f32 %v1176, %v1260
        %v1262 = vpop.f32.mrf.mxu0
        %1263 = vmatprep.mubr.f32.mxu0 0.0
        %v1264 = vand.u32 %v726, 4294901760
        %1265 = vmatmul.mubr.f32.gmra.mxu0 %v1264
        %v1266 = vpop.f32.mrf.mxu0
        %v1267 = vadd.f32 %v1182, %v1266
        %v1268 = vpop.f32.mrf.mxu0
        %1269 = vmatprep.mubr.f32.mxu0 0.0
        %v1270 = vand.u32 %v729, 4294901760
        %1271 = vmatmul.mubr.f32.gmra.mxu0 %v1270
        %v1272 = vpop.f32.mrf.mxu0
        %v1273 = vadd.f32 %v1188, %v1272
        %v1274 = vpop.f32.mrf.mxu0
        %1275 = vdwg.mxu0
        %vm1276 = vcmask 72704
        %1277 = vst.msk [vmem:[%s203] sm:$0xff] %vm1276, %v1261
        %vm1278 = vcmask 65536
        %1279 = vst.msk [vmem:[%s203 + $0x8] sm:$0x1] %vm1278, %v1267
        %1282 = vrot.lane.b32.xlu0 %v1261, 119
        %v1283 = vpop.permute.xlu0 %1282
        %1284 = vrot.lane.b32.xlu0 %v1267, 119
        %v1285 = vpop.permute.xlu0 %1284
        %s1288 = scalar_lea.vmem %s203, 64 [#allocation4]
        %1289 = vst.msk [vmem:[%s1288] sm:$0xff] %vm1276, %v1283
        %1290 = vst.msk [vmem:[%s1288 + $0x8] sm:$0x1] %vm1278, %v1285
        %s1291 = scalar_lea.vmem %s203, 128 [#allocation4]
        %vm1292 = vcmask 72705
        %1293 = vst.msk [vmem:[%s1291 - $0x1] sm:$0xfe] %vm1292, %v1267
        %vm1294 = vcmask 66560
        %1295 = vst.msk [vmem:[%s1291 + $0x7] sm:$0x3] %vm1294, %v1273
        %1297 = vrot.lane.b32.xlu0 %v1273, 119
        %v1298 = vpop.permute.xlu0 %1297
        %s1300 = scalar_lea.vmem %s203, 192 [#allocation4]
        %1301 = vst.msk [vmem:[%s1300 - $0x1] sm:$0xfe] %vm1292, %v1285
        %1302 = vst.msk [vmem:[%s1300 + $0x7] sm:$0x3] %vm1294, %v1298
        %s1303 = scalar_lea.vmem %s182, 16 [#allocation2]
        %v1304 = vld [vmem:[%s1303] sm:$0xff]
        %v1305 = vld [vmem:[%s1303 + $0x8] sm:$0xff]
        %v1307 = vsel %vm213, %v1304, 0
        %v1310 = vsel %vm213, %v1305, 0
        %1312 = vmatprep.subr.mxu0 0.0
        %1313 = vmatpush1.msra.mxu0 0.0
        %1314 = vmatprep.subr.mxu0 0.0
        %1315 = vmatpush1.msra.mxu0 0.0
        %1316 = vmatprep.subr.mxu0 0.0
        %1317 = vmatpush1.msra.mxu0 0.0
        %1318 = vmatprep.subr.mxu0 0.0
        %1319 = vmatpush1.msra.mxu0 0.0
        %1320 = vmatprep.subr.mxu0 0.0
        %1321 = vmatpush1.msra.mxu0 0.0
        %1322 = vmatprep.subr.mxu0 0.0
        %1323 = vmatpush1.msra.mxu0 0.0
        %1324 = vmatprep.subr.mxu0 0.0
        %1325 = vmatpush1.msra.mxu0 0.0
        %1326 = vmatprep.subr.mxu0 0.0
        %1327 = vmatpush1.msra.mxu0 0.0
        %1328 = vmatprep.subr.mxu0 0.0
        %1329 = vmatpush1.msra.mxu0 0.0
        %1330 = vmatprep.subr.mxu0 0.0
        %1331 = vmatpush1.msra.mxu0 0.0
        %1332 = vmatprep.subr.mxu0 0.0
        %1333 = vmatpush1.msra.mxu0 0.0
        %1334 = vmatprep.subr.mxu0 0.0
        %1335 = vmatpush1.msra.mxu0 0.0
        %1336 = vmatprep.subr.mxu0 0.0
        %1337 = vmatpush1.msra.mxu0 0.0
        %1338 = vmatprep.subr.mxu0 0.0
        %1339 = vmatpush1.msra.mxu0 0.0
        %1340 = vmatprep.subr.mxu0 0.0
        %v1341 = vand.u32 %v210, 4294901760
        %1342 = vmatpush1.msra.mxu0 %v1341
        %1343 = vmatprep.subr.mxu0 0.0
        %v1344 = vand.u32 %v209, 4294901760
        %1345 = vmatpush1.msra.mxu0 %v1344
        %1346 = vmatprep.subr.mxu0 0.0
        %1347 = vmatpush2.msra.mxu0 0.0
        %1348 = vmatprep.subr.mxu0 0.0
        %1349 = vmatpush2.msra.mxu0 0.0
        %1350 = vmatprep.subr.mxu0 0.0
        %1351 = vmatpush2.msra.mxu0 0.0
        %1352 = vmatprep.subr.mxu0 0.0
        %1353 = vmatpush2.msra.mxu0 0.0
        %1354 = vmatprep.subr.mxu0 0.0
        %1355 = vmatpush2.msra.mxu0 0.0
        %1356 = vmatprep.subr.mxu0 0.0
        %1357 = vmatpush2.msra.mxu0 0.0
        %1358 = vmatprep.subr.mxu0 0.0
        %1359 = vmatpush2.msra.mxu0 0.0
        %1360 = vmatprep.subr.mxu0 0.0
        %1361 = vmatpush2.msra.mxu0 0.0
        %1362 = vmatprep.subr.mxu0 0.0
        %1363 = vmatpush2.msra.mxu0 0.0
        %1364 = vmatprep.subr.mxu0 0.0
        %1365 = vmatpush2.msra.mxu0 0.0
        %1366 = vmatprep.subr.mxu0 0.0
        %1367 = vmatpush2.msra.mxu0 0.0
        %1368 = vmatprep.subr.mxu0 0.0
        %1369 = vmatpush2.msra.mxu0 0.0
        %1370 = vmatprep.subr.mxu0 0.0
        %1371 = vmatpush2.msra.mxu0 0.0
        %1372 = vmatprep.subr.mxu0 0.0
        %1373 = vmatpush2.msra.mxu0 0.0
        %1374 = vmatprep.subr.mxu0 0.0
        %1375 = vmatpush2.msra.mxu0 0.0
        %1376 = vmatprep.subr.mxu0 0.0
        %1377 = vmatpush2.msra.mxu0 0.0
        %1378 = vmatprep.mubr.f32.mxu0 0.0
        %v1379 = vand.u32 %v1307, 4294901760
        %v1380 = vsub.f32 %v1307, %v1379
        %v1381 = vand.u32 %v1380, 4294901760
        %v1382 = vsub.f32 %v1380, %v1381
        %v1383 = vand.u32 %v1382, 4294901760
        %1384 = vmatmul.mubr.f32.gmra.mxu0 %v1383
        %v1385 = vpop.f32.mrf.mxu0
        %v1386 = vadd.f32 0.0, %v1385
        %v1387 = vpop.f32.mrf.mxu0
        %1388 = vmatprep.mubr.f32.mxu0 0.0
        %v1389 = vand.u32 %v1310, 4294901760
        %v1390 = vsub.f32 %v1310, %v1389
        %v1391 = vand.u32 %v1390, 4294901760
        %v1392 = vsub.f32 %v1390, %v1391
        %v1393 = vand.u32 %v1392, 4294901760
        %1394 = vmatmul.mubr.f32.gmra.mxu0 %v1393
        %v1395 = vpop.f32.mrf.mxu0
        %v1396 = vadd.f32 0.0, %v1395
        %v1397 = vpop.f32.mrf.mxu0
        %1398 = vdwg.mxu0
        %1399 = vmatprep.subr.mxu0 0.0
        %1400 = vmatpush1.msra.mxu0 0.0
        %1401 = vmatprep.subr.mxu0 0.0
        %1402 = vmatpush1.msra.mxu0 0.0
        %1403 = vmatprep.subr.mxu0 0.0
        %1404 = vmatpush1.msra.mxu0 0.0
        %1405 = vmatprep.subr.mxu0 0.0
        %1406 = vmatpush1.msra.mxu0 0.0
        %1407 = vmatprep.subr.mxu0 0.0
        %1408 = vmatpush1.msra.mxu0 0.0
        %1409 = vmatprep.subr.mxu0 0.0
        %1410 = vmatpush1.msra.mxu0 0.0
        %1411 = vmatprep.subr.mxu0 0.0
        %1412 = vmatpush1.msra.mxu0 0.0
        %1413 = vmatprep.subr.mxu0 0.0
        %1414 = vmatpush1.msra.mxu0 0.0
        %1415 = vmatprep.subr.mxu0 0.0
        %1416 = vmatpush1.msra.mxu0 0.0
        %1417 = vmatprep.subr.mxu0 0.0
        %1418 = vmatpush1.msra.mxu0 0.0
        %1419 = vmatprep.subr.mxu0 0.0
        %1420 = vmatpush1.msra.mxu0 0.0
        %1421 = vmatprep.subr.mxu0 0.0
        %1422 = vmatpush1.msra.mxu0 0.0
        %1423 = vmatprep.subr.mxu0 0.0
        %1424 = vmatpush1.msra.mxu0 0.0
        %1425 = vmatprep.subr.mxu0 0.0
        %1426 = vmatpush1.msra.mxu0 0.0
        %1427 = vmatprep.subr.mxu0 0.0
        %v1428 = vand.u32 %v210, 4294901760
        %v1429 = vsub.f32 %v210, %v1428
        %v1430 = vand.u32 %v1429, 4294901760
        %v1431 = vsub.f32 %v1429, %v1430
        %v1432 = vand.u32 %v1431, 4294901760
        %1433 = vmatpush1.msra.mxu0 %v1432
        %1434 = vmatprep.subr.mxu0 0.0
        %v1435 = vand.u32 %v209, 4294901760
        %v1436 = vsub.f32 %v209, %v1435
        %v1437 = vand.u32 %v1436, 4294901760
        %v1438 = vsub.f32 %v1436, %v1437
        %v1439 = vand.u32 %v1438, 4294901760
        %1440 = vmatpush1.msra.mxu0 %v1439
        %1441 = vmatprep.subr.mxu0 0.0
        %1442 = vmatpush2.msra.mxu0 0.0
        %1443 = vmatprep.subr.mxu0 0.0
        %1444 = vmatpush2.msra.mxu0 0.0
        %1445 = vmatprep.subr.mxu0 0.0
        %1446 = vmatpush2.msra.mxu0 0.0
        %1447 = vmatprep.subr.mxu0 0.0
        %1448 = vmatpush2.msra.mxu0 0.0
        %1449 = vmatprep.subr.mxu0 0.0
        %1450 = vmatpush2.msra.mxu0 0.0
        %1451 = vmatprep.subr.mxu0 0.0
        %1452 = vmatpush2.msra.mxu0 0.0
        %1453 = vmatprep.subr.mxu0 0.0
        %1454 = vmatpush2.msra.mxu0 0.0
        %1455 = vmatprep.subr.mxu0 0.0
        %1456 = vmatpush2.msra.mxu0 0.0
        %1457 = vmatprep.subr.mxu0 0.0
        %1458 = vmatpush2.msra.mxu0 0.0
        %1459 = vmatprep.subr.mxu0 0.0
        %1460 = vmatpush2.msra.mxu0 0.0
        %1461 = vmatprep.subr.mxu0 0.0
        %1462 = vmatpush2.msra.mxu0 0.0
        %1463 = vmatprep.subr.mxu0 0.0
        %1464 = vmatpush2.msra.mxu0 0.0
        %1465 = vmatprep.subr.mxu0 0.0
        %1466 = vmatpush2.msra.mxu0 0.0
        %1467 = vmatprep.subr.mxu0 0.0
        %1468 = vmatpush2.msra.mxu0 0.0
        %1469 = vmatprep.subr.mxu0 0.0
        %1470 = vmatpush2.msra.mxu0 0.0
        %1471 = vmatprep.subr.mxu0 0.0
        %1472 = vmatpush2.msra.mxu0 0.0
        %1473 = vmatprep.mubr.f32.mxu0 0.0
        %v1474 = vand.u32 %v1307, 4294901760
        %1475 = vmatmul.mubr.f32.gmra.mxu0 %v1474
        %v1476 = vpop.f32.mrf.mxu0
        %v1477 = vadd.f32 %v1386, %v1476
        %v1478 = vpop.f32.mrf.mxu0
        %1479 = vmatprep.mubr.f32.mxu0 0.0
        %v1480 = vand.u32 %v1310, 4294901760
        %1481 = vmatmul.mubr.f32.gmra.mxu0 %v1480
        %v1482 = vpop.f32.mrf.mxu0
        %v1483 = vadd.f32 %v1396, %v1482
        %v1484 = vpop.f32.mrf.mxu0
        %1485 = vdwg.mxu0
        %1486 = vmatprep.subr.mxu0 0.0
        %1487 = vmatpush1.msra.mxu0 0.0
        %1488 = vmatprep.subr.mxu0 0.0
        %1489 = vmatpush1.msra.mxu0 0.0
        %1490 = vmatprep.subr.mxu0 0.0
        %1491 = vmatpush1.msra.mxu0 0.0
        %1492 = vmatprep.subr.mxu0 0.0
        %1493 = vmatpush1.msra.mxu0 0.0
        %1494 = vmatprep.subr.mxu0 0.0
        %1495 = vmatpush1.msra.mxu0 0.0
        %1496 = vmatprep.subr.mxu0 0.0
        %1497 = vmatpush1.msra.mxu0 0.0
        %1498 = vmatprep.subr.mxu0 0.0
        %1499 = vmatpush1.msra.mxu0 0.0
        %1500 = vmatprep.subr.mxu0 0.0
        %1501 = vmatpush1.msra.mxu0 0.0
        %1502 = vmatprep.subr.mxu0 0.0
        %1503 = vmatpush1.msra.mxu0 0.0
        %1504 = vmatprep.subr.mxu0 0.0
        %1505 = vmatpush1.msra.mxu0 0.0
        %1506 = vmatprep.subr.mxu0 0.0
        %1507 = vmatpush1.msra.mxu0 0.0
        %1508 = vmatprep.subr.mxu0 0.0
        %1509 = vmatpush1.msra.mxu0 0.0
        %1510 = vmatprep.subr.mxu0 0.0
        %1511 = vmatpush1.msra.mxu0 0.0
        %1512 = vmatprep.subr.mxu0 0.0
        %1513 = vmatpush1.msra.mxu0 0.0
        %1514 = vmatprep.subr.mxu0 0.0
        %v1515 = vand.u32 %v210, 4294901760
        %v1516 = vsub.f32 %v210, %v1515
        %1517 = vmatpush1.msra.mxu0 %v1516
        %1518 = vmatprep.subr.mxu0 0.0
        %v1519 = vand.u32 %v209, 4294901760
        %v1520 = vsub.f32 %v209, %v1519
        %1521 = vmatpush1.msra.mxu0 %v1520
        %1522 = vmatprep.subr.mxu0 0.0
        %1523 = vmatpush2.msra.mxu0 0.0
        %1524 = vmatprep.subr.mxu0 0.0
        %1525 = vmatpush2.msra.mxu0 0.0
        %1526 = vmatprep.subr.mxu0 0.0
        %1527 = vmatpush2.msra.mxu0 0.0
        %1528 = vmatprep.subr.mxu0 0.0
        %1529 = vmatpush2.msra.mxu0 0.0
        %1530 = vmatprep.subr.mxu0 0.0
        %1531 = vmatpush2.msra.mxu0 0.0
        %1532 = vmatprep.subr.mxu0 0.0
        %1533 = vmatpush2.msra.mxu0 0.0
        %1534 = vmatprep.subr.mxu0 0.0
        %1535 = vmatpush2.msra.mxu0 0.0
        %1536 = vmatprep.subr.mxu0 0.0
        %1537 = vmatpush2.msra.mxu0 0.0
        %1538 = vmatprep.subr.mxu0 0.0
        %1539 = vmatpush2.msra.mxu0 0.0
        %1540 = vmatprep.subr.mxu0 0.0
        %1541 = vmatpush2.msra.mxu0 0.0
        %1542 = vmatprep.subr.mxu0 0.0
        %1543 = vmatpush2.msra.mxu0 0.0
        %1544 = vmatprep.subr.mxu0 0.0
        %1545 = vmatpush2.msra.mxu0 0.0
        %1546 = vmatprep.subr.mxu0 0.0
        %1547 = vmatpush2.msra.mxu0 0.0
        %1548 = vmatprep.subr.mxu0 0.0
        %1549 = vmatpush2.msra.mxu0 0.0
        %1550 = vmatprep.subr.mxu0 0.0
        %1551 = vmatpush2.msra.mxu0 0.0
        %1552 = vmatprep.subr.mxu0 0.0
        %1553 = vmatpush2.msra.mxu0 0.0
        %1554 = vmatprep.mubr.f32.mxu0 0.0
        %v1555 = vand.u32 %v1307, 4294901760
        %v1556 = vsub.f32 %v1307, %v1555
        %1557 = vmatmul.mubr.f32.gmra.mxu0 %v1556
        %v1558 = vpop.f32.mrf.mxu0
        %v1559 = vadd.f32 %v1477, %v1558
        %v1560 = vpop.f32.mrf.mxu0
        %1561 = vmatprep.mubr.f32.mxu0 0.0
        %v1562 = vand.u32 %v1310, 4294901760
        %v1563 = vsub.f32 %v1310, %v1562
        %1564 = vmatmul.mubr.f32.gmra.mxu0 %v1563
        %v1565 = vpop.f32.mrf.mxu0
        %v1566 = vadd.f32 %v1483, %v1565
        %v1567 = vpop.f32.mrf.mxu0
        %1568 = vdwg.mxu0
        %1569 = vmatprep.subr.mxu0 0.0
        %1570 = vmatpush1.msra.mxu0 0.0
        %1571 = vmatprep.subr.mxu0 0.0
        %1572 = vmatpush1.msra.mxu0 0.0
        %1573 = vmatprep.subr.mxu0 0.0
        %1574 = vmatpush1.msra.mxu0 0.0
        %1575 = vmatprep.subr.mxu0 0.0
        %1576 = vmatpush1.msra.mxu0 0.0
        %1577 = vmatprep.subr.mxu0 0.0
        %1578 = vmatpush1.msra.mxu0 0.0
        %1579 = vmatprep.subr.mxu0 0.0
        %1580 = vmatpush1.msra.mxu0 0.0
        %1581 = vmatprep.subr.mxu0 0.0
        %1582 = vmatpush1.msra.mxu0 0.0
        %1583 = vmatprep.subr.mxu0 0.0
        %1584 = vmatpush1.msra.mxu0 0.0
        %1585 = vmatprep.subr.mxu0 0.0
        %1586 = vmatpush1.msra.mxu0 0.0
        %1587 = vmatprep.subr.mxu0 0.0
        %1588 = vmatpush1.msra.mxu0 0.0
        %1589 = vmatprep.subr.mxu0 0.0
        %1590 = vmatpush1.msra.mxu0 0.0
        %1591 = vmatprep.subr.mxu0 0.0
        %1592 = vmatpush1.msra.mxu0 0.0
        %1593 = vmatprep.subr.mxu0 0.0
        %1594 = vmatpush1.msra.mxu0 0.0
        %1595 = vmatprep.subr.mxu0 0.0
        %1596 = vmatpush1.msra.mxu0 0.0
        %1597 = vmatprep.subr.mxu0 0.0
        %v1598 = vand.u32 %v210, 4294901760
        %1599 = vmatpush1.msra.mxu0 %v1598
        %1600 = vmatprep.subr.mxu0 0.0
        %v1601 = vand.u32 %v209, 4294901760
        %1602 = vmatpush1.msra.mxu0 %v1601
        %1603 = vmatprep.subr.mxu0 0.0
        %1604 = vmatpush2.msra.mxu0 0.0
        %1605 = vmatprep.subr.mxu0 0.0
        %1606 = vmatpush2.msra.mxu0 0.0
        %1607 = vmatprep.subr.mxu0 0.0
        %1608 = vmatpush2.msra.mxu0 0.0
        %1609 = vmatprep.subr.mxu0 0.0
        %1610 = vmatpush2.msra.mxu0 0.0
        %1611 = vmatprep.subr.mxu0 0.0
        %1612 = vmatpush2.msra.mxu0 0.0
        %1613 = vmatprep.subr.mxu0 0.0
        %1614 = vmatpush2.msra.mxu0 0.0
        %1615 = vmatprep.subr.mxu0 0.0
        %1616 = vmatpush2.msra.mxu0 0.0
        %1617 = vmatprep.subr.mxu0 0.0
        %1618 = vmatpush2.msra.mxu0 0.0
        %1619 = vmatprep.subr.mxu0 0.0
        %1620 = vmatpush2.msra.mxu0 0.0
        %1621 = vmatprep.subr.mxu0 0.0
        %1622 = vmatpush2.msra.mxu0 0.0
        %1623 = vmatprep.subr.mxu0 0.0
        %1624 = vmatpush2.msra.mxu0 0.0
        %1625 = vmatprep.subr.mxu0 0.0
        %1626 = vmatpush2.msra.mxu0 0.0
        %1627 = vmatprep.subr.mxu0 0.0
        %1628 = vmatpush2.msra.mxu0 0.0
        %1629 = vmatprep.subr.mxu0 0.0
        %1630 = vmatpush2.msra.mxu0 0.0
        %1631 = vmatprep.subr.mxu0 0.0
        %1632 = vmatpush2.msra.mxu0 0.0
        %1633 = vmatprep.subr.mxu0 0.0
        %1634 = vmatpush2.msra.mxu0 0.0
        %1635 = vmatprep.mubr.f32.mxu0 0.0
        %v1636 = vand.u32 %v1307, 4294901760
        %v1637 = vsub.f32 %v1307, %v1636
        %v1638 = vand.u32 %v1637, 4294901760
        %1639 = vmatmul.mubr.f32.gmra.mxu0 %v1638
        %v1640 = vpop.f32.mrf.mxu0
        %v1641 = vadd.f32 %v1559, %v1640
        %v1642 = vpop.f32.mrf.mxu0
        %1643 = vmatprep.mubr.f32.mxu0 0.0
        %v1644 = vand.u32 %v1310, 4294901760
        %v1645 = vsub.f32 %v1310, %v1644
        %v1646 = vand.u32 %v1645, 4294901760
        %1647 = vmatmul.mubr.f32.gmra.mxu0 %v1646
        %v1648 = vpop.f32.mrf.mxu0
        %v1649 = vadd.f32 %v1566, %v1648
        %v1650 = vpop.f32.mrf.mxu0
        %1651 = vdwg.mxu0
        %1652 = vmatprep.subr.mxu0 0.0
        %1653 = vmatpush1.msra.mxu0 0.0
        %1654 = vmatprep.subr.mxu0 0.0
        %1655 = vmatpush1.msra.mxu0 0.0
        %1656 = vmatprep.subr.mxu0 0.0
        %1657 = vmatpush1.msra.mxu0 0.0
        %1658 = vmatprep.subr.mxu0 0.0
        %1659 = vmatpush1.msra.mxu0 0.0
        %1660 = vmatprep.subr.mxu0 0.0
        %1661 = vmatpush1.msra.mxu0 0.0
        %1662 = vmatprep.subr.mxu0 0.0
        %1663 = vmatpush1.msra.mxu0 0.0
        %1664 = vmatprep.subr.mxu0 0.0
        %1665 = vmatpush1.msra.mxu0 0.0
        %1666 = vmatprep.subr.mxu0 0.0
        %1667 = vmatpush1.msra.mxu0 0.0
        %1668 = vmatprep.subr.mxu0 0.0
        %1669 = vmatpush1.msra.mxu0 0.0
        %1670 = vmatprep.subr.mxu0 0.0
        %1671 = vmatpush1.msra.mxu0 0.0
        %1672 = vmatprep.subr.mxu0 0.0
        %1673 = vmatpush1.msra.mxu0 0.0
        %1674 = vmatprep.subr.mxu0 0.0
        %1675 = vmatpush1.msra.mxu0 0.0
        %1676 = vmatprep.subr.mxu0 0.0
        %1677 = vmatpush1.msra.mxu0 0.0
        %1678 = vmatprep.subr.mxu0 0.0
        %1679 = vmatpush1.msra.mxu0 0.0
        %1680 = vmatprep.subr.mxu0 0.0
        %v1681 = vand.u32 %v210, 4294901760
        %v1682 = vsub.f32 %v210, %v1681
        %v1683 = vand.u32 %v1682, 4294901760
        %1684 = vmatpush1.msra.mxu0 %v1683
        %1685 = vmatprep.subr.mxu0 0.0
        %v1686 = vand.u32 %v209, 4294901760
        %v1687 = vsub.f32 %v209, %v1686
        %v1688 = vand.u32 %v1687, 4294901760
        %1689 = vmatpush1.msra.mxu0 %v1688
        %1690 = vmatprep.subr.mxu0 0.0
        %1691 = vmatpush2.msra.mxu0 0.0
        %1692 = vmatprep.subr.mxu0 0.0
        %1693 = vmatpush2.msra.mxu0 0.0
        %1694 = vmatprep.subr.mxu0 0.0
        %1695 = vmatpush2.msra.mxu0 0.0
        %1696 = vmatprep.subr.mxu0 0.0
        %1697 = vmatpush2.msra.mxu0 0.0
        %1698 = vmatprep.subr.mxu0 0.0
        %1699 = vmatpush2.msra.mxu0 0.0
        %1700 = vmatprep.subr.mxu0 0.0
        %1701 = vmatpush2.msra.mxu0 0.0
        %1702 = vmatprep.subr.mxu0 0.0
        %1703 = vmatpush2.msra.mxu0 0.0
        %1704 = vmatprep.subr.mxu0 0.0
        %1705 = vmatpush2.msra.mxu0 0.0
        %1706 = vmatprep.subr.mxu0 0.0
        %1707 = vmatpush2.msra.mxu0 0.0
        %1708 = vmatprep.subr.mxu0 0.0
        %1709 = vmatpush2.msra.mxu0 0.0
        %1710 = vmatprep.subr.mxu0 0.0
        %1711 = vmatpush2.msra.mxu0 0.0
        %1712 = vmatprep.subr.mxu0 0.0
        %1713 = vmatpush2.msra.mxu0 0.0
        %1714 = vmatprep.subr.mxu0 0.0
        %1715 = vmatpush2.msra.mxu0 0.0
        %1716 = vmatprep.subr.mxu0 0.0
        %1717 = vmatpush2.msra.mxu0 0.0
        %1718 = vmatprep.subr.mxu0 0.0
        %1719 = vmatpush2.msra.mxu0 0.0
        %1720 = vmatprep.subr.mxu0 0.0
        %1721 = vmatpush2.msra.mxu0 0.0
        %1722 = vmatprep.mubr.f32.mxu0 0.0
        %v1723 = vand.u32 %v1307, 4294901760
        %1724 = vmatmul.mubr.f32.gmra.mxu0 %v1723
        %v1725 = vpop.f32.mrf.mxu0
        %v1726 = vadd.f32 %v1641, %v1725
        %v1727 = vpop.f32.mrf.mxu0
        %1728 = vmatprep.mubr.f32.mxu0 0.0
        %v1729 = vand.u32 %v1310, 4294901760
        %1730 = vmatmul.mubr.f32.gmra.mxu0 %v1729
        %v1731 = vpop.f32.mrf.mxu0
        %v1732 = vadd.f32 %v1649, %v1731
        %v1733 = vpop.f32.mrf.mxu0
        %1734 = vdwg.mxu0
        %1735 = vmatprep.subr.mxu0 0.0
        %1736 = vmatpush1.msra.mxu0 0.0
        %1737 = vmatprep.subr.mxu0 0.0
        %1738 = vmatpush1.msra.mxu0 0.0
        %1739 = vmatprep.subr.mxu0 0.0
        %1740 = vmatpush1.msra.mxu0 0.0
        %1741 = vmatprep.subr.mxu0 0.0
        %1742 = vmatpush1.msra.mxu0 0.0
        %1743 = vmatprep.subr.mxu0 0.0
        %1744 = vmatpush1.msra.mxu0 0.0
        %1745 = vmatprep.subr.mxu0 0.0
        %1746 = vmatpush1.msra.mxu0 0.0
        %1747 = vmatprep.subr.mxu0 0.0
        %1748 = vmatpush1.msra.mxu0 0.0
        %1749 = vmatprep.subr.mxu0 0.0
        %1750 = vmatpush1.msra.mxu0 0.0
        %1751 = vmatprep.subr.mxu0 0.0
        %1752 = vmatpush1.msra.mxu0 0.0
        %1753 = vmatprep.subr.mxu0 0.0
        %1754 = vmatpush1.msra.mxu0 0.0
        %1755 = vmatprep.subr.mxu0 0.0
        %1756 = vmatpush1.msra.mxu0 0.0
        %1757 = vmatprep.subr.mxu0 0.0
        %1758 = vmatpush1.msra.mxu0 0.0
        %1759 = vmatprep.subr.mxu0 0.0
        %1760 = vmatpush1.msra.mxu0 0.0
        %1761 = vmatprep.subr.mxu0 0.0
        %1762 = vmatpush1.msra.mxu0 0.0
        %1763 = vmatprep.subr.mxu0 0.0
        %v1764 = vand.u32 %v210, 4294901760
        %1765 = vmatpush1.msra.mxu0 %v1764
        %1766 = vmatprep.subr.mxu0 0.0
        %v1767 = vand.u32 %v209, 4294901760
        %1768 = vmatpush1.msra.mxu0 %v1767
        %1769 = vmatprep.subr.mxu0 0.0
        %1770 = vmatpush2.msra.mxu0 0.0
        %1771 = vmatprep.subr.mxu0 0.0
        %1772 = vmatpush2.msra.mxu0 0.0
        %1773 = vmatprep.subr.mxu0 0.0
        %1774 = vmatpush2.msra.mxu0 0.0
        %1775 = vmatprep.subr.mxu0 0.0
        %1776 = vmatpush2.msra.mxu0 0.0
        %1777 = vmatprep.subr.mxu0 0.0
        %1778 = vmatpush2.msra.mxu0 0.0
        %1779 = vmatprep.subr.mxu0 0.0
        %1780 = vmatpush2.msra.mxu0 0.0
        %1781 = vmatprep.subr.mxu0 0.0
        %1782 = vmatpush2.msra.mxu0 0.0
        %1783 = vmatprep.subr.mxu0 0.0
        %1784 = vmatpush2.msra.mxu0 0.0
        %1785 = vmatprep.subr.mxu0 0.0
        %1786 = vmatpush2.msra.mxu0 0.0
        %1787 = vmatprep.subr.mxu0 0.0
        %1788 = vmatpush2.msra.mxu0 0.0
        %1789 = vmatprep.subr.mxu0 0.0
        %1790 = vmatpush2.msra.mxu0 0.0
        %1791 = vmatprep.subr.mxu0 0.0
        %1792 = vmatpush2.msra.mxu0 0.0
        %1793 = vmatprep.subr.mxu0 0.0
        %1794 = vmatpush2.msra.mxu0 0.0
        %1795 = vmatprep.subr.mxu0 0.0
        %1796 = vmatpush2.msra.mxu0 0.0
        %1797 = vmatprep.subr.mxu0 0.0
        %1798 = vmatpush2.msra.mxu0 0.0
        %1799 = vmatprep.subr.mxu0 0.0
        %1800 = vmatpush2.msra.mxu0 0.0
        %1801 = vmatprep.mubr.f32.mxu0 0.0
        %v1802 = vand.u32 %v1307, 4294901760
        %1803 = vmatmul.mubr.f32.gmra.mxu0 %v1802
        %v1804 = vpop.f32.mrf.mxu0
        %v1805 = vadd.f32 %v1726, %v1804
        %v1806 = vpop.f32.mrf.mxu0
        %1807 = vmatprep.mubr.f32.mxu0 0.0
        %v1808 = vand.u32 %v1310, 4294901760
        %1809 = vmatmul.mubr.f32.gmra.mxu0 %v1808
        %v1810 = vpop.f32.mrf.mxu0
        %v1811 = vadd.f32 %v1732, %v1810
        %v1812 = vpop.f32.mrf.mxu0
        %1813 = vdwg.mxu0
        %1814 = vmatprep.subr.mxu0 0.0
        %1815 = vmatpush1.msra.mxu0 0.0
        %1816 = vmatprep.subr.mxu0 0.0
        %1817 = vmatpush1.msra.mxu0 0.0
        %1818 = vmatprep.subr.mxu0 0.0
        %1819 = vmatpush1.msra.mxu0 0.0
        %1820 = vmatprep.subr.mxu0 0.0
        %1821 = vmatpush1.msra.mxu0 0.0
        %1822 = vmatprep.subr.mxu0 0.0
        %1823 = vmatpush1.msra.mxu0 0.0
        %1824 = vmatprep.subr.mxu0 0.0
        %1825 = vmatpush1.msra.mxu0 0.0
        %1826 = vmatprep.subr.mxu0 0.0
        %1827 = vmatpush1.msra.mxu0 0.0
        %1828 = vmatprep.subr.mxu0 0.0
        %1829 = vmatpush1.msra.mxu0 0.0
        %1830 = vmatprep.subr.mxu0 0.0
        %1831 = vmatpush1.msra.mxu0 0.0
        %1832 = vmatprep.subr.mxu0 0.0
        %1833 = vmatpush1.msra.mxu0 0.0
        %1834 = vmatprep.subr.mxu0 0.0
        %1835 = vmatpush1.msra.mxu0 0.0
        %1836 = vmatprep.subr.mxu0 0.0
        %1837 = vmatpush1.msra.mxu0 0.0
        %1838 = vmatprep.subr.mxu0 0.0
        %1839 = vmatpush1.msra.mxu0 0.0
        %1840 = vmatprep.subr.mxu0 0.0
        %1841 = vmatpush1.msra.mxu0 0.0
        %1842 = vmatprep.subr.mxu0 0.0
        %v1843 = vand.u32 %v1811, 4294901760
        %1844 = vmatpush1.msra.mxu0 %v1843
        %1845 = vmatprep.subr.mxu0 0.0
        %v1846 = vand.u32 %v1805, 4294901760
        %1847 = vmatpush1.msra.mxu0 %v1846
        %1848 = vmatprep.subr.mxu0 0.0
        %1849 = vmatpush2.msra.mxu0 0.0
        %1850 = vmatprep.subr.mxu0 0.0
        %1851 = vmatpush2.msra.mxu0 0.0
        %1852 = vmatprep.subr.mxu0 0.0
        %1853 = vmatpush2.msra.mxu0 0.0
        %1854 = vmatprep.subr.mxu0 0.0
        %1855 = vmatpush2.msra.mxu0 0.0
        %1856 = vmatprep.subr.mxu0 0.0
        %1857 = vmatpush2.msra.mxu0 0.0
        %1858 = vmatprep.subr.mxu0 0.0
        %1859 = vmatpush2.msra.mxu0 0.0
        %1860 = vmatprep.subr.mxu0 0.0
        %1861 = vmatpush2.msra.mxu0 0.0
        %1862 = vmatprep.subr.mxu0 0.0
        %1863 = vmatpush2.msra.mxu0 0.0
        %1864 = vmatprep.subr.mxu0 0.0
        %1865 = vmatpush2.msra.mxu0 0.0
        %1866 = vmatprep.subr.mxu0 0.0
        %1867 = vmatpush2.msra.mxu0 0.0
        %1868 = vmatprep.subr.mxu0 0.0
        %1869 = vmatpush2.msra.mxu0 0.0
        %1870 = vmatprep.subr.mxu0 0.0
        %1871 = vmatpush2.msra.mxu0 0.0
        %1872 = vmatprep.subr.mxu0 0.0
        %1873 = vmatpush2.msra.mxu0 0.0
        %1874 = vmatprep.subr.mxu0 0.0
        %1875 = vmatpush2.msra.mxu0 0.0
        %1876 = vmatprep.subr.mxu0 0.0
        %1877 = vmatpush2.msra.mxu0 0.0
        %1878 = vmatprep.subr.mxu0 0.0
        %1879 = vmatpush2.msra.mxu0 0.0
        %1880 = vmatprep.mubr.f32.mxu0 0.0
        %v1881 = vand.u32 %v723, 4294901760
        %v1882 = vsub.f32 %v723, %v1881
        %v1883 = vand.u32 %v1882, 4294901760
        %v1884 = vsub.f32 %v1882, %v1883
        %v1885 = vand.u32 %v1884, 4294901760
        %1886 = vmatmul.mubr.f32.gmra.mxu0 %v1885
        %v1887 = vpop.f32.mrf.mxu0
        %v1888 = vadd.f32 0.0, %v1887
        %v1889 = vpop.f32.mrf.mxu0
        %1890 = vmatprep.mubr.f32.mxu0 0.0
        %v1891 = vand.u32 %v726, 4294901760
        %v1892 = vsub.f32 %v726, %v1891
        %v1893 = vand.u32 %v1892, 4294901760
        %v1894 = vsub.f32 %v1892, %v1893
        %v1895 = vand.u32 %v1894, 4294901760
        %1896 = vmatmul.mubr.f32.gmra.mxu0 %v1895
        %v1897 = vpop.f32.mrf.mxu0
        %v1898 = vadd.f32 0.0, %v1897
        %v1899 = vpop.f32.mrf.mxu0
        %1900 = vmatprep.mubr.f32.mxu0 0.0
        %v1901 = vand.u32 %v729, 4294901760
        %v1902 = vsub.f32 %v729, %v1901
        %v1903 = vand.u32 %v1902, 4294901760
        %v1904 = vsub.f32 %v1902, %v1903
        %v1905 = vand.u32 %v1904, 4294901760
        %1906 = vmatmul.mubr.f32.gmra.mxu0 %v1905
        %v1907 = vpop.f32.mrf.mxu0
        %v1908 = vadd.f32 0.0, %v1907
        %v1909 = vpop.f32.mrf.mxu0
        %1910 = vdwg.mxu0
        %1911 = vmatprep.subr.mxu0 0.0
        %1912 = vmatpush1.msra.mxu0 0.0
        %1913 = vmatprep.subr.mxu0 0.0
        %1914 = vmatpush1.msra.mxu0 0.0
        %1915 = vmatprep.subr.mxu0 0.0
        %1916 = vmatpush1.msra.mxu0 0.0
        %1917 = vmatprep.subr.mxu0 0.0
        %1918 = vmatpush1.msra.mxu0 0.0
        %1919 = vmatprep.subr.mxu0 0.0
        %1920 = vmatpush1.msra.mxu0 0.0
        %1921 = vmatprep.subr.mxu0 0.0
        %1922 = vmatpush1.msra.mxu0 0.0
        %1923 = vmatprep.subr.mxu0 0.0
        %1924 = vmatpush1.msra.mxu0 0.0
        %1925 = vmatprep.subr.mxu0 0.0
        %1926 = vmatpush1.msra.mxu0 0.0
        %1927 = vmatprep.subr.mxu0 0.0
        %1928 = vmatpush1.msra.mxu0 0.0
        %1929 = vmatprep.subr.mxu0 0.0
        %1930 = vmatpush1.msra.mxu0 0.0
        %1931 = vmatprep.subr.mxu0 0.0
        %1932 = vmatpush1.msra.mxu0 0.0
        %1933 = vmatprep.subr.mxu0 0.0
        %1934 = vmatpush1.msra.mxu0 0.0
        %1935 = vmatprep.subr.mxu0 0.0
        %1936 = vmatpush1.msra.mxu0 0.0
        %1937 = vmatprep.subr.mxu0 0.0
        %1938 = vmatpush1.msra.mxu0 0.0
        %1939 = vmatprep.subr.mxu0 0.0
        %v1940 = vand.u32 %v1811, 4294901760
        %v1941 = vsub.f32 %v1811, %v1940
        %v1942 = vand.u32 %v1941, 4294901760
        %v1943 = vsub.f32 %v1941, %v1942
        %v1944 = vand.u32 %v1943, 4294901760
        %1945 = vmatpush1.msra.mxu0 %v1944
        %1946 = vmatprep.subr.mxu0 0.0
        %v1947 = vand.u32 %v1805, 4294901760
        %v1948 = vsub.f32 %v1805, %v1947
        %v1949 = vand.u32 %v1948, 4294901760
        %v1950 = vsub.f32 %v1948, %v1949
        %v1951 = vand.u32 %v1950, 4294901760
        %1952 = vmatpush1.msra.mxu0 %v1951
        %1953 = vmatprep.subr.mxu0 0.0
        %1954 = vmatpush2.msra.mxu0 0.0
        %1955 = vmatprep.subr.mxu0 0.0
        %1956 = vmatpush2.msra.mxu0 0.0
        %1957 = vmatprep.subr.mxu0 0.0
        %1958 = vmatpush2.msra.mxu0 0.0
        %1959 = vmatprep.subr.mxu0 0.0
        %1960 = vmatpush2.msra.mxu0 0.0
        %1961 = vmatprep.subr.mxu0 0.0
        %1962 = vmatpush2.msra.mxu0 0.0
        %1963 = vmatprep.subr.mxu0 0.0
        %1964 = vmatpush2.msra.mxu0 0.0
        %1965 = vmatprep.subr.mxu0 0.0
        %1966 = vmatpush2.msra.mxu0 0.0
        %1967 = vmatprep.subr.mxu0 0.0
        %1968 = vmatpush2.msra.mxu0 0.0
        %1969 = vmatprep.subr.mxu0 0.0
        %1970 = vmatpush2.msra.mxu0 0.0
        %1971 = vmatprep.subr.mxu0 0.0
        %1972 = vmatpush2.msra.mxu0 0.0
        %1973 = vmatprep.subr.mxu0 0.0
        %1974 = vmatpush2.msra.mxu0 0.0
        %1975 = vmatprep.subr.mxu0 0.0
        %1976 = vmatpush2.msra.mxu0 0.0
        %1977 = vmatprep.subr.mxu0 0.0
        %1978 = vmatpush2.msra.mxu0 0.0
        %1979 = vmatprep.subr.mxu0 0.0
        %1980 = vmatpush2.msra.mxu0 0.0
        %1981 = vmatprep.subr.mxu0 0.0
        %1982 = vmatpush2.msra.mxu0 0.0
        %1983 = vmatprep.subr.mxu0 0.0
        %1984 = vmatpush2.msra.mxu0 0.0
        %1985 = vmatprep.mubr.f32.mxu0 0.0
        %v1986 = vand.u32 %v723, 4294901760
        %1987 = vmatmul.mubr.f32.gmra.mxu0 %v1986
        %v1988 = vpop.f32.mrf.mxu0
        %v1989 = vadd.f32 %v1888, %v1988
        %v1990 = vpop.f32.mrf.mxu0
        %1991 = vmatprep.mubr.f32.mxu0 0.0
        %v1992 = vand.u32 %v726, 4294901760
        %1993 = vmatmul.mubr.f32.gmra.mxu0 %v1992
        %v1994 = vpop.f32.mrf.mxu0
        %v1995 = vadd.f32 %v1898, %v1994
        %v1996 = vpop.f32.mrf.mxu0
        %1997 = vmatprep.mubr.f32.mxu0 0.0
        %v1998 = vand.u32 %v729, 4294901760
        %1999 = vmatmul.mubr.f32.gmra.mxu0 %v1998
        %v2000 = vpop.f32.mrf.mxu0
        %v2001 = vadd.f32 %v1908, %v2000
        %v2002 = vpop.f32.mrf.mxu0
        %2003 = vdwg.mxu0
        %2004 = vmatprep.subr.mxu0 0.0
        %2005 = vmatpush1.msra.mxu0 0.0
        %2006 = vmatprep.subr.mxu0 0.0
        %2007 = vmatpush1.msra.mxu0 0.0
        %2008 = vmatprep.subr.mxu0 0.0
        %2009 = vmatpush1.msra.mxu0 0.0
        %2010 = vmatprep.subr.mxu0 0.0
        %2011 = vmatpush1.msra.mxu0 0.0
        %2012 = vmatprep.subr.mxu0 0.0
        %2013 = vmatpush1.msra.mxu0 0.0
        %2014 = vmatprep.subr.mxu0 0.0
        %2015 = vmatpush1.msra.mxu0 0.0
        %2016 = vmatprep.subr.mxu0 0.0
        %2017 = vmatpush1.msra.mxu0 0.0
        %2018 = vmatprep.subr.mxu0 0.0
        %2019 = vmatpush1.msra.mxu0 0.0
        %2020 = vmatprep.subr.mxu0 0.0
        %2021 = vmatpush1.msra.mxu0 0.0
        %2022 = vmatprep.subr.mxu0 0.0
        %2023 = vmatpush1.msra.mxu0 0.0
        %2024 = vmatprep.subr.mxu0 0.0
        %2025 = vmatpush1.msra.mxu0 0.0
        %2026 = vmatprep.subr.mxu0 0.0
        %2027 = vmatpush1.msra.mxu0 0.0
        %2028 = vmatprep.subr.mxu0 0.0
        %2029 = vmatpush1.msra.mxu0 0.0
        %2030 = vmatprep.subr.mxu0 0.0
        %2031 = vmatpush1.msra.mxu0 0.0
        %2032 = vmatprep.subr.mxu0 0.0
        %v2033 = vand.u32 %v1811, 4294901760
        %v2034 = vsub.f32 %v1811, %v2033
        %2035 = vmatpush1.msra.mxu0 %v2034
        %2036 = vmatprep.subr.mxu0 0.0
        %v2037 = vand.u32 %v1805, 4294901760
        %v2038 = vsub.f32 %v1805, %v2037
        %2039 = vmatpush1.msra.mxu0 %v2038
        %2040 = vmatprep.subr.mxu0 0.0
        %2041 = vmatpush2.msra.mxu0 0.0
        %2042 = vmatprep.subr.mxu0 0.0
        %2043 = vmatpush2.msra.mxu0 0.0
        %2044 = vmatprep.subr.mxu0 0.0
        %2045 = vmatpush2.msra.mxu0 0.0
        %2046 = vmatprep.subr.mxu0 0.0
        %2047 = vmatpush2.msra.mxu0 0.0
        %2048 = vmatprep.subr.mxu0 0.0
        %2049 = vmatpush2.msra.mxu0 0.0
        %2050 = vmatprep.subr.mxu0 0.0
        %2051 = vmatpush2.msra.mxu0 0.0
        %2052 = vmatprep.subr.mxu0 0.0
        %2053 = vmatpush2.msra.mxu0 0.0
        %2054 = vmatprep.subr.mxu0 0.0
        %2055 = vmatpush2.msra.mxu0 0.0
        %2056 = vmatprep.subr.mxu0 0.0
        %2057 = vmatpush2.msra.mxu0 0.0
        %2058 = vmatprep.subr.mxu0 0.0
        %2059 = vmatpush2.msra.mxu0 0.0
        %2060 = vmatprep.subr.mxu0 0.0
        %2061 = vmatpush2.msra.mxu0 0.0
        %2062 = vmatprep.subr.mxu0 0.0
        %2063 = vmatpush2.msra.mxu0 0.0
        %2064 = vmatprep.subr.mxu0 0.0
        %2065 = vmatpush2.msra.mxu0 0.0
        %2066 = vmatprep.subr.mxu0 0.0
        %2067 = vmatpush2.msra.mxu0 0.0
        %2068 = vmatprep.subr.mxu0 0.0
        %2069 = vmatpush2.msra.mxu0 0.0
        %2070 = vmatprep.subr.mxu0 0.0
        %2071 = vmatpush2.msra.mxu0 0.0
        %2072 = vmatprep.mubr.f32.mxu0 0.0
        %v2073 = vand.u32 %v723, 4294901760
        %v2074 = vsub.f32 %v723, %v2073
        %2075 = vmatmul.mubr.f32.gmra.mxu0 %v2074
        %v2076 = vpop.f32.mrf.mxu0
        %v2077 = vadd.f32 %v1989, %v2076
        %v2078 = vpop.f32.mrf.mxu0
        %2079 = vmatprep.mubr.f32.mxu0 0.0
        %v2080 = vand.u32 %v726, 4294901760
        %v2081 = vsub.f32 %v726, %v2080
        %2082 = vmatmul.mubr.f32.gmra.mxu0 %v2081
        %v2083 = vpop.f32.mrf.mxu0
        %v2084 = vadd.f32 %v1995, %v2083
        %v2085 = vpop.f32.mrf.mxu0
        %2086 = vmatprep.mubr.f32.mxu0 0.0
        %v2087 = vand.u32 %v729, 4294901760
        %v2088 = vsub.f32 %v729, %v2087
        %2089 = vmatmul.mubr.f32.gmra.mxu0 %v2088
        %v2090 = vpop.f32.mrf.mxu0
        %v2091 = vadd.f32 %v2001, %v2090
        %v2092 = vpop.f32.mrf.mxu0
        %2093 = vdwg.mxu0
        %2094 = vmatprep.subr.mxu0 0.0
        %2095 = vmatpush1.msra.mxu0 0.0
        %2096 = vmatprep.subr.mxu0 0.0
        %2097 = vmatpush1.msra.mxu0 0.0
        %2098 = vmatprep.subr.mxu0 0.0
        %2099 = vmatpush1.msra.mxu0 0.0
        %2100 = vmatprep.subr.mxu0 0.0
        %2101 = vmatpush1.msra.mxu0 0.0
        %2102 = vmatprep.subr.mxu0 0.0
        %2103 = vmatpush1.msra.mxu0 0.0
        %2104 = vmatprep.subr.mxu0 0.0
        %2105 = vmatpush1.msra.mxu0 0.0
        %2106 = vmatprep.subr.mxu0 0.0
        %2107 = vmatpush1.msra.mxu0 0.0
        %2108 = vmatprep.subr.mxu0 0.0
        %2109 = vmatpush1.msra.mxu0 0.0
        %2110 = vmatprep.subr.mxu0 0.0
        %2111 = vmatpush1.msra.mxu0 0.0
        %2112 = vmatprep.subr.mxu0 0.0
        %2113 = vmatpush1.msra.mxu0 0.0
        %2114 = vmatprep.subr.mxu0 0.0
        %2115 = vmatpush1.msra.mxu0 0.0
        %2116 = vmatprep.subr.mxu0 0.0
        %2117 = vmatpush1.msra.mxu0 0.0
        %2118 = vmatprep.subr.mxu0 0.0
        %2119 = vmatpush1.msra.mxu0 0.0
        %2120 = vmatprep.subr.mxu0 0.0
        %2121 = vmatpush1.msra.mxu0 0.0
        %2122 = vmatprep.subr.mxu0 0.0
        %v2123 = vand.u32 %v1811, 4294901760
        %2124 = vmatpush1.msra.mxu0 %v2123
        %2125 = vmatprep.subr.mxu0 0.0
        %v2126 = vand.u32 %v1805, 4294901760
        %2127 = vmatpush1.msra.mxu0 %v2126
        %2128 = vmatprep.subr.mxu0 0.0
        %2129 = vmatpush2.msra.mxu0 0.0
        %2130 = vmatprep.subr.mxu0 0.0
        %2131 = vmatpush2.msra.mxu0 0.0
        %2132 = vmatprep.subr.mxu0 0.0
        %2133 = vmatpush2.msra.mxu0 0.0
        %2134 = vmatprep.subr.mxu0 0.0
        %2135 = vmatpush2.msra.mxu0 0.0
        %2136 = vmatprep.subr.mxu0 0.0
        %2137 = vmatpush2.msra.mxu0 0.0
        %2138 = vmatprep.subr.mxu0 0.0
        %2139 = vmatpush2.msra.mxu0 0.0
        %2140 = vmatprep.subr.mxu0 0.0
        %2141 = vmatpush2.msra.mxu0 0.0
        %2142 = vmatprep.subr.mxu0 0.0
        %2143 = vmatpush2.msra.mxu0 0.0
        %2144 = vmatprep.subr.mxu0 0.0
        %2145 = vmatpush2.msra.mxu0 0.0
        %2146 = vmatprep.subr.mxu0 0.0
        %2147 = vmatpush2.msra.mxu0 0.0
        %2148 = vmatprep.subr.mxu0 0.0
        %2149 = vmatpush2.msra.mxu0 0.0
        %2150 = vmatprep.subr.mxu0 0.0
        %2151 = vmatpush2.msra.mxu0 0.0
        %2152 = vmatprep.subr.mxu0 0.0
        %2153 = vmatpush2.msra.mxu0 0.0
        %2154 = vmatprep.subr.mxu0 0.0
        %2155 = vmatpush2.msra.mxu0 0.0
        %2156 = vmatprep.subr.mxu0 0.0
        %2157 = vmatpush2.msra.mxu0 0.0
        %2158 = vmatprep.subr.mxu0 0.0
        %2159 = vmatpush2.msra.mxu0 0.0
        %2160 = vmatprep.mubr.f32.mxu0 0.0
        %v2161 = vand.u32 %v723, 4294901760
        %v2162 = vsub.f32 %v723, %v2161
        %v2163 = vand.u32 %v2162, 4294901760
        %2164 = vmatmul.mubr.f32.gmra.mxu0 %v2163
        %v2165 = vpop.f32.mrf.mxu0
        %v2166 = vadd.f32 %v2077, %v2165
        %v2167 = vpop.f32.mrf.mxu0
        %2168 = vmatprep.mubr.f32.mxu0 0.0
        %v2169 = vand.u32 %v726, 4294901760
        %v2170 = vsub.f32 %v726, %v2169
        %v2171 = vand.u32 %v2170, 4294901760
        %2172 = vmatmul.mubr.f32.gmra.mxu0 %v2171
        %v2173 = vpop.f32.mrf.mxu0
        %v2174 = vadd.f32 %v2084, %v2173
        %v2175 = vpop.f32.mrf.mxu0
        %2176 = vmatprep.mubr.f32.mxu0 0.0
        %v2177 = vand.u32 %v729, 4294901760
        %v2178 = vsub.f32 %v729, %v2177
        %v2179 = vand.u32 %v2178, 4294901760
        %2180 = vmatmul.mubr.f32.gmra.mxu0 %v2179
        %v2181 = vpop.f32.mrf.mxu0
        %v2182 = vadd.f32 %v2091, %v2181
        %v2183 = vpop.f32.mrf.mxu0
        %2184 = vdwg.mxu0
        %2185 = vmatprep.subr.mxu0 0.0
        %2186 = vmatpush1.msra.mxu0 0.0
        %2187 = vmatprep.subr.mxu0 0.0
        %2188 = vmatpush1.msra.mxu0 0.0
        %2189 = vmatprep.subr.mxu0 0.0
        %2190 = vmatpush1.msra.mxu0 0.0
        %2191 = vmatprep.subr.mxu0 0.0
        %2192 = vmatpush1.msra.mxu0 0.0
        %2193 = vmatprep.subr.mxu0 0.0
        %2194 = vmatpush1.msra.mxu0 0.0
        %2195 = vmatprep.subr.mxu0 0.0
        %2196 = vmatpush1.msra.mxu0 0.0
        %2197 = vmatprep.subr.mxu0 0.0
        %2198 = vmatpush1.msra.mxu0 0.0
        %2199 = vmatprep.subr.mxu0 0.0
        %2200 = vmatpush1.msra.mxu0 0.0
        %2201 = vmatprep.subr.mxu0 0.0
        %2202 = vmatpush1.msra.mxu0 0.0
        %2203 = vmatprep.subr.mxu0 0.0
        %2204 = vmatpush1.msra.mxu0 0.0
        %2205 = vmatprep.subr.mxu0 0.0
        %2206 = vmatpush1.msra.mxu0 0.0
        %2207 = vmatprep.subr.mxu0 0.0
        %2208 = vmatpush1.msra.mxu0 0.0
        %2209 = vmatprep.subr.mxu0 0.0
        %2210 = vmatpush1.msra.mxu0 0.0
        %2211 = vmatprep.subr.mxu0 0.0
        %2212 = vmatpush1.msra.mxu0 0.0
        %2213 = vmatprep.subr.mxu0 0.0
        %v2214 = vand.u32 %v1811, 4294901760
        %v2215 = vsub.f32 %v1811, %v2214
        %v2216 = vand.u32 %v2215, 4294901760
        %2217 = vmatpush1.msra.mxu0 %v2216
        %2218 = vmatprep.subr.mxu0 0.0
        %v2219 = vand.u32 %v1805, 4294901760
        %v2220 = vsub.f32 %v1805, %v2219
        %v2221 = vand.u32 %v2220, 4294901760
        %2222 = vmatpush1.msra.mxu0 %v2221
        %2223 = vmatprep.subr.mxu0 0.0
        %2224 = vmatpush2.msra.mxu0 0.0
        %2225 = vmatprep.subr.mxu0 0.0
        %2226 = vmatpush2.msra.mxu0 0.0
        %2227 = vmatprep.subr.mxu0 0.0
        %2228 = vmatpush2.msra.mxu0 0.0
        %2229 = vmatprep.subr.mxu0 0.0
        %2230 = vmatpush2.msra.mxu0 0.0
        %2231 = vmatprep.subr.mxu0 0.0
        %2232 = vmatpush2.msra.mxu0 0.0
        %2233 = vmatprep.subr.mxu0 0.0
        %2234 = vmatpush2.msra.mxu0 0.0
        %2235 = vmatprep.subr.mxu0 0.0
        %2236 = vmatpush2.msra.mxu0 0.0
        %2237 = vmatprep.subr.mxu0 0.0
        %2238 = vmatpush2.msra.mxu0 0.0
        %2239 = vmatprep.subr.mxu0 0.0
        %2240 = vmatpush2.msra.mxu0 0.0
        %2241 = vmatprep.subr.mxu0 0.0
        %2242 = vmatpush2.msra.mxu0 0.0
        %2243 = vmatprep.subr.mxu0 0.0
        %2244 = vmatpush2.msra.mxu0 0.0
        %2245 = vmatprep.subr.mxu0 0.0
        %2246 = vmatpush2.msra.mxu0 0.0
        %2247 = vmatprep.subr.mxu0 0.0
        %2248 = vmatpush2.msra.mxu0 0.0
        %2249 = vmatprep.subr.mxu0 0.0
        %2250 = vmatpush2.msra.mxu0 0.0
        %2251 = vmatprep.subr.mxu0 0.0
        %2252 = vmatpush2.msra.mxu0 0.0
        %2253 = vmatprep.subr.mxu0 0.0
        %2254 = vmatpush2.msra.mxu0 0.0
        %2255 = vmatprep.mubr.f32.mxu0 0.0
        %v2256 = vand.u32 %v723, 4294901760
        %2257 = vmatmul.mubr.f32.gmra.mxu0 %v2256
        %v2258 = vpop.f32.mrf.mxu0
        %v2259 = vadd.f32 %v2166, %v2258
        %v2260 = vpop.f32.mrf.mxu0
        %2261 = vmatprep.mubr.f32.mxu0 0.0
        %v2262 = vand.u32 %v726, 4294901760
        %2263 = vmatmul.mubr.f32.gmra.mxu0 %v2262
        %v2264 = vpop.f32.mrf.mxu0
        %v2265 = vadd.f32 %v2174, %v2264
        %v2266 = vpop.f32.mrf.mxu0
        %2267 = vmatprep.mubr.f32.mxu0 0.0
        %v2268 = vand.u32 %v729, 4294901760
        %2269 = vmatmul.mubr.f32.gmra.mxu0 %v2268
        %v2270 = vpop.f32.mrf.mxu0
        %v2271 = vadd.f32 %v2182, %v2270
        %v2272 = vpop.f32.mrf.mxu0
        %2273 = vdwg.mxu0
        %2274 = vmatprep.subr.mxu0 0.0
        %2275 = vmatpush1.msra.mxu0 0.0
        %2276 = vmatprep.subr.mxu0 0.0
        %2277 = vmatpush1.msra.mxu0 0.0
        %2278 = vmatprep.subr.mxu0 0.0
        %2279 = vmatpush1.msra.mxu0 0.0
        %2280 = vmatprep.subr.mxu0 0.0
        %2281 = vmatpush1.msra.mxu0 0.0
        %2282 = vmatprep.subr.mxu0 0.0
        %2283 = vmatpush1.msra.mxu0 0.0
        %2284 = vmatprep.subr.mxu0 0.0
        %2285 = vmatpush1.msra.mxu0 0.0
        %2286 = vmatprep.subr.mxu0 0.0
        %2287 = vmatpush1.msra.mxu0 0.0
        %2288 = vmatprep.subr.mxu0 0.0
        %2289 = vmatpush1.msra.mxu0 0.0
        %2290 = vmatprep.subr.mxu0 0.0
        %2291 = vmatpush1.msra.mxu0 0.0
        %2292 = vmatprep.subr.mxu0 0.0
        %2293 = vmatpush1.msra.mxu0 0.0
        %2294 = vmatprep.subr.mxu0 0.0
        %2295 = vmatpush1.msra.mxu0 0.0
        %2296 = vmatprep.subr.mxu0 0.0
        %2297 = vmatpush1.msra.mxu0 0.0
        %2298 = vmatprep.subr.mxu0 0.0
        %2299 = vmatpush1.msra.mxu0 0.0
        %2300 = vmatprep.subr.mxu0 0.0
        %2301 = vmatpush1.msra.mxu0 0.0
        %2302 = vmatprep.subr.mxu0 0.0
        %v2303 = vand.u32 %v1811, 4294901760
        %2304 = vmatpush1.msra.mxu0 %v2303
        %2305 = vmatprep.subr.mxu0 0.0
        %v2306 = vand.u32 %v1805, 4294901760
        %2307 = vmatpush1.msra.mxu0 %v2306
        %2308 = vmatprep.subr.mxu0 0.0
        %2309 = vmatpush2.msra.mxu0 0.0
        %2310 = vmatprep.subr.mxu0 0.0
        %2311 = vmatpush2.msra.mxu0 0.0
        %2312 = vmatprep.subr.mxu0 0.0
        %2313 = vmatpush2.msra.mxu0 0.0
        %2314 = vmatprep.subr.mxu0 0.0
        %2315 = vmatpush2.msra.mxu0 0.0
        %2316 = vmatprep.subr.mxu0 0.0
        %2317 = vmatpush2.msra.mxu0 0.0
        %2318 = vmatprep.subr.mxu0 0.0
        %2319 = vmatpush2.msra.mxu0 0.0
        %2320 = vmatprep.subr.mxu0 0.0
        %2321 = vmatpush2.msra.mxu0 0.0
        %2322 = vmatprep.subr.mxu0 0.0
        %2323 = vmatpush2.msra.mxu0 0.0
        %2324 = vmatprep.subr.mxu0 0.0
        %2325 = vmatpush2.msra.mxu0 0.0
        %2326 = vmatprep.subr.mxu0 0.0
        %2327 = vmatpush2.msra.mxu0 0.0
        %2328 = vmatprep.subr.mxu0 0.0
        %2329 = vmatpush2.msra.mxu0 0.0
        %2330 = vmatprep.subr.mxu0 0.0
        %2331 = vmatpush2.msra.mxu0 0.0
        %2332 = vmatprep.subr.mxu0 0.0
        %2333 = vmatpush2.msra.mxu0 0.0
        %2334 = vmatprep.subr.mxu0 0.0
        %2335 = vmatpush2.msra.mxu0 0.0
        %2336 = vmatprep.subr.mxu0 0.0
        %2337 = vmatpush2.msra.mxu0 0.0
        %2338 = vmatprep.subr.mxu0 0.0
        %2339 = vmatpush2.msra.mxu0 0.0
        %2340 = vmatprep.mubr.f32.mxu0 0.0
        %v2341 = vand.u32 %v723, 4294901760
        %2342 = vmatmul.mubr.f32.gmra.mxu0 %v2341
        %v2343 = vpop.f32.mrf.mxu0
        %v2344 = vadd.f32 %v2259, %v2343
        %v2345 = vpop.f32.mrf.mxu0
        %2346 = vmatprep.mubr.f32.mxu0 0.0
        %v2347 = vand.u32 %v726, 4294901760
        %2348 = vmatmul.mubr.f32.gmra.mxu0 %v2347
        %v2349 = vpop.f32.mrf.mxu0
        %v2350 = vadd.f32 %v2265, %v2349
        %v2351 = vpop.f32.mrf.mxu0
        %2352 = vmatprep.mubr.f32.mxu0 0.0
        %v2353 = vand.u32 %v729, 4294901760
        %2354 = vmatmul.mubr.f32.gmra.mxu0 %v2353
        %v2355 = vpop.f32.mrf.mxu0
        %v2356 = vadd.f32 %v2271, %v2355
        %v2357 = vpop.f32.mrf.mxu0
        %2358 = vdwg.mxu0
        %s2359 = scalar_lea.vmem %s203, 16 [#allocation4]
        %2360 = vst.msk [vmem:[%s2359] sm:$0xff] %vm1276, %v2344
        %2361 = vst.msk [vmem:[%s2359 + $0x8] sm:$0x1] %vm1278, %v2350
        %2364 = vrot.lane.b32.xlu0 %v2344, 119
        %v2365 = vpop.permute.xlu0 %2364
        %2366 = vrot.lane.b32.xlu0 %v2350, 119
        %v2367 = vpop.permute.xlu0 %2366
        %s2370 = scalar_lea.vmem %s203, 80 [#allocation4]
        %2371 = vst.msk [vmem:[%s2370] sm:$0xff] %vm1276, %v2365
        %2372 = vst.msk [vmem:[%s2370 + $0x8] sm:$0x1] %vm1278, %v2367
        %s2373 = scalar_lea.vmem %s203, 144 [#allocation4]
        %2374 = vst.msk [vmem:[%s2373 - $0x1] sm:$0xfe] %vm1292, %v2350
        %2375 = vst.msk [vmem:[%s2373 + $0x7] sm:$0x3] %vm1294, %v2356
        %2377 = vrot.lane.b32.xlu0 %v2356, 119
        %v2378 = vpop.permute.xlu0 %2377
        %s2380 = scalar_lea.vmem %s203, 208 [#allocation4]
        %2381 = vst.msk [vmem:[%s2380 - $0x1] sm:$0xfe] %vm1292, %v2367
        %2382 = vst.msk [vmem:[%s2380 + $0x7] sm:$0x3] %vm1294, %v2378
        %s2383 = scalar_lea.vmem %s182, 32 [#allocation2]
        %v2384 = vld [vmem:[%s2383] sm:$0xff]
        %v2385 = vld [vmem:[%s2383 + $0x8] sm:$0xff]
        %v2387 = vsel %vm213, %v2384, 0
        %v2390 = vsel %vm213, %v2385, 0
        %2392 = vmatprep.subr.mxu0 0.0
        %2393 = vmatpush1.msra.mxu0 0.0
        %2394 = vmatprep.subr.mxu0 0.0
        %2395 = vmatpush1.msra.mxu0 0.0
        %2396 = vmatprep.subr.mxu0 0.0
        %2397 = vmatpush1.msra.mxu0 0.0
        %2398 = vmatprep.subr.mxu0 0.0
        %2399 = vmatpush1.msra.mxu0 0.0
        %2400 = vmatprep.subr.mxu0 0.0
        %2401 = vmatpush1.msra.mxu0 0.0
        %2402 = vmatprep.subr.mxu0 0.0
        %2403 = vmatpush1.msra.mxu0 0.0
        %2404 = vmatprep.subr.mxu0 0.0
        %2405 = vmatpush1.msra.mxu0 0.0
        %2406 = vmatprep.subr.mxu0 0.0
        %2407 = vmatpush1.msra.mxu0 0.0
        %2408 = vmatprep.subr.mxu0 0.0
        %2409 = vmatpush1.msra.mxu0 0.0
        %2410 = vmatprep.subr.mxu0 0.0
        %2411 = vmatpush1.msra.mxu0 0.0
        %2412 = vmatprep.subr.mxu0 0.0
        %2413 = vmatpush1.msra.mxu0 0.0
        %2414 = vmatprep.subr.mxu0 0.0
        %2415 = vmatpush1.msra.mxu0 0.0
        %2416 = vmatprep.subr.mxu0 0.0
        %2417 = vmatpush1.msra.mxu0 0.0
        %2418 = vmatprep.subr.mxu0 0.0
        %2419 = vmatpush1.msra.mxu0 0.0
        %2420 = vmatprep.subr.mxu0 0.0
        %v2421 = vand.u32 %v210, 4294901760
        %2422 = vmatpush1.msra.mxu0 %v2421
        %2423 = vmatprep.subr.mxu0 0.0
        %v2424 = vand.u32 %v209, 4294901760
        %2425 = vmatpush1.msra.mxu0 %v2424
        %2426 = vmatprep.subr.mxu0 0.0
        %2427 = vmatpush2.msra.mxu0 0.0
        %2428 = vmatprep.subr.mxu0 0.0
        %2429 = vmatpush2.msra.mxu0 0.0
        %2430 = vmatprep.subr.mxu0 0.0
        %2431 = vmatpush2.msra.mxu0 0.0
        %2432 = vmatprep.subr.mxu0 0.0
        %2433 = vmatpush2.msra.mxu0 0.0
        %2434 = vmatprep.subr.mxu0 0.0
        %2435 = vmatpush2.msra.mxu0 0.0
        %2436 = vmatprep.subr.mxu0 0.0
        %2437 = vmatpush2.msra.mxu0 0.0
        %2438 = vmatprep.subr.mxu0 0.0
        %2439 = vmatpush2.msra.mxu0 0.0
        %2440 = vmatprep.subr.mxu0 0.0
        %2441 = vmatpush2.msra.mxu0 0.0
        %2442 = vmatprep.subr.mxu0 0.0
        %2443 = vmatpush2.msra.mxu0 0.0
        %2444 = vmatprep.subr.mxu0 0.0
        %2445 = vmatpush2.msra.mxu0 0.0
        %2446 = vmatprep.subr.mxu0 0.0
        %2447 = vmatpush2.msra.mxu0 0.0
        %2448 = vmatprep.subr.mxu0 0.0
        %2449 = vmatpush2.msra.mxu0 0.0
        %2450 = vmatprep.subr.mxu0 0.0
        %2451 = vmatpush2.msra.mxu0 0.0
        %2452 = vmatprep.subr.mxu0 0.0
        %2453 = vmatpush2.msra.mxu0 0.0
        %2454 = vmatprep.subr.mxu0 0.0
        %2455 = vmatpush2.msra.mxu0 0.0
        %2456 = vmatprep.subr.mxu0 0.0
        %2457 = vmatpush2.msra.mxu0 0.0
        %2458 = vmatprep.mubr.f32.mxu0 0.0
        %v2459 = vand.u32 %v2387, 4294901760
        %v2460 = vsub.f32 %v2387, %v2459
        %v2461 = vand.u32 %v2460, 4294901760
        %v2462 = vsub.f32 %v2460, %v2461
        %v2463 = vand.u32 %v2462, 4294901760
        %2464 = vmatmul.mubr.f32.gmra.mxu0 %v2463
        %v2465 = vpop.f32.mrf.mxu0
        %v2466 = vadd.f32 0.0, %v2465
        %v2467 = vpop.f32.mrf.mxu0
        %2468 = vmatprep.mubr.f32.mxu0 0.0
        %v2469 = vand.u32 %v2390, 4294901760
        %v2470 = vsub.f32 %v2390, %v2469
        %v2471 = vand.u32 %v2470, 4294901760
        %v2472 = vsub.f32 %v2470, %v2471
        %v2473 = vand.u32 %v2472, 4294901760
        %2474 = vmatmul.mubr.f32.gmra.mxu0 %v2473
        %v2475 = vpop.f32.mrf.mxu0
        %v2476 = vadd.f32 0.0, %v2475
        %v2477 = vpop.f32.mrf.mxu0
        %2478 = vdwg.mxu0
        %2479 = vmatprep.subr.mxu0 0.0
        %2480 = vmatpush1.msra.mxu0 0.0
        %2481 = vmatprep.subr.mxu0 0.0
        %2482 = vmatpush1.msra.mxu0 0.0
        %2483 = vmatprep.subr.mxu0 0.0
        %2484 = vmatpush1.msra.mxu0 0.0
        %2485 = vmatprep.subr.mxu0 0.0
        %2486 = vmatpush1.msra.mxu0 0.0
        %2487 = vmatprep.subr.mxu0 0.0
        %2488 = vmatpush1.msra.mxu0 0.0
        %2489 = vmatprep.subr.mxu0 0.0
        %2490 = vmatpush1.msra.mxu0 0.0
        %2491 = vmatprep.subr.mxu0 0.0
        %2492 = vmatpush1.msra.mxu0 0.0
        %2493 = vmatprep.subr.mxu0 0.0
        %2494 = vmatpush1.msra.mxu0 0.0
        %2495 = vmatprep.subr.mxu0 0.0
        %2496 = vmatpush1.msra.mxu0 0.0
        %2497 = vmatprep.subr.mxu0 0.0
        %2498 = vmatpush1.msra.mxu0 0.0
        %2499 = vmatprep.subr.mxu0 0.0
        %2500 = vmatpush1.msra.mxu0 0.0
        %2501 = vmatprep.subr.mxu0 0.0
        %2502 = vmatpush1.msra.mxu0 0.0
        %2503 = vmatprep.subr.mxu0 0.0
        %2504 = vmatpush1.msra.mxu0 0.0
        %2505 = vmatprep.subr.mxu0 0.0
        %2506 = vmatpush1.msra.mxu0 0.0
        %2507 = vmatprep.subr.mxu0 0.0
        %v2508 = vand.u32 %v210, 4294901760
        %v2509 = vsub.f32 %v210, %v2508
        %v2510 = vand.u32 %v2509, 4294901760
        %v2511 = vsub.f32 %v2509, %v2510
        %v2512 = vand.u32 %v2511, 4294901760
        %2513 = vmatpush1.msra.mxu0 %v2512
        %2514 = vmatprep.subr.mxu0 0.0
        %v2515 = vand.u32 %v209, 4294901760
        %v2516 = vsub.f32 %v209, %v2515
        %v2517 = vand.u32 %v2516, 4294901760
        %v2518 = vsub.f32 %v2516, %v2517
        %v2519 = vand.u32 %v2518, 4294901760
        %2520 = vmatpush1.msra.mxu0 %v2519
        %2521 = vmatprep.subr.mxu0 0.0
        %2522 = vmatpush2.msra.mxu0 0.0
        %2523 = vmatprep.subr.mxu0 0.0
        %2524 = vmatpush2.msra.mxu0 0.0
        %2525 = vmatprep.subr.mxu0 0.0
        %2526 = vmatpush2.msra.mxu0 0.0
        %2527 = vmatprep.subr.mxu0 0.0
        %2528 = vmatpush2.msra.mxu0 0.0
        %2529 = vmatprep.subr.mxu0 0.0
        %2530 = vmatpush2.msra.mxu0 0.0
        %2531 = vmatprep.subr.mxu0 0.0
        %2532 = vmatpush2.msra.mxu0 0.0
        %2533 = vmatprep.subr.mxu0 0.0
        %2534 = vmatpush2.msra.mxu0 0.0
        %2535 = vmatprep.subr.mxu0 0.0
        %2536 = vmatpush2.msra.mxu0 0.0
        %2537 = vmatprep.subr.mxu0 0.0
        %2538 = vmatpush2.msra.mxu0 0.0
        %2539 = vmatprep.subr.mxu0 0.0
        %2540 = vmatpush2.msra.mxu0 0.0
        %2541 = vmatprep.subr.mxu0 0.0
        %2542 = vmatpush2.msra.mxu0 0.0
        %2543 = vmatprep.subr.mxu0 0.0
        %2544 = vmatpush2.msra.mxu0 0.0
        %2545 = vmatprep.subr.mxu0 0.0
        %2546 = vmatpush2.msra.mxu0 0.0
        %2547 = vmatprep.subr.mxu0 0.0
        %2548 = vmatpush2.msra.mxu0 0.0
        %2549 = vmatprep.subr.mxu0 0.0
        %2550 = vmatpush2.msra.mxu0 0.0
        %2551 = vmatprep.subr.mxu0 0.0
        %2552 = vmatpush2.msra.mxu0 0.0
        %2553 = vmatprep.mubr.f32.mxu0 0.0
        %v2554 = vand.u32 %v2387, 4294901760
        %2555 = vmatmul.mubr.f32.gmra.mxu0 %v2554
        %v2556 = vpop.f32.mrf.mxu0
        %v2557 = vadd.f32 %v2466, %v2556
        %v2558 = vpop.f32.mrf.mxu0
        %2559 = vmatprep.mubr.f32.mxu0 0.0
        %v2560 = vand.u32 %v2390, 4294901760
        %2561 = vmatmul.mubr.f32.gmra.mxu0 %v2560
        %v2562 = vpop.f32.mrf.mxu0
        %v2563 = vadd.f32 %v2476, %v2562
        %v2564 = vpop.f32.mrf.mxu0
        %2565 = vdwg.mxu0
        %2566 = vmatprep.subr.mxu0 0.0
        %2567 = vmatpush1.msra.mxu0 0.0
        %2568 = vmatprep.subr.mxu0 0.0
        %2569 = vmatpush1.msra.mxu0 0.0
        %2570 = vmatprep.subr.mxu0 0.0
        %2571 = vmatpush1.msra.mxu0 0.0
        %2572 = vmatprep.subr.mxu0 0.0
        %2573 = vmatpush1.msra.mxu0 0.0
        %2574 = vmatprep.subr.mxu0 0.0
        %2575 = vmatpush1.msra.mxu0 0.0
        %2576 = vmatprep.subr.mxu0 0.0
        %2577 = vmatpush1.msra.mxu0 0.0
        %2578 = vmatprep.subr.mxu0 0.0
        %2579 = vmatpush1.msra.mxu0 0.0
        %2580 = vmatprep.subr.mxu0 0.0
        %2581 = vmatpush1.msra.mxu0 0.0
        %2582 = vmatprep.subr.mxu0 0.0
        %2583 = vmatpush1.msra.mxu0 0.0
        %2584 = vmatprep.subr.mxu0 0.0
        %2585 = vmatpush1.msra.mxu0 0.0
        %2586 = vmatprep.subr.mxu0 0.0
        %2587 = vmatpush1.msra.mxu0 0.0
        %2588 = vmatprep.subr.mxu0 0.0
        %2589 = vmatpush1.msra.mxu0 0.0
        %2590 = vmatprep.subr.mxu0 0.0
        %2591 = vmatpush1.msra.mxu0 0.0
        %2592 = vmatprep.subr.mxu0 0.0
        %2593 = vmatpush1.msra.mxu0 0.0
        %2594 = vmatprep.subr.mxu0 0.0
        %v2595 = vand.u32 %v210, 4294901760
        %v2596 = vsub.f32 %v210, %v2595
        %2597 = vmatpush1.msra.mxu0 %v2596
        %2598 = vmatprep.subr.mxu0 0.0
        %v2599 = vand.u32 %v209, 4294901760
        %v2600 = vsub.f32 %v209, %v2599
        %2601 = vmatpush1.msra.mxu0 %v2600
        %2602 = vmatprep.subr.mxu0 0.0
        %2603 = vmatpush2.msra.mxu0 0.0
        %2604 = vmatprep.subr.mxu0 0.0
        %2605 = vmatpush2.msra.mxu0 0.0
        %2606 = vmatprep.subr.mxu0 0.0
        %2607 = vmatpush2.msra.mxu0 0.0
        %2608 = vmatprep.subr.mxu0 0.0
        %2609 = vmatpush2.msra.mxu0 0.0
        %2610 = vmatprep.subr.mxu0 0.0
        %2611 = vmatpush2.msra.mxu0 0.0
        %2612 = vmatprep.subr.mxu0 0.0
        %2613 = vmatpush2.msra.mxu0 0.0
        %2614 = vmatprep.subr.mxu0 0.0
        %2615 = vmatpush2.msra.mxu0 0.0
        %2616 = vmatprep.subr.mxu0 0.0
        %2617 = vmatpush2.msra.mxu0 0.0
        %2618 = vmatprep.subr.mxu0 0.0
        %2619 = vmatpush2.msra.mxu0 0.0
        %2620 = vmatprep.subr.mxu0 0.0
        %2621 = vmatpush2.msra.mxu0 0.0
        %2622 = vmatprep.subr.mxu0 0.0
        %2623 = vmatpush2.msra.mxu0 0.0
        %2624 = vmatprep.subr.mxu0 0.0
        %2625 = vmatpush2.msra.mxu0 0.0
        %2626 = vmatprep.subr.mxu0 0.0
        %2627 = vmatpush2.msra.mxu0 0.0
        %2628 = vmatprep.subr.mxu0 0.0
        %2629 = vmatpush2.msra.mxu0 0.0
        %2630 = vmatprep.subr.mxu0 0.0
        %2631 = vmatpush2.msra.mxu0 0.0
        %2632 = vmatprep.subr.mxu0 0.0
        %2633 = vmatpush2.msra.mxu0 0.0
        %2634 = vmatprep.mubr.f32.mxu0 0.0
        %v2635 = vand.u32 %v2387, 4294901760
        %v2636 = vsub.f32 %v2387, %v2635
        %2637 = vmatmul.mubr.f32.gmra.mxu0 %v2636
        %v2638 = vpop.f32.mrf.mxu0
        %v2639 = vadd.f32 %v2557, %v2638
        %v2640 = vpop.f32.mrf.mxu0
        %2641 = vmatprep.mubr.f32.mxu0 0.0
        %v2642 = vand.u32 %v2390, 4294901760
        %v2643 = vsub.f32 %v2390, %v2642
        %2644 = vmatmul.mubr.f32.gmra.mxu0 %v2643
        %v2645 = vpop.f32.mrf.mxu0
        %v2646 = vadd.f32 %v2563, %v2645
        %v2647 = vpop.f32.mrf.mxu0
        %2648 = vdwg.mxu0
        %2649 = vmatprep.subr.mxu0 0.0
        %2650 = vmatpush1.msra.mxu0 0.0
        %2651 = vmatprep.subr.mxu0 0.0
        %2652 = vmatpush1.msra.mxu0 0.0
        %2653 = vmatprep.subr.mxu0 0.0
        %2654 = vmatpush1.msra.mxu0 0.0
        %2655 = vmatprep.subr.mxu0 0.0
        %2656 = vmatpush1.msra.mxu0 0.0
        %2657 = vmatprep.subr.mxu0 0.0
        %2658 = vmatpush1.msra.mxu0 0.0
        %2659 = vmatprep.subr.mxu0 0.0
        %2660 = vmatpush1.msra.mxu0 0.0
        %2661 = vmatprep.subr.mxu0 0.0
        %2662 = vmatpush1.msra.mxu0 0.0
        %2663 = vmatprep.subr.mxu0 0.0
        %2664 = vmatpush1.msra.mxu0 0.0
        %2665 = vmatprep.subr.mxu0 0.0
        %2666 = vmatpush1.msra.mxu0 0.0
        %2667 = vmatprep.subr.mxu0 0.0
        %2668 = vmatpush1.msra.mxu0 0.0
        %2669 = vmatprep.subr.mxu0 0.0
        %2670 = vmatpush1.msra.mxu0 0.0
        %2671 = vmatprep.subr.mxu0 0.0
        %2672 = vmatpush1.msra.mxu0 0.0
        %2673 = vmatprep.subr.mxu0 0.0
        %2674 = vmatpush1.msra.mxu0 0.0
        %2675 = vmatprep.subr.mxu0 0.0
        %2676 = vmatpush1.msra.mxu0 0.0
        %2677 = vmatprep.subr.mxu0 0.0
        %v2678 = vand.u32 %v210, 4294901760
        %2679 = vmatpush1.msra.mxu0 %v2678
        %2680 = vmatprep.subr.mxu0 0.0
        %v2681 = vand.u32 %v209, 4294901760
        %2682 = vmatpush1.msra.mxu0 %v2681
        %2683 = vmatprep.subr.mxu0 0.0
        %2684 = vmatpush2.msra.mxu0 0.0
        %2685 = vmatprep.subr.mxu0 0.0
        %2686 = vmatpush2.msra.mxu0 0.0
        %2687 = vmatprep.subr.mxu0 0.0
        %2688 = vmatpush2.msra.mxu0 0.0
        %2689 = vmatprep.subr.mxu0 0.0
        %2690 = vmatpush2.msra.mxu0 0.0
        %2691 = vmatprep.subr.mxu0 0.0
        %2692 = vmatpush2.msra.mxu0 0.0
        %2693 = vmatprep.subr.mxu0 0.0
        %2694 = vmatpush2.msra.mxu0 0.0
        %2695 = vmatprep.subr.mxu0 0.0
        %2696 = vmatpush2.msra.mxu0 0.0
        %2697 = vmatprep.subr.mxu0 0.0
        %2698 = vmatpush2.msra.mxu0 0.0
        %2699 = vmatprep.subr.mxu0 0.0
        %2700 = vmatpush2.msra.mxu0 0.0
        %2701 = vmatprep.subr.mxu0 0.0
        %2702 = vmatpush2.msra.mxu0 0.0
        %2703 = vmatprep.subr.mxu0 0.0
        %2704 = vmatpush2.msra.mxu0 0.0
        %2705 = vmatprep.subr.mxu0 0.0
        %2706 = vmatpush2.msra.mxu0 0.0
        %2707 = vmatprep.subr.mxu0 0.0
        %2708 = vmatpush2.msra.mxu0 0.0
        %2709 = vmatprep.subr.mxu0 0.0
        %2710 = vmatpush2.msra.mxu0 0.0
        %2711 = vmatprep.subr.mxu0 0.0
        %2712 = vmatpush2.msra.mxu0 0.0
        %2713 = vmatprep.subr.mxu0 0.0
        %2714 = vmatpush2.msra.mxu0 0.0
        %2715 = vmatprep.mubr.f32.mxu0 0.0
        %v2716 = vand.u32 %v2387, 4294901760
        %v2717 = vsub.f32 %v2387, %v2716
        %v2718 = vand.u32 %v2717, 4294901760
        %2719 = vmatmul.mubr.f32.gmra.mxu0 %v2718
        %v2720 = vpop.f32.mrf.mxu0
        %v2721 = vadd.f32 %v2639, %v2720
        %v2722 = vpop.f32.mrf.mxu0
        %2723 = vmatprep.mubr.f32.mxu0 0.0
        %v2724 = vand.u32 %v2390, 4294901760
        %v2725 = vsub.f32 %v2390, %v2724
        %v2726 = vand.u32 %v2725, 4294901760
        %2727 = vmatmul.mubr.f32.gmra.mxu0 %v2726
        %v2728 = vpop.f32.mrf.mxu0
        %v2729 = vadd.f32 %v2646, %v2728
        %v2730 = vpop.f32.mrf.mxu0
        %2731 = vdwg.mxu0
        %2732 = vmatprep.subr.mxu0 0.0
        %2733 = vmatpush1.msra.mxu0 0.0
        %2734 = vmatprep.subr.mxu0 0.0
        %2735 = vmatpush1.msra.mxu0 0.0
        %2736 = vmatprep.subr.mxu0 0.0
        %2737 = vmatpush1.msra.mxu0 0.0
        %2738 = vmatprep.subr.mxu0 0.0
        %2739 = vmatpush1.msra.mxu0 0.0
        %2740 = vmatprep.subr.mxu0 0.0
        %2741 = vmatpush1.msra.mxu0 0.0
        %2742 = vmatprep.subr.mxu0 0.0
        %2743 = vmatpush1.msra.mxu0 0.0
        %2744 = vmatprep.subr.mxu0 0.0
        %2745 = vmatpush1.msra.mxu0 0.0
        %2746 = vmatprep.subr.mxu0 0.0
        %2747 = vmatpush1.msra.mxu0 0.0
        %2748 = vmatprep.subr.mxu0 0.0
        %2749 = vmatpush1.msra.mxu0 0.0
        %2750 = vmatprep.subr.mxu0 0.0
        %2751 = vmatpush1.msra.mxu0 0.0
        %2752 = vmatprep.subr.mxu0 0.0
        %2753 = vmatpush1.msra.mxu0 0.0
        %2754 = vmatprep.subr.mxu0 0.0
        %2755 = vmatpush1.msra.mxu0 0.0
        %2756 = vmatprep.subr.mxu0 0.0
        %2757 = vmatpush1.msra.mxu0 0.0
        %2758 = vmatprep.subr.mxu0 0.0
        %2759 = vmatpush1.msra.mxu0 0.0
        %2760 = vmatprep.subr.mxu0 0.0
        %v2761 = vand.u32 %v210, 4294901760
        %v2762 = vsub.f32 %v210, %v2761
        %v2763 = vand.u32 %v2762, 4294901760
        %2764 = vmatpush1.msra.mxu0 %v2763
        %2765 = vmatprep.subr.mxu0 0.0
        %v2766 = vand.u32 %v209, 4294901760
        %v2767 = vsub.f32 %v209, %v2766
        %v2768 = vand.u32 %v2767, 4294901760
        %2769 = vmatpush1.msra.mxu0 %v2768
        %2770 = vmatprep.subr.mxu0 0.0
        %2771 = vmatpush2.msra.mxu0 0.0
        %2772 = vmatprep.subr.mxu0 0.0
        %2773 = vmatpush2.msra.mxu0 0.0
        %2774 = vmatprep.subr.mxu0 0.0
        %2775 = vmatpush2.msra.mxu0 0.0
        %2776 = vmatprep.subr.mxu0 0.0
        %2777 = vmatpush2.msra.mxu0 0.0
        %2778 = vmatprep.subr.mxu0 0.0
        %2779 = vmatpush2.msra.mxu0 0.0
        %2780 = vmatprep.subr.mxu0 0.0
        %2781 = vmatpush2.msra.mxu0 0.0
        %2782 = vmatprep.subr.mxu0 0.0
        %2783 = vmatpush2.msra.mxu0 0.0
        %2784 = vmatprep.subr.mxu0 0.0
        %2785 = vmatpush2.msra.mxu0 0.0
        %2786 = vmatprep.subr.mxu0 0.0
        %2787 = vmatpush2.msra.mxu0 0.0
        %2788 = vmatprep.subr.mxu0 0.0
        %2789 = vmatpush2.msra.mxu0 0.0
        %2790 = vmatprep.subr.mxu0 0.0
        %2791 = vmatpush2.msra.mxu0 0.0
        %2792 = vmatprep.subr.mxu0 0.0
        %2793 = vmatpush2.msra.mxu0 0.0
        %2794 = vmatprep.subr.mxu0 0.0
        %2795 = vmatpush2.msra.mxu0 0.0
        %2796 = vmatprep.subr.mxu0 0.0
        %2797 = vmatpush2.msra.mxu0 0.0
        %2798 = vmatprep.subr.mxu0 0.0
        %2799 = vmatpush2.msra.mxu0 0.0
        %2800 = vmatprep.subr.mxu0 0.0
        %2801 = vmatpush2.msra.mxu0 0.0
        %2802 = vmatprep.mubr.f32.mxu0 0.0
        %v2803 = vand.u32 %v2387, 4294901760
        %2804 = vmatmul.mubr.f32.gmra.mxu0 %v2803
        %v2805 = vpop.f32.mrf.mxu0
        %v2806 = vadd.f32 %v2721, %v2805
        %v2807 = vpop.f32.mrf.mxu0
        %2808 = vmatprep.mubr.f32.mxu0 0.0
        %v2809 = vand.u32 %v2390, 4294901760
        %2810 = vmatmul.mubr.f32.gmra.mxu0 %v2809
        %v2811 = vpop.f32.mrf.mxu0
        %v2812 = vadd.f32 %v2729, %v2811
        %v2813 = vpop.f32.mrf.mxu0
        %2814 = vdwg.mxu0
        %2815 = vmatprep.subr.mxu0 0.0
        %2816 = vmatpush1.msra.mxu0 0.0
        %2817 = vmatprep.subr.mxu0 0.0
        %2818 = vmatpush1.msra.mxu0 0.0
        %2819 = vmatprep.subr.mxu0 0.0
        %2820 = vmatpush1.msra.mxu0 0.0
        %2821 = vmatprep.subr.mxu0 0.0
        %2822 = vmatpush1.msra.mxu0 0.0
        %2823 = vmatprep.subr.mxu0 0.0
        %2824 = vmatpush1.msra.mxu0 0.0
        %2825 = vmatprep.subr.mxu0 0.0
        %2826 = vmatpush1.msra.mxu0 0.0
        %2827 = vmatprep.subr.mxu0 0.0
        %2828 = vmatpush1.msra.mxu0 0.0
        %2829 = vmatprep.subr.mxu0 0.0
        %2830 = vmatpush1.msra.mxu0 0.0
        %2831 = vmatprep.subr.mxu0 0.0
        %2832 = vmatpush1.msra.mxu0 0.0
        %2833 = vmatprep.subr.mxu0 0.0
        %2834 = vmatpush1.msra.mxu0 0.0
        %2835 = vmatprep.subr.mxu0 0.0
        %2836 = vmatpush1.msra.mxu0 0.0
        %2837 = vmatprep.subr.mxu0 0.0
        %2838 = vmatpush1.msra.mxu0 0.0
        %2839 = vmatprep.subr.mxu0 0.0
        %2840 = vmatpush1.msra.mxu0 0.0
        %2841 = vmatprep.subr.mxu0 0.0
        %2842 = vmatpush1.msra.mxu0 0.0
        %2843 = vmatprep.subr.mxu0 0.0
        %v2844 = vand.u32 %v210, 4294901760
        %2845 = vmatpush1.msra.mxu0 %v2844
        %2846 = vmatprep.subr.mxu0 0.0
        %v2847 = vand.u32 %v209, 4294901760
        %2848 = vmatpush1.msra.mxu0 %v2847
        %2849 = vmatprep.subr.mxu0 0.0
        %2850 = vmatpush2.msra.mxu0 0.0
        %2851 = vmatprep.subr.mxu0 0.0
        %2852 = vmatpush2.msra.mxu0 0.0
        %2853 = vmatprep.subr.mxu0 0.0
        %2854 = vmatpush2.msra.mxu0 0.0
        %2855 = vmatprep.subr.mxu0 0.0
        %2856 = vmatpush2.msra.mxu0 0.0
        %2857 = vmatprep.subr.mxu0 0.0
        %2858 = vmatpush2.msra.mxu0 0.0
        %2859 = vmatprep.subr.mxu0 0.0
        %2860 = vmatpush2.msra.mxu0 0.0
        %2861 = vmatprep.subr.mxu0 0.0
        %2862 = vmatpush2.msra.mxu0 0.0
        %2863 = vmatprep.subr.mxu0 0.0
        %2864 = vmatpush2.msra.mxu0 0.0
        %2865 = vmatprep.subr.mxu0 0.0
        %2866 = vmatpush2.msra.mxu0 0.0
        %2867 = vmatprep.subr.mxu0 0.0
        %2868 = vmatpush2.msra.mxu0 0.0
        %2869 = vmatprep.subr.mxu0 0.0
        %2870 = vmatpush2.msra.mxu0 0.0
        %2871 = vmatprep.subr.mxu0 0.0
        %2872 = vmatpush2.msra.mxu0 0.0
        %2873 = vmatprep.subr.mxu0 0.0
        %2874 = vmatpush2.msra.mxu0 0.0
        %2875 = vmatprep.subr.mxu0 0.0
        %2876 = vmatpush2.msra.mxu0 0.0
        %2877 = vmatprep.subr.mxu0 0.0
        %2878 = vmatpush2.msra.mxu0 0.0
        %2879 = vmatprep.subr.mxu0 0.0
        %2880 = vmatpush2.msra.mxu0 0.0
        %2881 = vmatprep.mubr.f32.mxu0 0.0
        %v2882 = vand.u32 %v2387, 4294901760
        %2883 = vmatmul.mubr.f32.gmra.mxu0 %v2882
        %v2884 = vpop.f32.mrf.mxu0
        %v2885 = vadd.f32 %v2806, %v2884
        %v2886 = vpop.f32.mrf.mxu0
        %2887 = vmatprep.mubr.f32.mxu0 0.0
        %v2888 = vand.u32 %v2390, 4294901760
        %2889 = vmatmul.mubr.f32.gmra.mxu0 %v2888
        %v2890 = vpop.f32.mrf.mxu0
        %v2891 = vadd.f32 %v2812, %v2890
        %v2892 = vpop.f32.mrf.mxu0
        %2893 = vdwg.mxu0
        %2894 = vmatprep.subr.mxu0 0.0
        %2895 = vmatpush1.msra.mxu0 0.0
        %2896 = vmatprep.subr.mxu0 0.0
        %2897 = vmatpush1.msra.mxu0 0.0
        %2898 = vmatprep.subr.mxu0 0.0
        %2899 = vmatpush1.msra.mxu0 0.0
        %2900 = vmatprep.subr.mxu0 0.0
        %2901 = vmatpush1.msra.mxu0 0.0
        %2902 = vmatprep.subr.mxu0 0.0
        %2903 = vmatpush1.msra.mxu0 0.0
        %2904 = vmatprep.subr.mxu0 0.0
        %2905 = vmatpush1.msra.mxu0 0.0
        %2906 = vmatprep.subr.mxu0 0.0
        %2907 = vmatpush1.msra.mxu0 0.0
        %2908 = vmatprep.subr.mxu0 0.0
        %2909 = vmatpush1.msra.mxu0 0.0
        %2910 = vmatprep.subr.mxu0 0.0
        %2911 = vmatpush1.msra.mxu0 0.0
        %2912 = vmatprep.subr.mxu0 0.0
        %2913 = vmatpush1.msra.mxu0 0.0
        %2914 = vmatprep.subr.mxu0 0.0
        %2915 = vmatpush1.msra.mxu0 0.0
        %2916 = vmatprep.subr.mxu0 0.0
        %2917 = vmatpush1.msra.mxu0 0.0
        %2918 = vmatprep.subr.mxu0 0.0
        %2919 = vmatpush1.msra.mxu0 0.0
        %2920 = vmatprep.subr.mxu0 0.0
        %2921 = vmatpush1.msra.mxu0 0.0
        %2922 = vmatprep.subr.mxu0 0.0
        %v2923 = vand.u32 %v2891, 4294901760
        %2924 = vmatpush1.msra.mxu0 %v2923
        %2925 = vmatprep.subr.mxu0 0.0
        %v2926 = vand.u32 %v2885, 4294901760
        %2927 = vmatpush1.msra.mxu0 %v2926
        %2928 = vmatprep.subr.mxu0 0.0
        %2929 = vmatpush2.msra.mxu0 0.0
        %2930 = vmatprep.subr.mxu0 0.0
        %2931 = vmatpush2.msra.mxu0 0.0
        %2932 = vmatprep.subr.mxu0 0.0
        %2933 = vmatpush2.msra.mxu0 0.0
        %2934 = vmatprep.subr.mxu0 0.0
        %2935 = vmatpush2.msra.mxu0 0.0
        %2936 = vmatprep.subr.mxu0 0.0
        %2937 = vmatpush2.msra.mxu0 0.0
        %2938 = vmatprep.subr.mxu0 0.0
        %2939 = vmatpush2.msra.mxu0 0.0
        %2940 = vmatprep.subr.mxu0 0.0
        %2941 = vmatpush2.msra.mxu0 0.0
        %2942 = vmatprep.subr.mxu0 0.0
        %2943 = vmatpush2.msra.mxu0 0.0
        %2944 = vmatprep.subr.mxu0 0.0
        %2945 = vmatpush2.msra.mxu0 0.0
        %2946 = vmatprep.subr.mxu0 0.0
        %2947 = vmatpush2.msra.mxu0 0.0
        %2948 = vmatprep.subr.mxu0 0.0
        %2949 = vmatpush2.msra.mxu0 0.0
        %2950 = vmatprep.subr.mxu0 0.0
        %2951 = vmatpush2.msra.mxu0 0.0
        %2952 = vmatprep.subr.mxu0 0.0
        %2953 = vmatpush2.msra.mxu0 0.0
        %2954 = vmatprep.subr.mxu0 0.0
        %2955 = vmatpush2.msra.mxu0 0.0
        %2956 = vmatprep.subr.mxu0 0.0
        %2957 = vmatpush2.msra.mxu0 0.0
        %2958 = vmatprep.subr.mxu0 0.0
        %2959 = vmatpush2.msra.mxu0 0.0
        %2960 = vmatprep.mubr.f32.mxu0 0.0
        %v2961 = vand.u32 %v723, 4294901760
        %v2962 = vsub.f32 %v723, %v2961
        %v2963 = vand.u32 %v2962, 4294901760
        %v2964 = vsub.f32 %v2962, %v2963
        %v2965 = vand.u32 %v2964, 4294901760
        %2966 = vmatmul.mubr.f32.gmra.mxu0 %v2965
        %v2967 = vpop.f32.mrf.mxu0
        %v2968 = vadd.f32 0.0, %v2967
        %v2969 = vpop.f32.mrf.mxu0
        %2970 = vmatprep.mubr.f32.mxu0 0.0
        %v2971 = vand.u32 %v726, 4294901760
        %v2972 = vsub.f32 %v726, %v2971
        %v2973 = vand.u32 %v2972, 4294901760
        %v2974 = vsub.f32 %v2972, %v2973
        %v2975 = vand.u32 %v2974, 4294901760
        %2976 = vmatmul.mubr.f32.gmra.mxu0 %v2975
        %v2977 = vpop.f32.mrf.mxu0
        %v2978 = vadd.f32 0.0, %v2977
        %v2979 = vpop.f32.mrf.mxu0
        %2980 = vmatprep.mubr.f32.mxu0 0.0
        %v2981 = vand.u32 %v729, 4294901760
        %v2982 = vsub.f32 %v729, %v2981
        %v2983 = vand.u32 %v2982, 4294901760
        %v2984 = vsub.f32 %v2982, %v2983
        %v2985 = vand.u32 %v2984, 4294901760
        %2986 = vmatmul.mubr.f32.gmra.mxu0 %v2985
        %v2987 = vpop.f32.mrf.mxu0
        %v2988 = vadd.f32 0.0, %v2987
        %v2989 = vpop.f32.mrf.mxu0
        %2990 = vdwg.mxu0
        %2991 = vmatprep.subr.mxu0 0.0
        %2992 = vmatpush1.msra.mxu0 0.0
        %2993 = vmatprep.subr.mxu0 0.0
        %2994 = vmatpush1.msra.mxu0 0.0
        %2995 = vmatprep.subr.mxu0 0.0
        %2996 = vmatpush1.msra.mxu0 0.0
        %2997 = vmatprep.subr.mxu0 0.0
        %2998 = vmatpush1.msra.mxu0 0.0
        %2999 = vmatprep.subr.mxu0 0.0
        %3000 = vmatpush1.msra.mxu0 0.0
        %3001 = vmatprep.subr.mxu0 0.0
        %3002 = vmatpush1.msra.mxu0 0.0
        %3003 = vmatprep.subr.mxu0 0.0
        %3004 = vmatpush1.msra.mxu0 0.0
        %3005 = vmatprep.subr.mxu0 0.0
        %3006 = vmatpush1.msra.mxu0 0.0
        %3007 = vmatprep.subr.mxu0 0.0
        %3008 = vmatpush1.msra.mxu0 0.0
        %3009 = vmatprep.subr.mxu0 0.0
        %3010 = vmatpush1.msra.mxu0 0.0
        %3011 = vmatprep.subr.mxu0 0.0
        %3012 = vmatpush1.msra.mxu0 0.0
        %3013 = vmatprep.subr.mxu0 0.0
        %3014 = vmatpush1.msra.mxu0 0.0
        %3015 = vmatprep.subr.mxu0 0.0
        %3016 = vmatpush1.msra.mxu0 0.0
        %3017 = vmatprep.subr.mxu0 0.0
        %3018 = vmatpush1.msra.mxu0 0.0
        %3019 = vmatprep.subr.mxu0 0.0
        %v3020 = vand.u32 %v2891, 4294901760
        %v3021 = vsub.f32 %v2891, %v3020
        %v3022 = vand.u32 %v3021, 4294901760
        %v3023 = vsub.f32 %v3021, %v3022
        %v3024 = vand.u32 %v3023, 4294901760
        %3025 = vmatpush1.msra.mxu0 %v3024
        %3026 = vmatprep.subr.mxu0 0.0
        %v3027 = vand.u32 %v2885, 4294901760
        %v3028 = vsub.f32 %v2885, %v3027
        %v3029 = vand.u32 %v3028, 4294901760
        %v3030 = vsub.f32 %v3028, %v3029
        %v3031 = vand.u32 %v3030, 4294901760
        %3032 = vmatpush1.msra.mxu0 %v3031
        %3033 = vmatprep.subr.mxu0 0.0
        %3034 = vmatpush2.msra.mxu0 0.0
        %3035 = vmatprep.subr.mxu0 0.0
        %3036 = vmatpush2.msra.mxu0 0.0
        %3037 = vmatprep.subr.mxu0 0.0
        %3038 = vmatpush2.msra.mxu0 0.0
        %3039 = vmatprep.subr.mxu0 0.0
        %3040 = vmatpush2.msra.mxu0 0.0
        %3041 = vmatprep.subr.mxu0 0.0
        %3042 = vmatpush2.msra.mxu0 0.0
        %3043 = vmatprep.subr.mxu0 0.0
        %3044 = vmatpush2.msra.mxu0 0.0
        %3045 = vmatprep.subr.mxu0 0.0
        %3046 = vmatpush2.msra.mxu0 0.0
        %3047 = vmatprep.subr.mxu0 0.0
        %3048 = vmatpush2.msra.mxu0 0.0
        %3049 = vmatprep.subr.mxu0 0.0
        %3050 = vmatpush2.msra.mxu0 0.0
        %3051 = vmatprep.subr.mxu0 0.0
        %3052 = vmatpush2.msra.mxu0 0.0
        %3053 = vmatprep.subr.mxu0 0.0
        %3054 = vmatpush2.msra.mxu0 0.0
        %3055 = vmatprep.subr.mxu0 0.0
        %3056 = vmatpush2.msra.mxu0 0.0
        %3057 = vmatprep.subr.mxu0 0.0
        %3058 = vmatpush2.msra.mxu0 0.0
        %3059 = vmatprep.subr.mxu0 0.0
        %3060 = vmatpush2.msra.mxu0 0.0
        %3061 = vmatprep.subr.mxu0 0.0
        %3062 = vmatpush2.msra.mxu0 0.0
        %3063 = vmatprep.subr.mxu0 0.0
        %3064 = vmatpush2.msra.mxu0 0.0
        %3065 = vmatprep.mubr.f32.mxu0 0.0
        %v3066 = vand.u32 %v723, 4294901760
        %3067 = vmatmul.mubr.f32.gmra.mxu0 %v3066
        %v3068 = vpop.f32.mrf.mxu0
        %v3069 = vadd.f32 %v2968, %v3068
        %v3070 = vpop.f32.mrf.mxu0
        %3071 = vmatprep.mubr.f32.mxu0 0.0
        %v3072 = vand.u32 %v726, 4294901760
        %3073 = vmatmul.mubr.f32.gmra.mxu0 %v3072
        %v3074 = vpop.f32.mrf.mxu0
        %v3075 = vadd.f32 %v2978, %v3074
        %v3076 = vpop.f32.mrf.mxu0
        %3077 = vmatprep.mubr.f32.mxu0 0.0
        %v3078 = vand.u32 %v729, 4294901760
        %3079 = vmatmul.mubr.f32.gmra.mxu0 %v3078
        %v3080 = vpop.f32.mrf.mxu0
        %v3081 = vadd.f32 %v2988, %v3080
        %v3082 = vpop.f32.mrf.mxu0
        %3083 = vdwg.mxu0
        %3084 = vmatprep.subr.mxu0 0.0
        %3085 = vmatpush1.msra.mxu0 0.0
        %3086 = vmatprep.subr.mxu0 0.0
        %3087 = vmatpush1.msra.mxu0 0.0
        %3088 = vmatprep.subr.mxu0 0.0
        %3089 = vmatpush1.msra.mxu0 0.0
        %3090 = vmatprep.subr.mxu0 0.0
        %3091 = vmatpush1.msra.mxu0 0.0
        %3092 = vmatprep.subr.mxu0 0.0
        %3093 = vmatpush1.msra.mxu0 0.0
        %3094 = vmatprep.subr.mxu0 0.0
        %3095 = vmatpush1.msra.mxu0 0.0
        %3096 = vmatprep.subr.mxu0 0.0
        %3097 = vmatpush1.msra.mxu0 0.0
        %3098 = vmatprep.subr.mxu0 0.0
        %3099 = vmatpush1.msra.mxu0 0.0
        %3100 = vmatprep.subr.mxu0 0.0
        %3101 = vmatpush1.msra.mxu0 0.0
        %3102 = vmatprep.subr.mxu0 0.0
        %3103 = vmatpush1.msra.mxu0 0.0
        %3104 = vmatprep.subr.mxu0 0.0
        %3105 = vmatpush1.msra.mxu0 0.0
        %3106 = vmatprep.subr.mxu0 0.0
        %3107 = vmatpush1.msra.mxu0 0.0
        %3108 = vmatprep.subr.mxu0 0.0
        %3109 = vmatpush1.msra.mxu0 0.0
        %3110 = vmatprep.subr.mxu0 0.0
        %3111 = vmatpush1.msra.mxu0 0.0
        %3112 = vmatprep.subr.mxu0 0.0
        %v3113 = vand.u32 %v2891, 4294901760
        %v3114 = vsub.f32 %v2891, %v3113
        %3115 = vmatpush1.msra.mxu0 %v3114
        %3116 = vmatprep.subr.mxu0 0.0
        %v3117 = vand.u32 %v2885, 4294901760
        %v3118 = vsub.f32 %v2885, %v3117
        %3119 = vmatpush1.msra.mxu0 %v3118
        %3120 = vmatprep.subr.mxu0 0.0
        %3121 = vmatpush2.msra.mxu0 0.0
        %3122 = vmatprep.subr.mxu0 0.0
        %3123 = vmatpush2.msra.mxu0 0.0
        %3124 = vmatprep.subr.mxu0 0.0
        %3125 = vmatpush2.msra.mxu0 0.0
        %3126 = vmatprep.subr.mxu0 0.0
        %3127 = vmatpush2.msra.mxu0 0.0
        %3128 = vmatprep.subr.mxu0 0.0
        %3129 = vmatpush2.msra.mxu0 0.0
        %3130 = vmatprep.subr.mxu0 0.0
        %3131 = vmatpush2.msra.mxu0 0.0
        %3132 = vmatprep.subr.mxu0 0.0
        %3133 = vmatpush2.msra.mxu0 0.0
        %3134 = vmatprep.subr.mxu0 0.0
        %3135 = vmatpush2.msra.mxu0 0.0
        %3136 = vmatprep.subr.mxu0 0.0
        %3137 = vmatpush2.msra.mxu0 0.0
        %3138 = vmatprep.subr.mxu0 0.0
        %3139 = vmatpush2.msra.mxu0 0.0
        %3140 = vmatprep.subr.mxu0 0.0
        %3141 = vmatpush2.msra.mxu0 0.0
        %3142 = vmatprep.subr.mxu0 0.0
        %3143 = vmatpush2.msra.mxu0 0.0
        %3144 = vmatprep.subr.mxu0 0.0
        %3145 = vmatpush2.msra.mxu0 0.0
        %3146 = vmatprep.subr.mxu0 0.0
        %3147 = vmatpush2.msra.mxu0 0.0
        %3148 = vmatprep.subr.mxu0 0.0
        %3149 = vmatpush2.msra.mxu0 0.0
        %3150 = vmatprep.subr.mxu0 0.0
        %3151 = vmatpush2.msra.mxu0 0.0
        %3152 = vmatprep.mubr.f32.mxu0 0.0
        %v3153 = vand.u32 %v723, 4294901760
        %v3154 = vsub.f32 %v723, %v3153
        %3155 = vmatmul.mubr.f32.gmra.mxu0 %v3154
        %v3156 = vpop.f32.mrf.mxu0
        %v3157 = vadd.f32 %v3069, %v3156
        %v3158 = vpop.f32.mrf.mxu0
        %3159 = vmatprep.mubr.f32.mxu0 0.0
        %v3160 = vand.u32 %v726, 4294901760
        %v3161 = vsub.f32 %v726, %v3160
        %3162 = vmatmul.mubr.f32.gmra.mxu0 %v3161
        %v3163 = vpop.f32.mrf.mxu0
        %v3164 = vadd.f32 %v3075, %v3163
        %v3165 = vpop.f32.mrf.mxu0
        %3166 = vmatprep.mubr.f32.mxu0 0.0
        %v3167 = vand.u32 %v729, 4294901760
        %v3168 = vsub.f32 %v729, %v3167
        %3169 = vmatmul.mubr.f32.gmra.mxu0 %v3168
        %v3170 = vpop.f32.mrf.mxu0
        %v3171 = vadd.f32 %v3081, %v3170
        %v3172 = vpop.f32.mrf.mxu0
        %3173 = vdwg.mxu0
        %3174 = vmatprep.subr.mxu0 0.0
        %3175 = vmatpush1.msra.mxu0 0.0
        %3176 = vmatprep.subr.mxu0 0.0
        %3177 = vmatpush1.msra.mxu0 0.0
        %3178 = vmatprep.subr.mxu0 0.0
        %3179 = vmatpush1.msra.mxu0 0.0
        %3180 = vmatprep.subr.mxu0 0.0
        %3181 = vmatpush1.msra.mxu0 0.0
        %3182 = vmatprep.subr.mxu0 0.0
        %3183 = vmatpush1.msra.mxu0 0.0
        %3184 = vmatprep.subr.mxu0 0.0
        %3185 = vmatpush1.msra.mxu0 0.0
        %3186 = vmatprep.subr.mxu0 0.0
        %3187 = vmatpush1.msra.mxu0 0.0
        %3188 = vmatprep.subr.mxu0 0.0
        %3189 = vmatpush1.msra.mxu0 0.0
        %3190 = vmatprep.subr.mxu0 0.0
        %3191 = vmatpush1.msra.mxu0 0.0
        %3192 = vmatprep.subr.mxu0 0.0
        %3193 = vmatpush1.msra.mxu0 0.0
        %3194 = vmatprep.subr.mxu0 0.0
        %3195 = vmatpush1.msra.mxu0 0.0
        %3196 = vmatprep.subr.mxu0 0.0
        %3197 = vmatpush1.msra.mxu0 0.0
        %3198 = vmatprep.subr.mxu0 0.0
        %3199 = vmatpush1.msra.mxu0 0.0
        %3200 = vmatprep.subr.mxu0 0.0
        %3201 = vmatpush1.msra.mxu0 0.0
        %3202 = vmatprep.subr.mxu0 0.0
        %v3203 = vand.u32 %v2891, 4294901760
        %3204 = vmatpush1.msra.mxu0 %v3203
        %3205 = vmatprep.subr.mxu0 0.0
        %v3206 = vand.u32 %v2885, 4294901760
        %3207 = vmatpush1.msra.mxu0 %v3206
        %3208 = vmatprep.subr.mxu0 0.0
        %3209 = vmatpush2.msra.mxu0 0.0
        %3210 = vmatprep.subr.mxu0 0.0
        %3211 = vmatpush2.msra.mxu0 0.0
        %3212 = vmatprep.subr.mxu0 0.0
        %3213 = vmatpush2.msra.mxu0 0.0
        %3214 = vmatprep.subr.mxu0 0.0
        %3215 = vmatpush2.msra.mxu0 0.0
        %3216 = vmatprep.subr.mxu0 0.0
        %3217 = vmatpush2.msra.mxu0 0.0
        %3218 = vmatprep.subr.mxu0 0.0
        %3219 = vmatpush2.msra.mxu0 0.0
        %3220 = vmatprep.subr.mxu0 0.0
        %3221 = vmatpush2.msra.mxu0 0.0
        %3222 = vmatprep.subr.mxu0 0.0
        %3223 = vmatpush2.msra.mxu0 0.0
        %3224 = vmatprep.subr.mxu0 0.0
        %3225 = vmatpush2.msra.mxu0 0.0
        %3226 = vmatprep.subr.mxu0 0.0
        %3227 = vmatpush2.msra.mxu0 0.0
        %3228 = vmatprep.subr.mxu0 0.0
        %3229 = vmatpush2.msra.mxu0 0.0
        %3230 = vmatprep.subr.mxu0 0.0
        %3231 = vmatpush2.msra.mxu0 0.0
        %3232 = vmatprep.subr.mxu0 0.0
        %3233 = vmatpush2.msra.mxu0 0.0
        %3234 = vmatprep.subr.mxu0 0.0
        %3235 = vmatpush2.msra.mxu0 0.0
        %3236 = vmatprep.subr.mxu0 0.0
        %3237 = vmatpush2.msra.mxu0 0.0
        %3238 = vmatprep.subr.mxu0 0.0
        %3239 = vmatpush2.msra.mxu0 0.0
        %3240 = vmatprep.mubr.f32.mxu0 0.0
        %v3241 = vand.u32 %v723, 4294901760
        %v3242 = vsub.f32 %v723, %v3241
        %v3243 = vand.u32 %v3242, 4294901760
        %3244 = vmatmul.mubr.f32.gmra.mxu0 %v3243
        %v3245 = vpop.f32.mrf.mxu0
        %v3246 = vadd.f32 %v3157, %v3245
        %v3247 = vpop.f32.mrf.mxu0
        %3248 = vmatprep.mubr.f32.mxu0 0.0
        %v3249 = vand.u32 %v726, 4294901760
        %v3250 = vsub.f32 %v726, %v3249
        %v3251 = vand.u32 %v3250, 4294901760
        %3252 = vmatmul.mubr.f32.gmra.mxu0 %v3251
        %v3253 = vpop.f32.mrf.mxu0
        %v3254 = vadd.f32 %v3164, %v3253
        %v3255 = vpop.f32.mrf.mxu0
        %3256 = vmatprep.mubr.f32.mxu0 0.0
        %v3257 = vand.u32 %v729, 4294901760
        %v3258 = vsub.f32 %v729, %v3257
        %v3259 = vand.u32 %v3258, 4294901760
        %3260 = vmatmul.mubr.f32.gmra.mxu0 %v3259
        %v3261 = vpop.f32.mrf.mxu0
        %v3262 = vadd.f32 %v3171, %v3261
        %v3263 = vpop.f32.mrf.mxu0
        %3264 = vdwg.mxu0
        %3265 = vmatprep.subr.mxu0 0.0
        %3266 = vmatpush1.msra.mxu0 0.0
        %3267 = vmatprep.subr.mxu0 0.0
        %3268 = vmatpush1.msra.mxu0 0.0
        %3269 = vmatprep.subr.mxu0 0.0
        %3270 = vmatpush1.msra.mxu0 0.0
        %3271 = vmatprep.subr.mxu0 0.0
        %3272 = vmatpush1.msra.mxu0 0.0
        %3273 = vmatprep.subr.mxu0 0.0
        %3274 = vmatpush1.msra.mxu0 0.0
        %3275 = vmatprep.subr.mxu0 0.0
        %3276 = vmatpush1.msra.mxu0 0.0
        %3277 = vmatprep.subr.mxu0 0.0
        %3278 = vmatpush1.msra.mxu0 0.0
        %3279 = vmatprep.subr.mxu0 0.0
        %3280 = vmatpush1.msra.mxu0 0.0
        %3281 = vmatprep.subr.mxu0 0.0
        %3282 = vmatpush1.msra.mxu0 0.0
        %3283 = vmatprep.subr.mxu0 0.0
        %3284 = vmatpush1.msra.mxu0 0.0
        %3285 = vmatprep.subr.mxu0 0.0
        %3286 = vmatpush1.msra.mxu0 0.0
        %3287 = vmatprep.subr.mxu0 0.0
        %3288 = vmatpush1.msra.mxu0 0.0
        %3289 = vmatprep.subr.mxu0 0.0
        %3290 = vmatpush1.msra.mxu0 0.0
        %3291 = vmatprep.subr.mxu0 0.0
        %3292 = vmatpush1.msra.mxu0 0.0
        %3293 = vmatprep.subr.mxu0 0.0
        %v3294 = vand.u32 %v2891, 4294901760
        %v3295 = vsub.f32 %v2891, %v3294
        %v3296 = vand.u32 %v3295, 4294901760
        %3297 = vmatpush1.msra.mxu0 %v3296
        %3298 = vmatprep.subr.mxu0 0.0
        %v3299 = vand.u32 %v2885, 4294901760
        %v3300 = vsub.f32 %v2885, %v3299
        %v3301 = vand.u32 %v3300, 4294901760
        %3302 = vmatpush1.msra.mxu0 %v3301
        %3303 = vmatprep.subr.mxu0 0.0
        %3304 = vmatpush2.msra.mxu0 0.0
        %3305 = vmatprep.subr.mxu0 0.0
        %3306 = vmatpush2.msra.mxu0 0.0
        %3307 = vmatprep.subr.mxu0 0.0
        %3308 = vmatpush2.msra.mxu0 0.0
        %3309 = vmatprep.subr.mxu0 0.0
        %3310 = vmatpush2.msra.mxu0 0.0
        %3311 = vmatprep.subr.mxu0 0.0
        %3312 = vmatpush2.msra.mxu0 0.0
        %3313 = vmatprep.subr.mxu0 0.0
        %3314 = vmatpush2.msra.mxu0 0.0
        %3315 = vmatprep.subr.mxu0 0.0
        %3316 = vmatpush2.msra.mxu0 0.0
        %3317 = vmatprep.subr.mxu0 0.0
        %3318 = vmatpush2.msra.mxu0 0.0
        %3319 = vmatprep.subr.mxu0 0.0
        %3320 = vmatpush2.msra.mxu0 0.0
        %3321 = vmatprep.subr.mxu0 0.0
        %3322 = vmatpush2.msra.mxu0 0.0
        %3323 = vmatprep.subr.mxu0 0.0
        %3324 = vmatpush2.msra.mxu0 0.0
        %3325 = vmatprep.subr.mxu0 0.0
        %3326 = vmatpush2.msra.mxu0 0.0
        %3327 = vmatprep.subr.mxu0 0.0
        %3328 = vmatpush2.msra.mxu0 0.0
        %3329 = vmatprep.subr.mxu0 0.0
        %3330 = vmatpush2.msra.mxu0 0.0
        %3331 = vmatprep.subr.mxu0 0.0
        %3332 = vmatpush2.msra.mxu0 0.0
        %3333 = vmatprep.subr.mxu0 0.0
        %3334 = vmatpush2.msra.mxu0 0.0
        %3335 = vmatprep.mubr.f32.mxu0 0.0
        %v3336 = vand.u32 %v723, 4294901760
        %3337 = vmatmul.mubr.f32.gmra.mxu0 %v3336
        %v3338 = vpop.f32.mrf.mxu0
        %v3339 = vadd.f32 %v3246, %v3338
        %v3340 = vpop.f32.mrf.mxu0
        %3341 = vmatprep.mubr.f32.mxu0 0.0
        %v3342 = vand.u32 %v726, 4294901760
        %3343 = vmatmul.mubr.f32.gmra.mxu0 %v3342
        %v3344 = vpop.f32.mrf.mxu0
        %v3345 = vadd.f32 %v3254, %v3344
        %v3346 = vpop.f32.mrf.mxu0
        %3347 = vmatprep.mubr.f32.mxu0 0.0
        %v3348 = vand.u32 %v729, 4294901760
        %3349 = vmatmul.mubr.f32.gmra.mxu0 %v3348
        %v3350 = vpop.f32.mrf.mxu0
        %v3351 = vadd.f32 %v3262, %v3350
        %v3352 = vpop.f32.mrf.mxu0
        %3353 = vdwg.mxu0
        %3354 = vmatprep.subr.mxu0 0.0
        %3355 = vmatpush1.msra.mxu0 0.0
        %3356 = vmatprep.subr.mxu0 0.0
        %3357 = vmatpush1.msra.mxu0 0.0
        %3358 = vmatprep.subr.mxu0 0.0
        %3359 = vmatpush1.msra.mxu0 0.0
        %3360 = vmatprep.subr.mxu0 0.0
        %3361 = vmatpush1.msra.mxu0 0.0
        %3362 = vmatprep.subr.mxu0 0.0
        %3363 = vmatpush1.msra.mxu0 0.0
        %3364 = vmatprep.subr.mxu0 0.0
        %3365 = vmatpush1.msra.mxu0 0.0
        %3366 = vmatprep.subr.mxu0 0.0
        %3367 = vmatpush1.msra.mxu0 0.0
        %3368 = vmatprep.subr.mxu0 0.0
        %3369 = vmatpush1.msra.mxu0 0.0
        %3370 = vmatprep.subr.mxu0 0.0
        %3371 = vmatpush1.msra.mxu0 0.0
        %3372 = vmatprep.subr.mxu0 0.0
        %3373 = vmatpush1.msra.mxu0 0.0
        %3374 = vmatprep.subr.mxu0 0.0
        %3375 = vmatpush1.msra.mxu0 0.0
        %3376 = vmatprep.subr.mxu0 0.0
        %3377 = vmatpush1.msra.mxu0 0.0
        %3378 = vmatprep.subr.mxu0 0.0
        %3379 = vmatpush1.msra.mxu0 0.0
        %3380 = vmatprep.subr.mxu0 0.0
        %3381 = vmatpush1.msra.mxu0 0.0
        %3382 = vmatprep.subr.mxu0 0.0
        %v3383 = vand.u32 %v2891, 4294901760
        %3384 = vmatpush1.msra.mxu0 %v3383
        %3385 = vmatprep.subr.mxu0 0.0
        %v3386 = vand.u32 %v2885, 4294901760
        %3387 = vmatpush1.msra.mxu0 %v3386
        %3388 = vmatprep.subr.mxu0 0.0
        %3389 = vmatpush2.msra.mxu0 0.0
        %3390 = vmatprep.subr.mxu0 0.0
        %3391 = vmatpush2.msra.mxu0 0.0
        %3392 = vmatprep.subr.mxu0 0.0
        %3393 = vmatpush2.msra.mxu0 0.0
        %3394 = vmatprep.subr.mxu0 0.0
        %3395 = vmatpush2.msra.mxu0 0.0
        %3396 = vmatprep.subr.mxu0 0.0
        %3397 = vmatpush2.msra.mxu0 0.0
        %3398 = vmatprep.subr.mxu0 0.0
        %3399 = vmatpush2.msra.mxu0 0.0
        %3400 = vmatprep.subr.mxu0 0.0
        %3401 = vmatpush2.msra.mxu0 0.0
        %3402 = vmatprep.subr.mxu0 0.0
        %3403 = vmatpush2.msra.mxu0 0.0
        %3404 = vmatprep.subr.mxu0 0.0
        %3405 = vmatpush2.msra.mxu0 0.0
        %3406 = vmatprep.subr.mxu0 0.0
        %3407 = vmatpush2.msra.mxu0 0.0
        %3408 = vmatprep.subr.mxu0 0.0
        %3409 = vmatpush2.msra.mxu0 0.0
        %3410 = vmatprep.subr.mxu0 0.0
        %3411 = vmatpush2.msra.mxu0 0.0
        %3412 = vmatprep.subr.mxu0 0.0
        %3413 = vmatpush2.msra.mxu0 0.0
        %3414 = vmatprep.subr.mxu0 0.0
        %3415 = vmatpush2.msra.mxu0 0.0
        %3416 = vmatprep.subr.mxu0 0.0
        %3417 = vmatpush2.msra.mxu0 0.0
        %3418 = vmatprep.subr.mxu0 0.0
        %3419 = vmatpush2.msra.mxu0 0.0
        %3420 = vmatprep.mubr.f32.mxu0 0.0
        %v3421 = vand.u32 %v723, 4294901760
        %3422 = vmatmul.mubr.f32.gmra.mxu0 %v3421
        %v3423 = vpop.f32.mrf.mxu0
        %v3424 = vadd.f32 %v3339, %v3423
        %v3425 = vpop.f32.mrf.mxu0
        %3426 = vmatprep.mubr.f32.mxu0 0.0
        %v3427 = vand.u32 %v726, 4294901760
        %3428 = vmatmul.mubr.f32.gmra.mxu0 %v3427
        %v3429 = vpop.f32.mrf.mxu0
        %v3430 = vadd.f32 %v3345, %v3429
        %v3431 = vpop.f32.mrf.mxu0
        %3432 = vmatprep.mubr.f32.mxu0 0.0
        %v3433 = vand.u32 %v729, 4294901760
        %3434 = vmatmul.mubr.f32.gmra.mxu0 %v3433
        %v3435 = vpop.f32.mrf.mxu0
        %v3436 = vadd.f32 %v3351, %v3435
        %v3437 = vpop.f32.mrf.mxu0
        %3438 = vdwg.mxu0
        %s3439 = scalar_lea.vmem %s203, 32 [#allocation4]
        %3440 = vst.msk [vmem:[%s3439] sm:$0xff] %vm1276, %v3424
        %3441 = vst.msk [vmem:[%s3439 + $0x8] sm:$0x1] %vm1278, %v3430
        %3444 = vrot.lane.b32.xlu0 %v3424, 119
        %v3445 = vpop.permute.xlu0 %3444
        %3446 = vrot.lane.b32.xlu0 %v3430, 119
        %v3447 = vpop.permute.xlu0 %3446
        %s3450 = scalar_lea.vmem %s203, 96 [#allocation4]
        %3451 = vst.msk [vmem:[%s3450] sm:$0xff] %vm1276, %v3445
        %3452 = vst.msk [vmem:[%s3450 + $0x8] sm:$0x1] %vm1278, %v3447
        %s3453 = scalar_lea.vmem %s203, 160 [#allocation4]
        %3454 = vst.msk [vmem:[%s3453 - $0x1] sm:$0xfe] %vm1292, %v3430
        %3455 = vst.msk [vmem:[%s3453 + $0x7] sm:$0x3] %vm1294, %v3436
        %3457 = vrot.lane.b32.xlu0 %v3436, 119
        %v3458 = vpop.permute.xlu0 %3457
        %s3460 = scalar_lea.vmem %s203, 224 [#allocation4]
        %3461 = vst.msk [vmem:[%s3460 - $0x1] sm:$0xfe] %vm1292, %v3447
        %3462 = vst.msk [vmem:[%s3460 + $0x7] sm:$0x3] %vm1294, %v3458
        %s3463 = scalar_lea.vmem %s182, 48 [#allocation2]
        %v3464 = vld [vmem:[%s3463] sm:$0xff]
        %v3465 = vld [vmem:[%s3463 + $0x8] sm:$0xff]
        %v3467 = vsel %vm213, %v3464, 0
        %v3470 = vsel %vm213, %v3465, 0
        %3472 = vmatprep.subr.mxu0 0.0
        %3473 = vmatpush1.msra.mxu0 0.0
        %3474 = vmatprep.subr.mxu0 0.0
        %3475 = vmatpush1.msra.mxu0 0.0
        %3476 = vmatprep.subr.mxu0 0.0
        %3477 = vmatpush1.msra.mxu0 0.0
        %3478 = vmatprep.subr.mxu0 0.0
        %3479 = vmatpush1.msra.mxu0 0.0
        %3480 = vmatprep.subr.mxu0 0.0
        %3481 = vmatpush1.msra.mxu0 0.0
        %3482 = vmatprep.subr.mxu0 0.0
        %3483 = vmatpush1.msra.mxu0 0.0
        %3484 = vmatprep.subr.mxu0 0.0
        %3485 = vmatpush1.msra.mxu0 0.0
        %3486 = vmatprep.subr.mxu0 0.0
        %3487 = vmatpush1.msra.mxu0 0.0
        %3488 = vmatprep.subr.mxu0 0.0
        %3489 = vmatpush1.msra.mxu0 0.0
        %3490 = vmatprep.subr.mxu0 0.0
        %3491 = vmatpush1.msra.mxu0 0.0
        %3492 = vmatprep.subr.mxu0 0.0
        %3493 = vmatpush1.msra.mxu0 0.0
        %3494 = vmatprep.subr.mxu0 0.0
        %3495 = vmatpush1.msra.mxu0 0.0
        %3496 = vmatprep.subr.mxu0 0.0
        %3497 = vmatpush1.msra.mxu0 0.0
        %3498 = vmatprep.subr.mxu0 0.0
        %3499 = vmatpush1.msra.mxu0 0.0
        %3500 = vmatprep.subr.mxu0 0.0
        %v3501 = vand.u32 %v210, 4294901760
        %3502 = vmatpush1.msra.mxu0 %v3501
        %3503 = vmatprep.subr.mxu0 0.0
        %v3504 = vand.u32 %v209, 4294901760
        %3505 = vmatpush1.msra.mxu0 %v3504
        %3506 = vmatprep.subr.mxu0 0.0
        %3507 = vmatpush2.msra.mxu0 0.0
        %3508 = vmatprep.subr.mxu0 0.0
        %3509 = vmatpush2.msra.mxu0 0.0
        %3510 = vmatprep.subr.mxu0 0.0
        %3511 = vmatpush2.msra.mxu0 0.0
        %3512 = vmatprep.subr.mxu0 0.0
        %3513 = vmatpush2.msra.mxu0 0.0
        %3514 = vmatprep.subr.mxu0 0.0
        %3515 = vmatpush2.msra.mxu0 0.0
        %3516 = vmatprep.subr.mxu0 0.0
        %3517 = vmatpush2.msra.mxu0 0.0
        %3518 = vmatprep.subr.mxu0 0.0
        %3519 = vmatpush2.msra.mxu0 0.0
        %3520 = vmatprep.subr.mxu0 0.0
        %3521 = vmatpush2.msra.mxu0 0.0
        %3522 = vmatprep.subr.mxu0 0.0
        %3523 = vmatpush2.msra.mxu0 0.0
        %3524 = vmatprep.subr.mxu0 0.0
        %3525 = vmatpush2.msra.mxu0 0.0
        %3526 = vmatprep.subr.mxu0 0.0
        %3527 = vmatpush2.msra.mxu0 0.0
        %3528 = vmatprep.subr.mxu0 0.0
        %3529 = vmatpush2.msra.mxu0 0.0
        %3530 = vmatprep.subr.mxu0 0.0
        %3531 = vmatpush2.msra.mxu0 0.0
        %3532 = vmatprep.subr.mxu0 0.0
        %3533 = vmatpush2.msra.mxu0 0.0
        %3534 = vmatprep.subr.mxu0 0.0
        %3535 = vmatpush2.msra.mxu0 0.0
        %3536 = vmatprep.subr.mxu0 0.0
        %3537 = vmatpush2.msra.mxu0 0.0
        %3538 = vmatprep.mubr.f32.mxu0 0.0
        %v3539 = vand.u32 %v3467, 4294901760
        %v3540 = vsub.f32 %v3467, %v3539
        %v3541 = vand.u32 %v3540, 4294901760
        %v3542 = vsub.f32 %v3540, %v3541
        %v3543 = vand.u32 %v3542, 4294901760
        %3544 = vmatmul.mubr.f32.gmra.mxu0 %v3543
        %v3545 = vpop.f32.mrf.mxu0
        %v3546 = vadd.f32 0.0, %v3545
        %v3547 = vpop.f32.mrf.mxu0
        %3548 = vmatprep.mubr.f32.mxu0 0.0
        %v3549 = vand.u32 %v3470, 4294901760
        %v3550 = vsub.f32 %v3470, %v3549
        %v3551 = vand.u32 %v3550, 4294901760
        %v3552 = vsub.f32 %v3550, %v3551
        %v3553 = vand.u32 %v3552, 4294901760
        %3554 = vmatmul.mubr.f32.gmra.mxu0 %v3553
        %v3555 = vpop.f32.mrf.mxu0
        %v3556 = vadd.f32 0.0, %v3555
        %v3557 = vpop.f32.mrf.mxu0
        %3558 = vdwg.mxu0
        %3559 = vmatprep.subr.mxu0 0.0
        %3560 = vmatpush1.msra.mxu0 0.0
        %3561 = vmatprep.subr.mxu0 0.0
        %3562 = vmatpush1.msra.mxu0 0.0
        %3563 = vmatprep.subr.mxu0 0.0
        %3564 = vmatpush1.msra.mxu0 0.0
        %3565 = vmatprep.subr.mxu0 0.0
        %3566 = vmatpush1.msra.mxu0 0.0
        %3567 = vmatprep.subr.mxu0 0.0
        %3568 = vmatpush1.msra.mxu0 0.0
        %3569 = vmatprep.subr.mxu0 0.0
        %3570 = vmatpush1.msra.mxu0 0.0
        %3571 = vmatprep.subr.mxu0 0.0
        %3572 = vmatpush1.msra.mxu0 0.0
        %3573 = vmatprep.subr.mxu0 0.0
        %3574 = vmatpush1.msra.mxu0 0.0
        %3575 = vmatprep.subr.mxu0 0.0
        %3576 = vmatpush1.msra.mxu0 0.0
        %3577 = vmatprep.subr.mxu0 0.0
        %3578 = vmatpush1.msra.mxu0 0.0
        %3579 = vmatprep.subr.mxu0 0.0
        %3580 = vmatpush1.msra.mxu0 0.0
        %3581 = vmatprep.subr.mxu0 0.0
        %3582 = vmatpush1.msra.mxu0 0.0
        %3583 = vmatprep.subr.mxu0 0.0
        %3584 = vmatpush1.msra.mxu0 0.0
        %3585 = vmatprep.subr.mxu0 0.0
        %3586 = vmatpush1.msra.mxu0 0.0
        %3587 = vmatprep.subr.mxu0 0.0
        %v3588 = vand.u32 %v210, 4294901760
        %v3589 = vsub.f32 %v210, %v3588
        %v3590 = vand.u32 %v3589, 4294901760
        %v3591 = vsub.f32 %v3589, %v3590
        %v3592 = vand.u32 %v3591, 4294901760
        %3593 = vmatpush1.msra.mxu0 %v3592
        %3594 = vmatprep.subr.mxu0 0.0
        %v3595 = vand.u32 %v209, 4294901760
        %v3596 = vsub.f32 %v209, %v3595
        %v3597 = vand.u32 %v3596, 4294901760
        %v3598 = vsub.f32 %v3596, %v3597
        %v3599 = vand.u32 %v3598, 4294901760
        %3600 = vmatpush1.msra.mxu0 %v3599
        %3601 = vmatprep.subr.mxu0 0.0
        %3602 = vmatpush2.msra.mxu0 0.0
        %3603 = vmatprep.subr.mxu0 0.0
        %3604 = vmatpush2.msra.mxu0 0.0
        %3605 = vmatprep.subr.mxu0 0.0
        %3606 = vmatpush2.msra.mxu0 0.0
        %3607 = vmatprep.subr.mxu0 0.0
        %3608 = vmatpush2.msra.mxu0 0.0
        %3609 = vmatprep.subr.mxu0 0.0
        %3610 = vmatpush2.msra.mxu0 0.0
        %3611 = vmatprep.subr.mxu0 0.0
        %3612 = vmatpush2.msra.mxu0 0.0
        %3613 = vmatprep.subr.mxu0 0.0
        %3614 = vmatpush2.msra.mxu0 0.0
        %3615 = vmatprep.subr.mxu0 0.0
        %3616 = vmatpush2.msra.mxu0 0.0
        %3617 = vmatprep.subr.mxu0 0.0
        %3618 = vmatpush2.msra.mxu0 0.0
        %3619 = vmatprep.subr.mxu0 0.0
        %3620 = vmatpush2.msra.mxu0 0.0
        %3621 = vmatprep.subr.mxu0 0.0
        %3622 = vmatpush2.msra.mxu0 0.0
        %3623 = vmatprep.subr.mxu0 0.0
        %3624 = vmatpush2.msra.mxu0 0.0
        %3625 = vmatprep.subr.mxu0 0.0
        %3626 = vmatpush2.msra.mxu0 0.0
        %3627 = vmatprep.subr.mxu0 0.0
        %3628 = vmatpush2.msra.mxu0 0.0
        %3629 = vmatprep.subr.mxu0 0.0
        %3630 = vmatpush2.msra.mxu0 0.0
        %3631 = vmatprep.subr.mxu0 0.0
        %3632 = vmatpush2.msra.mxu0 0.0
        %3633 = vmatprep.mubr.f32.mxu0 0.0
        %v3634 = vand.u32 %v3467, 4294901760
        %3635 = vmatmul.mubr.f32.gmra.mxu0 %v3634
        %v3636 = vpop.f32.mrf.mxu0
        %v3637 = vadd.f32 %v3546, %v3636
        %v3638 = vpop.f32.mrf.mxu0
        %3639 = vmatprep.mubr.f32.mxu0 0.0
        %v3640 = vand.u32 %v3470, 4294901760
        %3641 = vmatmul.mubr.f32.gmra.mxu0 %v3640
        %v3642 = vpop.f32.mrf.mxu0
        %v3643 = vadd.f32 %v3556, %v3642
        %v3644 = vpop.f32.mrf.mxu0
        %3645 = vdwg.mxu0
        %3646 = vmatprep.subr.mxu0 0.0
        %3647 = vmatpush1.msra.mxu0 0.0
        %3648 = vmatprep.subr.mxu0 0.0
        %3649 = vmatpush1.msra.mxu0 0.0
        %3650 = vmatprep.subr.mxu0 0.0
        %3651 = vmatpush1.msra.mxu0 0.0
        %3652 = vmatprep.subr.mxu0 0.0
        %3653 = vmatpush1.msra.mxu0 0.0
        %3654 = vmatprep.subr.mxu0 0.0
        %3655 = vmatpush1.msra.mxu0 0.0
        %3656 = vmatprep.subr.mxu0 0.0
        %3657 = vmatpush1.msra.mxu0 0.0
        %3658 = vmatprep.subr.mxu0 0.0
        %3659 = vmatpush1.msra.mxu0 0.0
        %3660 = vmatprep.subr.mxu0 0.0
        %3661 = vmatpush1.msra.mxu0 0.0
        %3662 = vmatprep.subr.mxu0 0.0
        %3663 = vmatpush1.msra.mxu0 0.0
        %3664 = vmatprep.subr.mxu0 0.0
        %3665 = vmatpush1.msra.mxu0 0.0
        %3666 = vmatprep.subr.mxu0 0.0
        %3667 = vmatpush1.msra.mxu0 0.0
        %3668 = vmatprep.subr.mxu0 0.0
        %3669 = vmatpush1.msra.mxu0 0.0
        %3670 = vmatprep.subr.mxu0 0.0
        %3671 = vmatpush1.msra.mxu0 0.0
        %3672 = vmatprep.subr.mxu0 0.0
        %3673 = vmatpush1.msra.mxu0 0.0
        %3674 = vmatprep.subr.mxu0 0.0
        %v3675 = vand.u32 %v210, 4294901760
        %v3676 = vsub.f32 %v210, %v3675
        %3677 = vmatpush1.msra.mxu0 %v3676
        %3678 = vmatprep.subr.mxu0 0.0
        %v3679 = vand.u32 %v209, 4294901760
        %v3680 = vsub.f32 %v209, %v3679
        %3681 = vmatpush1.msra.mxu0 %v3680
        %3682 = vmatprep.subr.mxu0 0.0
        %3683 = vmatpush2.msra.mxu0 0.0
        %3684 = vmatprep.subr.mxu0 0.0
        %3685 = vmatpush2.msra.mxu0 0.0
        %3686 = vmatprep.subr.mxu0 0.0
        %3687 = vmatpush2.msra.mxu0 0.0
        %3688 = vmatprep.subr.mxu0 0.0
        %3689 = vmatpush2.msra.mxu0 0.0
        %3690 = vmatprep.subr.mxu0 0.0
        %3691 = vmatpush2.msra.mxu0 0.0
        %3692 = vmatprep.subr.mxu0 0.0
        %3693 = vmatpush2.msra.mxu0 0.0
        %3694 = vmatprep.subr.mxu0 0.0
        %3695 = vmatpush2.msra.mxu0 0.0
        %3696 = vmatprep.subr.mxu0 0.0
        %3697 = vmatpush2.msra.mxu0 0.0
        %3698 = vmatprep.subr.mxu0 0.0
        %3699 = vmatpush2.msra.mxu0 0.0
        %3700 = vmatprep.subr.mxu0 0.0
        %3701 = vmatpush2.msra.mxu0 0.0
        %3702 = vmatprep.subr.mxu0 0.0
        %3703 = vmatpush2.msra.mxu0 0.0
        %3704 = vmatprep.subr.mxu0 0.0
        %3705 = vmatpush2.msra.mxu0 0.0
        %3706 = vmatprep.subr.mxu0 0.0
        %3707 = vmatpush2.msra.mxu0 0.0
        %3708 = vmatprep.subr.mxu0 0.0
        %3709 = vmatpush2.msra.mxu0 0.0
        %3710 = vmatprep.subr.mxu0 0.0
        %3711 = vmatpush2.msra.mxu0 0.0
        %3712 = vmatprep.subr.mxu0 0.0
        %3713 = vmatpush2.msra.mxu0 0.0
        %3714 = vmatprep.mubr.f32.mxu0 0.0
        %v3715 = vand.u32 %v3467, 4294901760
        %v3716 = vsub.f32 %v3467, %v3715
        %3717 = vmatmul.mubr.f32.gmra.mxu0 %v3716
        %v3718 = vpop.f32.mrf.mxu0
        %v3719 = vadd.f32 %v3637, %v3718
        %v3720 = vpop.f32.mrf.mxu0
        %3721 = vmatprep.mubr.f32.mxu0 0.0
        %v3722 = vand.u32 %v3470, 4294901760
        %v3723 = vsub.f32 %v3470, %v3722
        %3724 = vmatmul.mubr.f32.gmra.mxu0 %v3723
        %v3725 = vpop.f32.mrf.mxu0
        %v3726 = vadd.f32 %v3643, %v3725
        %v3727 = vpop.f32.mrf.mxu0
        %3728 = vdwg.mxu0
        %3729 = vmatprep.subr.mxu0 0.0
        %3730 = vmatpush1.msra.mxu0 0.0
        %3731 = vmatprep.subr.mxu0 0.0
        %3732 = vmatpush1.msra.mxu0 0.0
        %3733 = vmatprep.subr.mxu0 0.0
        %3734 = vmatpush1.msra.mxu0 0.0
        %3735 = vmatprep.subr.mxu0 0.0
        %3736 = vmatpush1.msra.mxu0 0.0
        %3737 = vmatprep.subr.mxu0 0.0
        %3738 = vmatpush1.msra.mxu0 0.0
        %3739 = vmatprep.subr.mxu0 0.0
        %3740 = vmatpush1.msra.mxu0 0.0
        %3741 = vmatprep.subr.mxu0 0.0
        %3742 = vmatpush1.msra.mxu0 0.0
        %3743 = vmatprep.subr.mxu0 0.0
        %3744 = vmatpush1.msra.mxu0 0.0
        %3745 = vmatprep.subr.mxu0 0.0
        %3746 = vmatpush1.msra.mxu0 0.0
        %3747 = vmatprep.subr.mxu0 0.0
        %3748 = vmatpush1.msra.mxu0 0.0
        %3749 = vmatprep.subr.mxu0 0.0
        %3750 = vmatpush1.msra.mxu0 0.0
        %3751 = vmatprep.subr.mxu0 0.0
        %3752 = vmatpush1.msra.mxu0 0.0
        %3753 = vmatprep.subr.mxu0 0.0
        %3754 = vmatpush1.msra.mxu0 0.0
        %3755 = vmatprep.subr.mxu0 0.0
        %3756 = vmatpush1.msra.mxu0 0.0
        %3757 = vmatprep.subr.mxu0 0.0
        %v3758 = vand.u32 %v210, 4294901760
        %3759 = vmatpush1.msra.mxu0 %v3758
        %3760 = vmatprep.subr.mxu0 0.0
        %v3761 = vand.u32 %v209, 4294901760
        %3762 = vmatpush1.msra.mxu0 %v3761
        %3763 = vmatprep.subr.mxu0 0.0
        %3764 = vmatpush2.msra.mxu0 0.0
        %3765 = vmatprep.subr.mxu0 0.0
        %3766 = vmatpush2.msra.mxu0 0.0
        %3767 = vmatprep.subr.mxu0 0.0
        %3768 = vmatpush2.msra.mxu0 0.0
        %3769 = vmatprep.subr.mxu0 0.0
        %3770 = vmatpush2.msra.mxu0 0.0
        %3771 = vmatprep.subr.mxu0 0.0
        %3772 = vmatpush2.msra.mxu0 0.0
        %3773 = vmatprep.subr.mxu0 0.0
        %3774 = vmatpush2.msra.mxu0 0.0
        %3775 = vmatprep.subr.mxu0 0.0
        %3776 = vmatpush2.msra.mxu0 0.0
        %3777 = vmatprep.subr.mxu0 0.0
        %3778 = vmatpush2.msra.mxu0 0.0
        %3779 = vmatprep.subr.mxu0 0.0
        %3780 = vmatpush2.msra.mxu0 0.0
        %3781 = vmatprep.subr.mxu0 0.0
        %3782 = vmatpush2.msra.mxu0 0.0
        %3783 = vmatprep.subr.mxu0 0.0
        %3784 = vmatpush2.msra.mxu0 0.0
        %3785 = vmatprep.subr.mxu0 0.0
        %3786 = vmatpush2.msra.mxu0 0.0
        %3787 = vmatprep.subr.mxu0 0.0
        %3788 = vmatpush2.msra.mxu0 0.0
        %3789 = vmatprep.subr.mxu0 0.0
        %3790 = vmatpush2.msra.mxu0 0.0
        %3791 = vmatprep.subr.mxu0 0.0
        %3792 = vmatpush2.msra.mxu0 0.0
        %3793 = vmatprep.subr.mxu0 0.0
        %3794 = vmatpush2.msra.mxu0 0.0
        %3795 = vmatprep.mubr.f32.mxu0 0.0
        %v3796 = vand.u32 %v3467, 4294901760
        %v3797 = vsub.f32 %v3467, %v3796
        %v3798 = vand.u32 %v3797, 4294901760
        %3799 = vmatmul.mubr.f32.gmra.mxu0 %v3798
        %v3800 = vpop.f32.mrf.mxu0
        %v3801 = vadd.f32 %v3719, %v3800
        %v3802 = vpop.f32.mrf.mxu0
        %3803 = vmatprep.mubr.f32.mxu0 0.0
        %v3804 = vand.u32 %v3470, 4294901760
        %v3805 = vsub.f32 %v3470, %v3804
        %v3806 = vand.u32 %v3805, 4294901760
        %3807 = vmatmul.mubr.f32.gmra.mxu0 %v3806
        %v3808 = vpop.f32.mrf.mxu0
        %v3809 = vadd.f32 %v3726, %v3808
        %v3810 = vpop.f32.mrf.mxu0
        %3811 = vdwg.mxu0
        %3812 = vmatprep.subr.mxu0 0.0
        %3813 = vmatpush1.msra.mxu0 0.0
        %3814 = vmatprep.subr.mxu0 0.0
        %3815 = vmatpush1.msra.mxu0 0.0
        %3816 = vmatprep.subr.mxu0 0.0
        %3817 = vmatpush1.msra.mxu0 0.0
        %3818 = vmatprep.subr.mxu0 0.0
        %3819 = vmatpush1.msra.mxu0 0.0
        %3820 = vmatprep.subr.mxu0 0.0
        %3821 = vmatpush1.msra.mxu0 0.0
        %3822 = vmatprep.subr.mxu0 0.0
        %3823 = vmatpush1.msra.mxu0 0.0
        %3824 = vmatprep.subr.mxu0 0.0
        %3825 = vmatpush1.msra.mxu0 0.0
        %3826 = vmatprep.subr.mxu0 0.0
        %3827 = vmatpush1.msra.mxu0 0.0
        %3828 = vmatprep.subr.mxu0 0.0
        %3829 = vmatpush1.msra.mxu0 0.0
        %3830 = vmatprep.subr.mxu0 0.0
        %3831 = vmatpush1.msra.mxu0 0.0
        %3832 = vmatprep.subr.mxu0 0.0
        %3833 = vmatpush1.msra.mxu0 0.0
        %3834 = vmatprep.subr.mxu0 0.0
        %3835 = vmatpush1.msra.mxu0 0.0
        %3836 = vmatprep.subr.mxu0 0.0
        %3837 = vmatpush1.msra.mxu0 0.0
        %3838 = vmatprep.subr.mxu0 0.0
        %3839 = vmatpush1.msra.mxu0 0.0
        %3840 = vmatprep.subr.mxu0 0.0
        %v3841 = vand.u32 %v210, 4294901760
        %v3842 = vsub.f32 %v210, %v3841
        %v3843 = vand.u32 %v3842, 4294901760
        %3844 = vmatpush1.msra.mxu0 %v3843
        %3845 = vmatprep.subr.mxu0 0.0
        %v3846 = vand.u32 %v209, 4294901760
        %v3847 = vsub.f32 %v209, %v3846
        %v3848 = vand.u32 %v3847, 4294901760
        %3849 = vmatpush1.msra.mxu0 %v3848
        %3850 = vmatprep.subr.mxu0 0.0
        %3851 = vmatpush2.msra.mxu0 0.0
        %3852 = vmatprep.subr.mxu0 0.0
        %3853 = vmatpush2.msra.mxu0 0.0
        %3854 = vmatprep.subr.mxu0 0.0
        %3855 = vmatpush2.msra.mxu0 0.0
        %3856 = vmatprep.subr.mxu0 0.0
        %3857 = vmatpush2.msra.mxu0 0.0
        %3858 = vmatprep.subr.mxu0 0.0
        %3859 = vmatpush2.msra.mxu0 0.0
        %3860 = vmatprep.subr.mxu0 0.0
        %3861 = vmatpush2.msra.mxu0 0.0
        %3862 = vmatprep.subr.mxu0 0.0
        %3863 = vmatpush2.msra.mxu0 0.0
        %3864 = vmatprep.subr.mxu0 0.0
        %3865 = vmatpush2.msra.mxu0 0.0
        %3866 = vmatprep.subr.mxu0 0.0
        %3867 = vmatpush2.msra.mxu0 0.0
        %3868 = vmatprep.subr.mxu0 0.0
        %3869 = vmatpush2.msra.mxu0 0.0
        %3870 = vmatprep.subr.mxu0 0.0
        %3871 = vmatpush2.msra.mxu0 0.0
        %3872 = vmatprep.subr.mxu0 0.0
        %3873 = vmatpush2.msra.mxu0 0.0
        %3874 = vmatprep.subr.mxu0 0.0
        %3875 = vmatpush2.msra.mxu0 0.0
        %3876 = vmatprep.subr.mxu0 0.0
        %3877 = vmatpush2.msra.mxu0 0.0
        %3878 = vmatprep.subr.mxu0 0.0
        %3879 = vmatpush2.msra.mxu0 0.0
        %3880 = vmatprep.subr.mxu0 0.0
        %3881 = vmatpush2.msra.mxu0 0.0
        %3882 = vmatprep.mubr.f32.mxu0 0.0
        %v3883 = vand.u32 %v3467, 4294901760
        %3884 = vmatmul.mubr.f32.gmra.mxu0 %v3883
        %v3885 = vpop.f32.mrf.mxu0
        %v3886 = vadd.f32 %v3801, %v3885
        %v3887 = vpop.f32.mrf.mxu0
        %3888 = vmatprep.mubr.f32.mxu0 0.0
        %v3889 = vand.u32 %v3470, 4294901760
        %3890 = vmatmul.mubr.f32.gmra.mxu0 %v3889
        %v3891 = vpop.f32.mrf.mxu0
        %v3892 = vadd.f32 %v3809, %v3891
        %v3893 = vpop.f32.mrf.mxu0
        %3894 = vdwg.mxu0
        %3895 = vmatprep.subr.mxu0 0.0
        %3896 = vmatpush1.msra.mxu0 0.0
        %3897 = vmatprep.subr.mxu0 0.0
        %3898 = vmatpush1.msra.mxu0 0.0
        %3899 = vmatprep.subr.mxu0 0.0
        %3900 = vmatpush1.msra.mxu0 0.0
        %3901 = vmatprep.subr.mxu0 0.0
        %3902 = vmatpush1.msra.mxu0 0.0
        %3903 = vmatprep.subr.mxu0 0.0
        %3904 = vmatpush1.msra.mxu0 0.0
        %3905 = vmatprep.subr.mxu0 0.0
        %3906 = vmatpush1.msra.mxu0 0.0
        %3907 = vmatprep.subr.mxu0 0.0
        %3908 = vmatpush1.msra.mxu0 0.0
        %3909 = vmatprep.subr.mxu0 0.0
        %3910 = vmatpush1.msra.mxu0 0.0
        %3911 = vmatprep.subr.mxu0 0.0
        %3912 = vmatpush1.msra.mxu0 0.0
        %3913 = vmatprep.subr.mxu0 0.0
        %3914 = vmatpush1.msra.mxu0 0.0
        %3915 = vmatprep.subr.mxu0 0.0
        %3916 = vmatpush1.msra.mxu0 0.0
        %3917 = vmatprep.subr.mxu0 0.0
        %3918 = vmatpush1.msra.mxu0 0.0
        %3919 = vmatprep.subr.mxu0 0.0
        %3920 = vmatpush1.msra.mxu0 0.0
        %3921 = vmatprep.subr.mxu0 0.0
        %3922 = vmatpush1.msra.mxu0 0.0
        %3923 = vmatprep.subr.mxu0 0.0
        %v3924 = vand.u32 %v210, 4294901760
        %3925 = vmatpush1.msra.mxu0 %v3924
        %3926 = vmatprep.subr.mxu0 0.0
        %v3927 = vand.u32 %v209, 4294901760
        %3928 = vmatpush1.msra.mxu0 %v3927
        %3929 = vmatprep.subr.mxu0 0.0
        %3930 = vmatpush2.msra.mxu0 0.0
        %3931 = vmatprep.subr.mxu0 0.0
        %3932 = vmatpush2.msra.mxu0 0.0
        %3933 = vmatprep.subr.mxu0 0.0
        %3934 = vmatpush2.msra.mxu0 0.0
        %3935 = vmatprep.subr.mxu0 0.0
        %3936 = vmatpush2.msra.mxu0 0.0
        %3937 = vmatprep.subr.mxu0 0.0
        %3938 = vmatpush2.msra.mxu0 0.0
        %3939 = vmatprep.subr.mxu0 0.0
        %3940 = vmatpush2.msra.mxu0 0.0
        %3941 = vmatprep.subr.mxu0 0.0
        %3942 = vmatpush2.msra.mxu0 0.0
        %3943 = vmatprep.subr.mxu0 0.0
        %3944 = vmatpush2.msra.mxu0 0.0
        %3945 = vmatprep.subr.mxu0 0.0
        %3946 = vmatpush2.msra.mxu0 0.0
        %3947 = vmatprep.subr.mxu0 0.0
        %3948 = vmatpush2.msra.mxu0 0.0
        %3949 = vmatprep.subr.mxu0 0.0
        %3950 = vmatpush2.msra.mxu0 0.0
        %3951 = vmatprep.subr.mxu0 0.0
        %3952 = vmatpush2.msra.mxu0 0.0
        %3953 = vmatprep.subr.mxu0 0.0
        %3954 = vmatpush2.msra.mxu0 0.0
        %3955 = vmatprep.subr.mxu0 0.0
        %3956 = vmatpush2.msra.mxu0 0.0
        %3957 = vmatprep.subr.mxu0 0.0
        %3958 = vmatpush2.msra.mxu0 0.0
        %3959 = vmatprep.subr.mxu0 0.0
        %3960 = vmatpush2.msra.mxu0 0.0
        %3961 = vmatprep.mubr.f32.mxu0 0.0
        %v3962 = vand.u32 %v3467, 4294901760
        %3963 = vmatmul.mubr.f32.gmra.mxu0 %v3962
        %v3964 = vpop.f32.mrf.mxu0
        %v3965 = vadd.f32 %v3886, %v3964
        %v3966 = vpop.f32.mrf.mxu0
        %3967 = vmatprep.mubr.f32.mxu0 0.0
        %v3968 = vand.u32 %v3470, 4294901760
        %3969 = vmatmul.mubr.f32.gmra.mxu0 %v3968
        %v3970 = vpop.f32.mrf.mxu0
        %v3971 = vadd.f32 %v3892, %v3970
        %v3972 = vpop.f32.mrf.mxu0
        %3973 = vdwg.mxu0
        %3974 = vmatprep.subr.mxu0 0.0
        %3975 = vmatpush1.msra.mxu0 0.0
        %3976 = vmatprep.subr.mxu0 0.0
        %3977 = vmatpush1.msra.mxu0 0.0
        %3978 = vmatprep.subr.mxu0 0.0
        %3979 = vmatpush1.msra.mxu0 0.0
        %3980 = vmatprep.subr.mxu0 0.0
        %3981 = vmatpush1.msra.mxu0 0.0
        %3982 = vmatprep.subr.mxu0 0.0
        %3983 = vmatpush1.msra.mxu0 0.0
        %3984 = vmatprep.subr.mxu0 0.0
        %3985 = vmatpush1.msra.mxu0 0.0
        %3986 = vmatprep.subr.mxu0 0.0
        %3987 = vmatpush1.msra.mxu0 0.0
        %3988 = vmatprep.subr.mxu0 0.0
        %3989 = vmatpush1.msra.mxu0 0.0
        %3990 = vmatprep.subr.mxu0 0.0
        %3991 = vmatpush1.msra.mxu0 0.0
        %3992 = vmatprep.subr.mxu0 0.0
        %3993 = vmatpush1.msra.mxu0 0.0
        %3994 = vmatprep.subr.mxu0 0.0
        %3995 = vmatpush1.msra.mxu0 0.0
        %3996 = vmatprep.subr.mxu0 0.0
        %3997 = vmatpush1.msra.mxu0 0.0
        %3998 = vmatprep.subr.mxu0 0.0
        %3999 = vmatpush1.msra.mxu0 0.0
        %4000 = vmatprep.subr.mxu0 0.0
        %4001 = vmatpush1.msra.mxu0 0.0
        %4002 = vmatprep.subr.mxu0 0.0
        %v4003 = vand.u32 %v3971, 4294901760
        %4004 = vmatpush1.msra.mxu0 %v4003
        %4005 = vmatprep.subr.mxu0 0.0
        %v4006 = vand.u32 %v3965, 4294901760
        %4007 = vmatpush1.msra.mxu0 %v4006
        %4008 = vmatprep.subr.mxu0 0.0
        %4009 = vmatpush2.msra.mxu0 0.0
        %4010 = vmatprep.subr.mxu0 0.0
        %4011 = vmatpush2.msra.mxu0 0.0
        %4012 = vmatprep.subr.mxu0 0.0
        %4013 = vmatpush2.msra.mxu0 0.0
        %4014 = vmatprep.subr.mxu0 0.0
        %4015 = vmatpush2.msra.mxu0 0.0
        %4016 = vmatprep.subr.mxu0 0.0
        %4017 = vmatpush2.msra.mxu0 0.0
        %4018 = vmatprep.subr.mxu0 0.0
        %4019 = vmatpush2.msra.mxu0 0.0
        %4020 = vmatprep.subr.mxu0 0.0
        %4021 = vmatpush2.msra.mxu0 0.0
        %4022 = vmatprep.subr.mxu0 0.0
        %4023 = vmatpush2.msra.mxu0 0.0
        %4024 = vmatprep.subr.mxu0 0.0
        %4025 = vmatpush2.msra.mxu0 0.0
        %4026 = vmatprep.subr.mxu0 0.0
        %4027 = vmatpush2.msra.mxu0 0.0
        %4028 = vmatprep.subr.mxu0 0.0
        %4029 = vmatpush2.msra.mxu0 0.0
        %4030 = vmatprep.subr.mxu0 0.0
        %4031 = vmatpush2.msra.mxu0 0.0
        %4032 = vmatprep.subr.mxu0 0.0
        %4033 = vmatpush2.msra.mxu0 0.0
        %4034 = vmatprep.subr.mxu0 0.0
        %4035 = vmatpush2.msra.mxu0 0.0
        %4036 = vmatprep.subr.mxu0 0.0
        %4037 = vmatpush2.msra.mxu0 0.0
        %4038 = vmatprep.subr.mxu0 0.0
        %4039 = vmatpush2.msra.mxu0 0.0
        %4040 = vmatprep.mubr.f32.mxu0 0.0
        %v4041 = vand.u32 %v723, 4294901760
        %v4042 = vsub.f32 %v723, %v4041
        %v4043 = vand.u32 %v4042, 4294901760
        %v4044 = vsub.f32 %v4042, %v4043
        %v4045 = vand.u32 %v4044, 4294901760
        %4046 = vmatmul.mubr.f32.gmra.mxu0 %v4045
        %v4047 = vpop.f32.mrf.mxu0
        %v4048 = vadd.f32 0.0, %v4047
        %v4049 = vpop.f32.mrf.mxu0
        %4050 = vmatprep.mubr.f32.mxu0 0.0
        %v4051 = vand.u32 %v726, 4294901760
        %v4052 = vsub.f32 %v726, %v4051
        %v4053 = vand.u32 %v4052, 4294901760
        %v4054 = vsub.f32 %v4052, %v4053
        %v4055 = vand.u32 %v4054, 4294901760
        %4056 = vmatmul.mubr.f32.gmra.mxu0 %v4055
        %v4057 = vpop.f32.mrf.mxu0
        %v4058 = vadd.f32 0.0, %v4057
        %v4059 = vpop.f32.mrf.mxu0
        %4060 = vmatprep.mubr.f32.mxu0 0.0
        %v4061 = vand.u32 %v729, 4294901760
        %v4062 = vsub.f32 %v729, %v4061
        %v4063 = vand.u32 %v4062, 4294901760
        %v4064 = vsub.f32 %v4062, %v4063
        %v4065 = vand.u32 %v4064, 4294901760
        %4066 = vmatmul.mubr.f32.gmra.mxu0 %v4065
        %v4067 = vpop.f32.mrf.mxu0
        %v4068 = vadd.f32 0.0, %v4067
        %v4069 = vpop.f32.mrf.mxu0
        %4070 = vdwg.mxu0
        %4071 = vmatprep.subr.mxu0 0.0
        %4072 = vmatpush1.msra.mxu0 0.0
        %4073 = vmatprep.subr.mxu0 0.0
        %4074 = vmatpush1.msra.mxu0 0.0
        %4075 = vmatprep.subr.mxu0 0.0
        %4076 = vmatpush1.msra.mxu0 0.0
        %4077 = vmatprep.subr.mxu0 0.0
        %4078 = vmatpush1.msra.mxu0 0.0
        %4079 = vmatprep.subr.mxu0 0.0
        %4080 = vmatpush1.msra.mxu0 0.0
        %4081 = vmatprep.subr.mxu0 0.0
        %4082 = vmatpush1.msra.mxu0 0.0
        %4083 = vmatprep.subr.mxu0 0.0
        %4084 = vmatpush1.msra.mxu0 0.0
        %4085 = vmatprep.subr.mxu0 0.0
        %4086 = vmatpush1.msra.mxu0 0.0
        %4087 = vmatprep.subr.mxu0 0.0
        %4088 = vmatpush1.msra.mxu0 0.0
        %4089 = vmatprep.subr.mxu0 0.0
        %4090 = vmatpush1.msra.mxu0 0.0
        %4091 = vmatprep.subr.mxu0 0.0
        %4092 = vmatpush1.msra.mxu0 0.0
        %4093 = vmatprep.subr.mxu0 0.0
        %4094 = vmatpush1.msra.mxu0 0.0
        %4095 = vmatprep.subr.mxu0 0.0
        %4096 = vmatpush1.msra.mxu0 0.0
        %4097 = vmatprep.subr.mxu0 0.0
        %4098 = vmatpush1.msra.mxu0 0.0
        %4099 = vmatprep.subr.mxu0 0.0
        %v4100 = vand.u32 %v3971, 4294901760
        %v4101 = vsub.f32 %v3971, %v4100
        %v4102 = vand.u32 %v4101, 4294901760
        %v4103 = vsub.f32 %v4101, %v4102
        %v4104 = vand.u32 %v4103, 4294901760
        %4105 = vmatpush1.msra.mxu0 %v4104
        %4106 = vmatprep.subr.mxu0 0.0
        %v4107 = vand.u32 %v3965, 4294901760
        %v4108 = vsub.f32 %v3965, %v4107
        %v4109 = vand.u32 %v4108, 4294901760
        %v4110 = vsub.f32 %v4108, %v4109
        %v4111 = vand.u32 %v4110, 4294901760
        %4112 = vmatpush1.msra.mxu0 %v4111
        %4113 = vmatprep.subr.mxu0 0.0
        %4114 = vmatpush2.msra.mxu0 0.0
        %4115 = vmatprep.subr.mxu0 0.0
        %4116 = vmatpush2.msra.mxu0 0.0
        %4117 = vmatprep.subr.mxu0 0.0
        %4118 = vmatpush2.msra.mxu0 0.0
        %4119 = vmatprep.subr.mxu0 0.0
        %4120 = vmatpush2.msra.mxu0 0.0
        %4121 = vmatprep.subr.mxu0 0.0
        %4122 = vmatpush2.msra.mxu0 0.0
        %4123 = vmatprep.subr.mxu0 0.0
        %4124 = vmatpush2.msra.mxu0 0.0
        %4125 = vmatprep.subr.mxu0 0.0
        %4126 = vmatpush2.msra.mxu0 0.0
        %4127 = vmatprep.subr.mxu0 0.0
        %4128 = vmatpush2.msra.mxu0 0.0
        %4129 = vmatprep.subr.mxu0 0.0
        %4130 = vmatpush2.msra.mxu0 0.0
        %4131 = vmatprep.subr.mxu0 0.0
        %4132 = vmatpush2.msra.mxu0 0.0
        %4133 = vmatprep.subr.mxu0 0.0
        %4134 = vmatpush2.msra.mxu0 0.0
        %4135 = vmatprep.subr.mxu0 0.0
        %4136 = vmatpush2.msra.mxu0 0.0
        %4137 = vmatprep.subr.mxu0 0.0
        %4138 = vmatpush2.msra.mxu0 0.0
        %4139 = vmatprep.subr.mxu0 0.0
        %4140 = vmatpush2.msra.mxu0 0.0
        %4141 = vmatprep.subr.mxu0 0.0
        %4142 = vmatpush2.msra.mxu0 0.0
        %4143 = vmatprep.subr.mxu0 0.0
        %4144 = vmatpush2.msra.mxu0 0.0
        %4145 = vmatprep.mubr.f32.mxu0 0.0
        %v4146 = vand.u32 %v723, 4294901760
        %4147 = vmatmul.mubr.f32.gmra.mxu0 %v4146
        %v4148 = vpop.f32.mrf.mxu0
        %v4149 = vadd.f32 %v4048, %v4148
        %v4150 = vpop.f32.mrf.mxu0
        %4151 = vmatprep.mubr.f32.mxu0 0.0
        %v4152 = vand.u32 %v726, 4294901760
        %4153 = vmatmul.mubr.f32.gmra.mxu0 %v4152
        %v4154 = vpop.f32.mrf.mxu0
        %v4155 = vadd.f32 %v4058, %v4154
        %v4156 = vpop.f32.mrf.mxu0
        %4157 = vmatprep.mubr.f32.mxu0 0.0
        %v4158 = vand.u32 %v729, 4294901760
        %4159 = vmatmul.mubr.f32.gmra.mxu0 %v4158
        %v4160 = vpop.f32.mrf.mxu0
        %v4161 = vadd.f32 %v4068, %v4160
        %v4162 = vpop.f32.mrf.mxu0
        %4163 = vdwg.mxu0
        %4164 = vmatprep.subr.mxu0 0.0
        %4165 = vmatpush1.msra.mxu0 0.0
        %4166 = vmatprep.subr.mxu0 0.0
        %4167 = vmatpush1.msra.mxu0 0.0
        %4168 = vmatprep.subr.mxu0 0.0
        %4169 = vmatpush1.msra.mxu0 0.0
        %4170 = vmatprep.subr.mxu0 0.0
        %4171 = vmatpush1.msra.mxu0 0.0
        %4172 = vmatprep.subr.mxu0 0.0
        %4173 = vmatpush1.msra.mxu0 0.0
        %4174 = vmatprep.subr.mxu0 0.0
        %4175 = vmatpush1.msra.mxu0 0.0
        %4176 = vmatprep.subr.mxu0 0.0
        %4177 = vmatpush1.msra.mxu0 0.0
        %4178 = vmatprep.subr.mxu0 0.0
        %4179 = vmatpush1.msra.mxu0 0.0
        %4180 = vmatprep.subr.mxu0 0.0
        %4181 = vmatpush1.msra.mxu0 0.0
        %4182 = vmatprep.subr.mxu0 0.0
        %4183 = vmatpush1.msra.mxu0 0.0
        %4184 = vmatprep.subr.mxu0 0.0
        %4185 = vmatpush1.msra.mxu0 0.0
        %4186 = vmatprep.subr.mxu0 0.0
        %4187 = vmatpush1.msra.mxu0 0.0
        %4188 = vmatprep.subr.mxu0 0.0
        %4189 = vmatpush1.msra.mxu0 0.0
        %4190 = vmatprep.subr.mxu0 0.0
        %4191 = vmatpush1.msra.mxu0 0.0
        %4192 = vmatprep.subr.mxu0 0.0
        %v4193 = vand.u32 %v3971, 4294901760
        %v4194 = vsub.f32 %v3971, %v4193
        %4195 = vmatpush1.msra.mxu0 %v4194
        %4196 = vmatprep.subr.mxu0 0.0
        %v4197 = vand.u32 %v3965, 4294901760
        %v4198 = vsub.f32 %v3965, %v4197
        %4199 = vmatpush1.msra.mxu0 %v4198
        %4200 = vmatprep.subr.mxu0 0.0
        %4201 = vmatpush2.msra.mxu0 0.0
        %4202 = vmatprep.subr.mxu0 0.0
        %4203 = vmatpush2.msra.mxu0 0.0
        %4204 = vmatprep.subr.mxu0 0.0
        %4205 = vmatpush2.msra.mxu0 0.0
        %4206 = vmatprep.subr.mxu0 0.0
        %4207 = vmatpush2.msra.mxu0 0.0
        %4208 = vmatprep.subr.mxu0 0.0
        %4209 = vmatpush2.msra.mxu0 0.0
        %4210 = vmatprep.subr.mxu0 0.0
        %4211 = vmatpush2.msra.mxu0 0.0
        %4212 = vmatprep.subr.mxu0 0.0
        %4213 = vmatpush2.msra.mxu0 0.0
        %4214 = vmatprep.subr.mxu0 0.0
        %4215 = vmatpush2.msra.mxu0 0.0
        %4216 = vmatprep.subr.mxu0 0.0
        %4217 = vmatpush2.msra.mxu0 0.0
        %4218 = vmatprep.subr.mxu0 0.0
        %4219 = vmatpush2.msra.mxu0 0.0
        %4220 = vmatprep.subr.mxu0 0.0
        %4221 = vmatpush2.msra.mxu0 0.0
        %4222 = vmatprep.subr.mxu0 0.0
        %4223 = vmatpush2.msra.mxu0 0.0
        %4224 = vmatprep.subr.mxu0 0.0
        %4225 = vmatpush2.msra.mxu0 0.0
        %4226 = vmatprep.subr.mxu0 0.0
        %4227 = vmatpush2.msra.mxu0 0.0
        %4228 = vmatprep.subr.mxu0 0.0
        %4229 = vmatpush2.msra.mxu0 0.0
        %4230 = vmatprep.subr.mxu0 0.0
        %4231 = vmatpush2.msra.mxu0 0.0
        %4232 = vmatprep.mubr.f32.mxu0 0.0
        %v4233 = vand.u32 %v723, 4294901760
        %v4234 = vsub.f32 %v723, %v4233
        %4235 = vmatmul.mubr.f32.gmra.mxu0 %v4234
        %v4236 = vpop.f32.mrf.mxu0
        %v4237 = vadd.f32 %v4149, %v4236
        %v4238 = vpop.f32.mrf.mxu0
        %4239 = vmatprep.mubr.f32.mxu0 0.0
        %v4240 = vand.u32 %v726, 4294901760
        %v4241 = vsub.f32 %v726, %v4240
        %4242 = vmatmul.mubr.f32.gmra.mxu0 %v4241
        %v4243 = vpop.f32.mrf.mxu0
        %v4244 = vadd.f32 %v4155, %v4243
        %v4245 = vpop.f32.mrf.mxu0
        %4246 = vmatprep.mubr.f32.mxu0 0.0
        %v4247 = vand.u32 %v729, 4294901760
        %v4248 = vsub.f32 %v729, %v4247
        %4249 = vmatmul.mubr.f32.gmra.mxu0 %v4248
        %v4250 = vpop.f32.mrf.mxu0
        %v4251 = vadd.f32 %v4161, %v4250
        %v4252 = vpop.f32.mrf.mxu0
        %4253 = vdwg.mxu0
        %4254 = vmatprep.subr.mxu0 0.0
        %4255 = vmatpush1.msra.mxu0 0.0
        %4256 = vmatprep.subr.mxu0 0.0
        %4257 = vmatpush1.msra.mxu0 0.0
        %4258 = vmatprep.subr.mxu0 0.0
        %4259 = vmatpush1.msra.mxu0 0.0
        %4260 = vmatprep.subr.mxu0 0.0
        %4261 = vmatpush1.msra.mxu0 0.0
        %4262 = vmatprep.subr.mxu0 0.0
        %4263 = vmatpush1.msra.mxu0 0.0
        %4264 = vmatprep.subr.mxu0 0.0
        %4265 = vmatpush1.msra.mxu0 0.0
        %4266 = vmatprep.subr.mxu0 0.0
        %4267 = vmatpush1.msra.mxu0 0.0
        %4268 = vmatprep.subr.mxu0 0.0
        %4269 = vmatpush1.msra.mxu0 0.0
        %4270 = vmatprep.subr.mxu0 0.0
        %4271 = vmatpush1.msra.mxu0 0.0
        %4272 = vmatprep.subr.mxu0 0.0
        %4273 = vmatpush1.msra.mxu0 0.0
        %4274 = vmatprep.subr.mxu0 0.0
        %4275 = vmatpush1.msra.mxu0 0.0
        %4276 = vmatprep.subr.mxu0 0.0
        %4277 = vmatpush1.msra.mxu0 0.0
        %4278 = vmatprep.subr.mxu0 0.0
        %4279 = vmatpush1.msra.mxu0 0.0
        %4280 = vmatprep.subr.mxu0 0.0
        %4281 = vmatpush1.msra.mxu0 0.0
        %4282 = vmatprep.subr.mxu0 0.0
        %v4283 = vand.u32 %v3971, 4294901760
        %4284 = vmatpush1.msra.mxu0 %v4283
        %4285 = vmatprep.subr.mxu0 0.0
        %v4286 = vand.u32 %v3965, 4294901760
        %4287 = vmatpush1.msra.mxu0 %v4286
        %4288 = vmatprep.subr.mxu0 0.0
        %4289 = vmatpush2.msra.mxu0 0.0
        %4290 = vmatprep.subr.mxu0 0.0
        %4291 = vmatpush2.msra.mxu0 0.0
        %4292 = vmatprep.subr.mxu0 0.0
        %4293 = vmatpush2.msra.mxu0 0.0
        %4294 = vmatprep.subr.mxu0 0.0
        %4295 = vmatpush2.msra.mxu0 0.0
        %4296 = vmatprep.subr.mxu0 0.0
        %4297 = vmatpush2.msra.mxu0 0.0
        %4298 = vmatprep.subr.mxu0 0.0
        %4299 = vmatpush2.msra.mxu0 0.0
        %4300 = vmatprep.subr.mxu0 0.0
        %4301 = vmatpush2.msra.mxu0 0.0
        %4302 = vmatprep.subr.mxu0 0.0
        %4303 = vmatpush2.msra.mxu0 0.0
        %4304 = vmatprep.subr.mxu0 0.0
        %4305 = vmatpush2.msra.mxu0 0.0
        %4306 = vmatprep.subr.mxu0 0.0
        %4307 = vmatpush2.msra.mxu0 0.0
        %4308 = vmatprep.subr.mxu0 0.0
        %4309 = vmatpush2.msra.mxu0 0.0
        %4310 = vmatprep.subr.mxu0 0.0
        %4311 = vmatpush2.msra.mxu0 0.0
        %4312 = vmatprep.subr.mxu0 0.0
        %4313 = vmatpush2.msra.mxu0 0.0
        %4314 = vmatprep.subr.mxu0 0.0
        %4315 = vmatpush2.msra.mxu0 0.0
        %4316 = vmatprep.subr.mxu0 0.0
        %4317 = vmatpush2.msra.mxu0 0.0
        %4318 = vmatprep.subr.mxu0 0.0
        %4319 = vmatpush2.msra.mxu0 0.0
        %4320 = vmatprep.mubr.f32.mxu0 0.0
        %v4321 = vand.u32 %v723, 4294901760
        %v4322 = vsub.f32 %v723, %v4321
        %v4323 = vand.u32 %v4322, 4294901760
        %4324 = vmatmul.mubr.f32.gmra.mxu0 %v4323
        %v4325 = vpop.f32.mrf.mxu0
        %v4326 = vadd.f32 %v4237, %v4325
        %v4327 = vpop.f32.mrf.mxu0
        %4328 = vmatprep.mubr.f32.mxu0 0.0
        %v4329 = vand.u32 %v726, 4294901760
        %v4330 = vsub.f32 %v726, %v4329
        %v4331 = vand.u32 %v4330, 4294901760
        %4332 = vmatmul.mubr.f32.gmra.mxu0 %v4331
        %v4333 = vpop.f32.mrf.mxu0
        %v4334 = vadd.f32 %v4244, %v4333
        %v4335 = vpop.f32.mrf.mxu0
        %4336 = vmatprep.mubr.f32.mxu0 0.0
        %v4337 = vand.u32 %v729, 4294901760
        %v4338 = vsub.f32 %v729, %v4337
        %v4339 = vand.u32 %v4338, 4294901760
        %4340 = vmatmul.mubr.f32.gmra.mxu0 %v4339
        %v4341 = vpop.f32.mrf.mxu0
        %v4342 = vadd.f32 %v4251, %v4341
        %v4343 = vpop.f32.mrf.mxu0
        %4344 = vdwg.mxu0
        %4345 = vmatprep.subr.mxu0 0.0
        %4346 = vmatpush1.msra.mxu0 0.0
        %4347 = vmatprep.subr.mxu0 0.0
        %4348 = vmatpush1.msra.mxu0 0.0
        %4349 = vmatprep.subr.mxu0 0.0
        %4350 = vmatpush1.msra.mxu0 0.0
        %4351 = vmatprep.subr.mxu0 0.0
        %4352 = vmatpush1.msra.mxu0 0.0
        %4353 = vmatprep.subr.mxu0 0.0
        %4354 = vmatpush1.msra.mxu0 0.0
        %4355 = vmatprep.subr.mxu0 0.0
        %4356 = vmatpush1.msra.mxu0 0.0
        %4357 = vmatprep.subr.mxu0 0.0
        %4358 = vmatpush1.msra.mxu0 0.0
        %4359 = vmatprep.subr.mxu0 0.0
        %4360 = vmatpush1.msra.mxu0 0.0
        %4361 = vmatprep.subr.mxu0 0.0
        %4362 = vmatpush1.msra.mxu0 0.0
        %4363 = vmatprep.subr.mxu0 0.0
        %4364 = vmatpush1.msra.mxu0 0.0
        %4365 = vmatprep.subr.mxu0 0.0
        %4366 = vmatpush1.msra.mxu0 0.0
        %4367 = vmatprep.subr.mxu0 0.0
        %4368 = vmatpush1.msra.mxu0 0.0
        %4369 = vmatprep.subr.mxu0 0.0
        %4370 = vmatpush1.msra.mxu0 0.0
        %4371 = vmatprep.subr.mxu0 0.0
        %4372 = vmatpush1.msra.mxu0 0.0
        %4373 = vmatprep.subr.mxu0 0.0
        %v4374 = vand.u32 %v3971, 4294901760
        %v4375 = vsub.f32 %v3971, %v4374
        %v4376 = vand.u32 %v4375, 4294901760
        %4377 = vmatpush1.msra.mxu0 %v4376
        %4378 = vmatprep.subr.mxu0 0.0
        %v4379 = vand.u32 %v3965, 4294901760
        %v4380 = vsub.f32 %v3965, %v4379
        %v4381 = vand.u32 %v4380, 4294901760
        %4382 = vmatpush1.msra.mxu0 %v4381
        %4383 = vmatprep.subr.mxu0 0.0
        %4384 = vmatpush2.msra.mxu0 0.0
        %4385 = vmatprep.subr.mxu0 0.0
        %4386 = vmatpush2.msra.mxu0 0.0
        %4387 = vmatprep.subr.mxu0 0.0
        %4388 = vmatpush2.msra.mxu0 0.0
        %4389 = vmatprep.subr.mxu0 0.0
        %4390 = vmatpush2.msra.mxu0 0.0
        %4391 = vmatprep.subr.mxu0 0.0
        %4392 = vmatpush2.msra.mxu0 0.0
        %4393 = vmatprep.subr.mxu0 0.0
        %4394 = vmatpush2.msra.mxu0 0.0
        %4395 = vmatprep.subr.mxu0 0.0
        %4396 = vmatpush2.msra.mxu0 0.0
        %4397 = vmatprep.subr.mxu0 0.0
        %4398 = vmatpush2.msra.mxu0 0.0
        %4399 = vmatprep.subr.mxu0 0.0
        %4400 = vmatpush2.msra.mxu0 0.0
        %4401 = vmatprep.subr.mxu0 0.0
        %4402 = vmatpush2.msra.mxu0 0.0
        %4403 = vmatprep.subr.mxu0 0.0
        %4404 = vmatpush2.msra.mxu0 0.0
        %4405 = vmatprep.subr.mxu0 0.0
        %4406 = vmatpush2.msra.mxu0 0.0
        %4407 = vmatprep.subr.mxu0 0.0
        %4408 = vmatpush2.msra.mxu0 0.0
        %4409 = vmatprep.subr.mxu0 0.0
        %4410 = vmatpush2.msra.mxu0 0.0
        %4411 = vmatprep.subr.mxu0 0.0
        %4412 = vmatpush2.msra.mxu0 0.0
        %4413 = vmatprep.subr.mxu0 0.0
        %4414 = vmatpush2.msra.mxu0 0.0
        %4415 = vmatprep.mubr.f32.mxu0 0.0
        %v4416 = vand.u32 %v723, 4294901760
        %4417 = vmatmul.mubr.f32.gmra.mxu0 %v4416
        %v4418 = vpop.f32.mrf.mxu0
        %v4419 = vadd.f32 %v4326, %v4418
        %v4420 = vpop.f32.mrf.mxu0
        %4421 = vmatprep.mubr.f32.mxu0 0.0
        %v4422 = vand.u32 %v726, 4294901760
        %4423 = vmatmul.mubr.f32.gmra.mxu0 %v4422
        %v4424 = vpop.f32.mrf.mxu0
        %v4425 = vadd.f32 %v4334, %v4424
        %v4426 = vpop.f32.mrf.mxu0
        %4427 = vmatprep.mubr.f32.mxu0 0.0
        %v4428 = vand.u32 %v729, 4294901760
        %4429 = vmatmul.mubr.f32.gmra.mxu0 %v4428
        %v4430 = vpop.f32.mrf.mxu0
        %v4431 = vadd.f32 %v4342, %v4430
        %v4432 = vpop.f32.mrf.mxu0
        %4433 = vdwg.mxu0
        %4434 = vmatprep.subr.mxu0 0.0
        %4435 = vmatpush1.msra.mxu0 0.0
        %4436 = vmatprep.subr.mxu0 0.0
        %4437 = vmatpush1.msra.mxu0 0.0
        %4438 = vmatprep.subr.mxu0 0.0
        %4439 = vmatpush1.msra.mxu0 0.0
        %4440 = vmatprep.subr.mxu0 0.0
        %4441 = vmatpush1.msra.mxu0 0.0
        %4442 = vmatprep.subr.mxu0 0.0
        %4443 = vmatpush1.msra.mxu0 0.0
        %4444 = vmatprep.subr.mxu0 0.0
        %4445 = vmatpush1.msra.mxu0 0.0
        %4446 = vmatprep.subr.mxu0 0.0
        %4447 = vmatpush1.msra.mxu0 0.0
        %4448 = vmatprep.subr.mxu0 0.0
        %4449 = vmatpush1.msra.mxu0 0.0
        %4450 = vmatprep.subr.mxu0 0.0
        %4451 = vmatpush1.msra.mxu0 0.0
        %4452 = vmatprep.subr.mxu0 0.0
        %4453 = vmatpush1.msra.mxu0 0.0
        %4454 = vmatprep.subr.mxu0 0.0
        %4455 = vmatpush1.msra.mxu0 0.0
        %4456 = vmatprep.subr.mxu0 0.0
        %4457 = vmatpush1.msra.mxu0 0.0
        %4458 = vmatprep.subr.mxu0 0.0
        %4459 = vmatpush1.msra.mxu0 0.0
        %4460 = vmatprep.subr.mxu0 0.0
        %4461 = vmatpush1.msra.mxu0 0.0
        %4462 = vmatprep.subr.mxu0 0.0
        %v4463 = vand.u32 %v3971, 4294901760
        %4464 = vmatpush1.msra.mxu0 %v4463
        %4465 = vmatprep.subr.mxu0 0.0
        %v4466 = vand.u32 %v3965, 4294901760
        %4467 = vmatpush1.msra.mxu0 %v4466
        %4468 = vmatprep.subr.mxu0 0.0
        %4469 = vmatpush2.msra.mxu0 0.0
        %4470 = vmatprep.subr.mxu0 0.0
        %4471 = vmatpush2.msra.mxu0 0.0
        %4472 = vmatprep.subr.mxu0 0.0
        %4473 = vmatpush2.msra.mxu0 0.0
        %4474 = vmatprep.subr.mxu0 0.0
        %4475 = vmatpush2.msra.mxu0 0.0
        %4476 = vmatprep.subr.mxu0 0.0
        %4477 = vmatpush2.msra.mxu0 0.0
        %4478 = vmatprep.subr.mxu0 0.0
        %4479 = vmatpush2.msra.mxu0 0.0
        %4480 = vmatprep.subr.mxu0 0.0
        %4481 = vmatpush2.msra.mxu0 0.0
        %4482 = vmatprep.subr.mxu0 0.0
        %4483 = vmatpush2.msra.mxu0 0.0
        %4484 = vmatprep.subr.mxu0 0.0
        %4485 = vmatpush2.msra.mxu0 0.0
        %4486 = vmatprep.subr.mxu0 0.0
        %4487 = vmatpush2.msra.mxu0 0.0
        %4488 = vmatprep.subr.mxu0 0.0
        %4489 = vmatpush2.msra.mxu0 0.0
        %4490 = vmatprep.subr.mxu0 0.0
        %4491 = vmatpush2.msra.mxu0 0.0
        %4492 = vmatprep.subr.mxu0 0.0
        %4493 = vmatpush2.msra.mxu0 0.0
        %4494 = vmatprep.subr.mxu0 0.0
        %4495 = vmatpush2.msra.mxu0 0.0
        %4496 = vmatprep.subr.mxu0 0.0
        %4497 = vmatpush2.msra.mxu0 0.0
        %4498 = vmatprep.subr.mxu0 0.0
        %4499 = vmatpush2.msra.mxu0 0.0
        %4500 = vmatprep.mubr.f32.mxu0 0.0
        %v4501 = vand.u32 %v723, 4294901760
        %4502 = vmatmul.mubr.f32.gmra.mxu0 %v4501
        %v4503 = vpop.f32.mrf.mxu0
        %v4504 = vadd.f32 %v4419, %v4503
        %v4505 = vpop.f32.mrf.mxu0
        %4506 = vmatprep.mubr.f32.mxu0 0.0
        %v4507 = vand.u32 %v726, 4294901760
        %4508 = vmatmul.mubr.f32.gmra.mxu0 %v4507
        %v4509 = vpop.f32.mrf.mxu0
        %v4510 = vadd.f32 %v4425, %v4509
        %v4511 = vpop.f32.mrf.mxu0
        %4512 = vmatprep.mubr.f32.mxu0 0.0
        %v4513 = vand.u32 %v729, 4294901760
        %4514 = vmatmul.mubr.f32.gmra.mxu0 %v4513
        %v4515 = vpop.f32.mrf.mxu0
        %v4516 = vadd.f32 %v4431, %v4515
        %v4517 = vpop.f32.mrf.mxu0
        %4518 = vdwg.mxu0
        %s4519 = scalar_lea.vmem %s203, 48 [#allocation4]
        %4520 = vst.msk [vmem:[%s4519] sm:$0xff] %vm1276, %v4504
        %4521 = vst.msk [vmem:[%s4519 + $0x8] sm:$0x1] %vm1278, %v4510
        %4524 = vrot.lane.b32.xlu0 %v4504, 119
        %v4525 = vpop.permute.xlu0 %4524
        %4526 = vrot.lane.b32.xlu0 %v4510, 119
        %v4527 = vpop.permute.xlu0 %4526
        %s4530 = scalar_lea.vmem %s203, 112 [#allocation4]
        %4531 = vst.msk [vmem:[%s4530] sm:$0xff] %vm1276, %v4525
        %4532 = vst.msk [vmem:[%s4530 + $0x8] sm:$0x1] %vm1278, %v4527
        %s4533 = scalar_lea.vmem %s203, 176 [#allocation4]
        %4534 = vst.msk [vmem:[%s4533 - $0x1] sm:$0xfe] %vm1292, %v4510
        %4535 = vst.msk [vmem:[%s4533 + $0x7] sm:$0x3] %vm1294, %v4516
        %4537 = vrot.lane.b32.xlu0 %v4516, 119
        %v4538 = vpop.permute.xlu0 %4537
        %s4540 = scalar_lea.vmem %s203, 240 [#allocation4]
        %4541 = vst.msk [vmem:[%s4540 - $0x1] sm:$0xfe] %vm1292, %v4527
        %4542 = vst.msk [vmem:[%s4540 + $0x7] sm:$0x3] %vm1294, %v4538
        %s4543 = sand.u32 %s109, 1
        %s4544 = sand.u32 %s109, 1
        %s4545 = smul.addr %s4544, 256
        %s4546 = scalar_lea.vmem [#allocation4], %s4545
        // Predicated region
        $region37: #{tpu_custom_call.1} parent=31 // pred_check
          %p4547 = pneg %p119
        $region38: #{tpu_custom_call.1} parent=31 // pred_check_branch
          %4549 = sbr.rel (%p4547) target = $region40
        $region39: #{tpu_custom_call.1} parent=31 // pred_region
          %s4550 = smul.u32 4, %s22
          %s4551 = smul.addr %s4550, 2
          %s4552 = smul.addr %s21, 8
          %s4553 = sadd.s32 %s4551, %s4552
          %s4554 = smul.addr %s4553, 8
          %s4555 = scalar_lea.vmem %s3, %s4554
          // Predicated region
          $region41: #{tpu_custom_call.1} parent=39 // pred_check
            _
          $region42: #{tpu_custom_call.1} parent=39 // pred_check_branch
            %4557 = sbr.rel (0) target = $region44
          $region43: #{tpu_custom_call.1} parent=39 // pred_region
            // Predicated region
            $region45: #{tpu_custom_call.1} parent=43 // pred_check
              _
            $region46: #{tpu_custom_call.1} parent=43 // pred_check_branch
              %4559 = sbr.rel (0) target = $region48
            $region47: #{tpu_custom_call.1} parent=43 // pred_region
              // Predicated region
              $region60: #{tpu_custom_call.1} parent=47 // pred_check
                _
              $region61: #{tpu_custom_call.1} parent=47 // pred_check_branch
                %4637 = sbr.rel (0) target = $region63
              $region62: #{tpu_custom_call.1} parent=47 // pred_region
                loop: start=0, step=1, limit=1
                $region64: #{tpu_custom_call.1} parent=62 // loop_pre_header
                  _
                $region65: #{tpu_custom_call.1} parent=62 // loop_header
                  %s4639 = sphi 0, %s4643
                  %p4640 = scmp.ge.s32.totalorder %s4639, 1
                  %s4644 = sphi %s4546, %s4546
                  %s4645 = sphi %s4555, %s4555
                $region66: #{tpu_custom_call.1} parent=62 // loop_header_branch
                  %4642 = sbr.rel (%p4640) target = $region70
                $region67: #{tpu_custom_call.1} parent=62 // loop_body
                  %v4646 = vld [vmem:[%s4644] sm:$0xff]
                  %4647 = vst [vmem:[%s4645] sm:$0xff] %v4646
                  %v4648 = vld [vmem:[%s4644 + $0x8] sm:$0xff]
                  %4649 = vst [vmem:[%s4645 + $0x8] sm:$0xff] %v4648
                  %v4650 = vld [vmem:[%s4644 + $0x10] sm:$0xff]
                  %4651 = vst [vmem:[%s4645 + $0x10] sm:$0xff] %v4650
                  %v4652 = vld [vmem:[%s4644 + $0x18] sm:$0xff]
                  %4653 = vst [vmem:[%s4645 + $0x18] sm:$0xff] %v4652
                  %v4654 = vld [vmem:[%s4644 + $0x20] sm:$0xff]
                  %4655 = vst [vmem:[%s4645 + $0x20] sm:$0xff] %v4654
                  %v4656 = vld [vmem:[%s4644 + $0x28] sm:$0xff]
                  %4657 = vst [vmem:[%s4645 + $0x28] sm:$0xff] %v4656
                  %v4658 = vld [vmem:[%s4644 + $0x30] sm:$0xff]
                  %4659 = vst [vmem:[%s4645 + $0x30] sm:$0xff] %v4658
                  %v4660 = vld [vmem:[%s4644 + $0x38] sm:$0xff]
                  %4661 = vst [vmem:[%s4645 + $0x38] sm:$0xff] %v4660
                  %v4662 = vld [vmem:[%s4644 + $0x40] sm:$0xff]
                  %4663 = vst [vmem:[%s4645 + $0x80] sm:$0xff] %v4662
                  %v4664 = vld [vmem:[%s4644 + $0x48] sm:$0xff]
                  %4665 = vst [vmem:[%s4645 + $0x88] sm:$0xff] %v4664
                  %v4666 = vld [vmem:[%s4644 + $0x50] sm:$0xff]
                  %4667 = vst [vmem:[%s4645 + $0x90] sm:$0xff] %v4666
                  %v4668 = vld [vmem:[%s4644 + $0x58] sm:$0xff]
                  %4669 = vst [vmem:[%s4645 + $0x98] sm:$0xff] %v4668
                  %v4670 = vld [vmem:[%s4644 + $0x60] sm:$0xff]
                  %4671 = vst [vmem:[%s4645 + $0xa0] sm:$0xff] %v4670
                  %v4672 = vld [vmem:[%s4644 + $0x68] sm:$0xff]
                  %4673 = vst [vmem:[%s4645 + $0xa8] sm:$0xff] %v4672
                  %v4674 = vld [vmem:[%s4644 + $0x70] sm:$0xff]
                  %4675 = vst [vmem:[%s4645 + $0xb0] sm:$0xff] %v4674
                  %v4676 = vld [vmem:[%s4644 + $0x78] sm:$0xff]
                  %4677 = vst [vmem:[%s4645 + $0xb8] sm:$0xff] %v4676
                  %v4678 = vld [vmem:[%s4644 + $0x80] sm:$0xff]
                  %4679 = vst [vmem:[%s4645 + $0x100] sm:$0xff] %v4678
                  %v4680 = vld [vmem:[%s4644 + $0x88] sm:$0xff]
                  %4681 = vst [vmem:[%s4645 + $0x108] sm:$0xff] %v4680
                  %v4682 = vld [vmem:[%s4644 + $0x90] sm:$0xff]
                  %4683 = vst [vmem:[%s4645 + $0x110] sm:$0xff] %v4682
                  %v4684 = vld [vmem:[%s4644 + $0x98] sm:$0xff]
                  %4685 = vst [vmem:[%s4645 + $0x118] sm:$0xff] %v4684
                  %v4686 = vld [vmem:[%s4644 + $0xa0] sm:$0xff]
                  %4687 = vst [vmem:[%s4645 + $0x120] sm:$0xff] %v4686
                  %v4688 = vld [vmem:[%s4644 + $0xa8] sm:$0xff]
                  %4689 = vst [vmem:[%s4645 + $0x128] sm:$0xff] %v4688
                  %v4690 = vld [vmem:[%s4644 + $0xb0] sm:$0xff]
                  %4691 = vst [vmem:[%s4645 + $0x130] sm:$0xff] %v4690
                  %v4692 = vld [vmem:[%s4644 + $0xb8] sm:$0xff]
                  %4693 = vst [vmem:[%s4645 + $0x138] sm:$0xff] %v4692
                  %v4694 = vld [vmem:[%s4644 + $0xc0] sm:$0xff]
                  %4695 = vst [vmem:[%s4645 + $0x180] sm:$0xff] %v4694
                  %v4696 = vld [vmem:[%s4644 + $0xc8] sm:$0xff]
                  %4697 = vst [vmem:[%s4645 + $0x188] sm:$0xff] %v4696
                  %v4698 = vld [vmem:[%s4644 + $0xd0] sm:$0xff]
                  %4699 = vst [vmem:[%s4645 + $0x190] sm:$0xff] %v4698
                  %v4700 = vld [vmem:[%s4644 + $0xd8] sm:$0xff]
                  %4701 = vst [vmem:[%s4645 + $0x198] sm:$0xff] %v4700
                  %v4702 = vld [vmem:[%s4644 + $0xe0] sm:$0xff]
                  %4703 = vst [vmem:[%s4645 + $0x1a0] sm:$0xff] %v4702
                  %v4704 = vld [vmem:[%s4644 + $0xe8] sm:$0xff]
                  %4705 = vst [vmem:[%s4645 + $0x1a8] sm:$0xff] %v4704
                  %v4706 = vld [vmem:[%s4644 + $0xf0] sm:$0xff]
                  %4707 = vst [vmem:[%s4645 + $0x1b0] sm:$0xff] %v4706
                  %v4708 = vld [vmem:[%s4644 + $0xf8] sm:$0xff]
                  %4709 = vst [vmem:[%s4645 + $0x1b8] sm:$0xff] %v4708
                $region68: #{tpu_custom_call.1} parent=62 // loop_footer
                  %s4643 = sadd.s32 1, %s4639
                $region69: #{tpu_custom_call.1} parent=62 // loop_footer_branch
                  %4638 = sbr.rel target = $region65
                $region70: #{tpu_custom_call.1} parent=62 // loop_exit
                  _
              $region63: #{tpu_custom_call.1} parent=47 // pred_fallthru
                _
              // Predicated region
              $region71: #{tpu_custom_call.1} parent=47 // pred_check
                _
              $region72: #{tpu_custom_call.1} parent=47 // pred_check_branch
                %4711 = sbr.rel target = $region74
              $region73: #{tpu_custom_call.1} parent=47 // pred_region
                _
              $region74: #{tpu_custom_call.1} parent=47 // pred_fallthru
                _
            $region48: #{tpu_custom_call.1} parent=43 // pred_fallthru
              _
            // Predicated region
            $region49: #{tpu_custom_call.1} parent=43 // pred_check
              _
            $region50: #{tpu_custom_call.1} parent=43 // pred_check_branch
              %4561 = sbr.rel target = $region52
            $region51: #{tpu_custom_call.1} parent=43 // pred_region
              %s4563 = ssub.s32 256, 1
              loop: start=0, step=1, limit=1
              $region53: #{tpu_custom_call.1} parent=51 // loop_pre_header
                _
              $region54: #{tpu_custom_call.1} parent=51 // loop_header
                %s4565 = sphi 0, %s4569
                %p4566 = scmp.ge.s32.totalorder %s4565, 1
                %s4570 = sphi %s4546, %s4546
                %s4571 = sphi %s4555, %s4555
              $region55: #{tpu_custom_call.1} parent=51 // loop_header_branch
                %4568 = sbr.rel (%p4566) target = $region59
              $region56: #{tpu_custom_call.1} parent=51 // loop_body
                %v4572 = vld [vmem:[%s4570] sm:%s4563]
                %4573 = vst [vmem:[%s4571] sm:%s4563] %v4572
                %v4574 = vld [vmem:[%s4570 + $0x8] sm:%s4563]
                %4575 = vst [vmem:[%s4571 + $0x8] sm:%s4563] %v4574
                %v4576 = vld [vmem:[%s4570 + $0x10] sm:%s4563]
                %4577 = vst [vmem:[%s4571 + $0x10] sm:%s4563] %v4576
                %v4578 = vld [vmem:[%s4570 + $0x18] sm:%s4563]
                %4579 = vst [vmem:[%s4571 + $0x18] sm:%s4563] %v4578
                %v4580 = vld [vmem:[%s4570 + $0x20] sm:%s4563]
                %4581 = vst [vmem:[%s4571 + $0x20] sm:%s4563] %v4580
                %v4582 = vld [vmem:[%s4570 + $0x28] sm:%s4563]
                %4583 = vst [vmem:[%s4571 + $0x28] sm:%s4563] %v4582
                %v4584 = vld [vmem:[%s4570 + $0x30] sm:%s4563]
                %4585 = vst [vmem:[%s4571 + $0x30] sm:%s4563] %v4584
                %v4586 = vld [vmem:[%s4570 + $0x38] sm:%s4563]
                %4587 = vst [vmem:[%s4571 + $0x38] sm:%s4563] %v4586
                %v4588 = vld [vmem:[%s4570 + $0x40] sm:%s4563]
                %4589 = vst [vmem:[%s4571 + $0x80] sm:%s4563] %v4588
                %v4590 = vld [vmem:[%s4570 + $0x48] sm:%s4563]
                %4591 = vst [vmem:[%s4571 + $0x88] sm:%s4563] %v4590
                %v4592 = vld [vmem:[%s4570 + $0x50] sm:%s4563]
                %4593 = vst [vmem:[%s4571 + $0x90] sm:%s4563] %v4592
                %v4594 = vld [vmem:[%s4570 + $0x58] sm:%s4563]
                %4595 = vst [vmem:[%s4571 + $0x98] sm:%s4563] %v4594
                %v4596 = vld [vmem:[%s4570 + $0x60] sm:%s4563]
                %4597 = vst [vmem:[%s4571 + $0xa0] sm:%s4563] %v4596
                %v4598 = vld [vmem:[%s4570 + $0x68] sm:%s4563]
                %4599 = vst [vmem:[%s4571 + $0xa8] sm:%s4563] %v4598
                %v4600 = vld [vmem:[%s4570 + $0x70] sm:%s4563]
                %4601 = vst [vmem:[%s4571 + $0xb0] sm:%s4563] %v4600
                %v4602 = vld [vmem:[%s4570 + $0x78] sm:%s4563]
                %4603 = vst [vmem:[%s4571 + $0xb8] sm:%s4563] %v4602
                %v4604 = vld [vmem:[%s4570 + $0x80] sm:%s4563]
                %4605 = vst [vmem:[%s4571 + $0x100] sm:%s4563] %v4604
                %v4606 = vld [vmem:[%s4570 + $0x88] sm:%s4563]
                %4607 = vst [vmem:[%s4571 + $0x108] sm:%s4563] %v4606
                %v4608 = vld [vmem:[%s4570 + $0x90] sm:%s4563]
                %4609 = vst [vmem:[%s4571 + $0x110] sm:%s4563] %v4608
                %v4610 = vld [vmem:[%s4570 + $0x98] sm:%s4563]
                %4611 = vst [vmem:[%s4571 + $0x118] sm:%s4563] %v4610
                %v4612 = vld [vmem:[%s4570 + $0xa0] sm:%s4563]
                %4613 = vst [vmem:[%s4571 + $0x120] sm:%s4563] %v4612
                %v4614 = vld [vmem:[%s4570 + $0xa8] sm:%s4563]
                %4615 = vst [vmem:[%s4571 + $0x128] sm:%s4563] %v4614
                %v4616 = vld [vmem:[%s4570 + $0xb0] sm:%s4563]
                %4617 = vst [vmem:[%s4571 + $0x130] sm:%s4563] %v4616
                %v4618 = vld [vmem:[%s4570 + $0xb8] sm:%s4563]
                %4619 = vst [vmem:[%s4571 + $0x138] sm:%s4563] %v4618
                %v4620 = vld [vmem:[%s4570 + $0xc0] sm:%s4563]
                %4621 = vst [vmem:[%s4571 + $0x180] sm:%s4563] %v4620
                %v4622 = vld [vmem:[%s4570 + $0xc8] sm:%s4563]
                %4623 = vst [vmem:[%s4571 + $0x188] sm:%s4563] %v4622
                %v4624 = vld [vmem:[%s4570 + $0xd0] sm:%s4563]
                %4625 = vst [vmem:[%s4571 + $0x190] sm:%s4563] %v4624
                %v4626 = vld [vmem:[%s4570 + $0xd8] sm:%s4563]
                %4627 = vst [vmem:[%s4571 + $0x198] sm:%s4563] %v4626
                %v4628 = vld [vmem:[%s4570 + $0xe0] sm:%s4563]
                %4629 = vst [vmem:[%s4571 + $0x1a0] sm:%s4563] %v4628
                %v4630 = vld [vmem:[%s4570 + $0xe8] sm:%s4563]
                %4631 = vst [vmem:[%s4571 + $0x1a8] sm:%s4563] %v4630
                %v4632 = vld [vmem:[%s4570 + $0xf0] sm:%s4563]
                %4633 = vst [vmem:[%s4571 + $0x1b0] sm:%s4563] %v4632
                %v4634 = vld [vmem:[%s4570 + $0xf8] sm:%s4563]
                %4635 = vst [vmem:[%s4571 + $0x1b8] sm:%s4563] %v4634
              $region57: #{tpu_custom_call.1} parent=51 // loop_footer
                %s4569 = sadd.s32 1, %s4565
              $region58: #{tpu_custom_call.1} parent=51 // loop_footer_branch
                %4564 = sbr.rel target = $region54
              $region59: #{tpu_custom_call.1} parent=51 // loop_exit
                _
            $region52: #{tpu_custom_call.1} parent=43 // pred_fallthru
              _
          $region44: #{tpu_custom_call.1} parent=39 // pred_fallthru
            _
          %4712 = vnop
        $region40: #{tpu_custom_call.1} parent=31 // pred_fallthru
          _
      $region32: #{tpu_custom_call.1} parent=5 // pred_fallthru
        _
      %p4713 = scmp.le.s32.totalorder 2, %s12
      // Predicated region
      $region75: #{tpu_custom_call.1} parent=5 // pred_check
        %p4714 = pneg %p4713
      $region76: #{tpu_custom_call.1} parent=5 // pred_check_branch
        %4716 = sbr.rel (%p4714) target = $region78
      $region77: #{tpu_custom_call.1} parent=5 // pred_region
        %s4717 = ssub.s32 %s12, 2
        // Predicated region
        $region79: #{tpu_custom_call.1} parent=77 // pred_check
          %p4718 = pneg %p125
        $region80: #{tpu_custom_call.1} parent=77 // pred_check_branch
          %4720 = sbr.rel (%p4718) target = $region82
        $region81: #{tpu_custom_call.1} parent=77 // pred_region
          %s4721 = sand.u32 %s110, 1
          %s4722 = sand.u32 %s110, 1
          %s4723 = smul.addr %s4722, 256
          %s4724 = scalar_lea.vmem [#allocation4], %s4723
        $region82: #{tpu_custom_call.1} parent=77 // pred_fallthru
          _
      $region78: #{tpu_custom_call.1} parent=5 // pred_fallthru
        _
    $region6: #{tpu_custom_call.1} parent=1 // loop_footer
      %s16 = sadd.s32 1, %s12
    $region7: #{tpu_custom_call.1} parent=1 // loop_footer_branch
      %11 = sbr.rel target = $region3
    $region8: #{tpu_custom_call.1} parent=1 // loop_exit
      _
    %4725 = vsyncpa [#allocation3], 1
    %s4726 = scalar_lea.sflag [#allocation3], 1
    %4727 = vsyncpa %s4726, 1

</llo_original>
